<compile_context>
chip_gen: v5e
topology: v5e:2x2
jax: 0.10.0
libtpu: 0.0.40
codegen_flags: <defaults>
</compile_context>

<pallas_src>
import math

import jax
import jax.numpy as jnp
from jax import lax
from jax.experimental import pallas as pl
from jax.experimental.pallas import tpu as pltpu


BP = 8  # batch rows padded to one f32 sublane tile


# ------------------------------ fused kernel --------------------------------

def rnncnn1d_fused_kernel(
        x_ref,                                   # (T*BP, F)   time-major input, batch padded to BP
        wih1_ref, whh1_ref, b1_ref,              # RNN1: (F,H) (H,H) (1,H)
        w2s_ref, b2_ref,                         # RNN2 merged [Wih2;Whh2]: (2H,H), (1,H)
        c1we_ref, c1wo_ref, cb1e_ref, cb1o_ref,  # conv1: (3H,H/2)x2 weights, (T*BP,H/2)x2 biases
        c2we_ref, c2wo_ref, cb2e_ref, cb2o_ref,  # conv2: (3H/2,H/4)x2 weights, (T*BP,H/4)x2 biases
        scale_ref,                               # (T*BP, 1) per-time eval-mode BN scale
        w1_ref, lb1_ref, g_ref, beta_ref,        # linear1 (T*H/4,256)+(1,256), LayerNorm (1,256)x2
        w2_ref, lb2_ref,                         # linear2 (256,nc)+(1,nc)
        out_ref,                                 # (B, num_classes)
        xw_scr,                                  # (T*BP, H)          hoisted x@Wih1 + b1
        r2_scr,                                  # (T*BP + 2BP, H)    rnn2 out, zero time-pad rows
        p1_scr,                                  # (T*BP + 2BP, H/2)  pool1 out, zero time-pad rows
        flat_scr):                               # (BP, T*H/4)        flattened pool2 output
    f32 = jnp.float32
    B = out_ref.shape[0]
    TBp = x_ref.shape[0]
    T = TBp // BP
    H = whh1_ref.shape[0]

    # ---- RNN1 + RNN2 (tanh, h0 = 0), interleaved over time ------------------
    # Hoisted layer-1 input projection: one matmul for all timesteps.
    xw_scr[...] = (jnp.dot(x_ref[...], wih1_ref[...],
                           preferred_element_type=f32) + b1_ref[...])
    whh1 = whh1_ref[...]
    w2s = w2s_ref[...]
    b2 = b2_ref[...]

    # Zero only the conv time-padding rows; the interior is fully overwritten.
    r2_scr[0:BP, :] = jnp.zeros((BP, H), f32)
    r2_scr[TBp + BP:TBp + 2 * BP, :] = jnp.zeros((BP, H), f32)

    h1 = jnp.zeros((BP, H), f32)
    h2 = jnp.zeros((BP, H), f32)
    for t in range(T):                 # static unroll; live set is tiny, no spills
        h1 = jnp.tanh(xw_scr[t * BP:(t + 1) * BP, :]
                      + jnp.dot(h1, whh1, preferred_element_type=f32))
        h12 = jnp.concatenate([h1, h2], axis=-1)           # (BP, 2H)
        h2 = jnp.tanh(jnp.dot(h12, w2s, preferred_element_type=f32) + b2)
        r2_scr[(t + 1) * BP:(t + 2) * BP, :] = h2           # aligned (8,H) store

    # ---- Conv1d(k=3,pad=1) + BatchNorm1d(win_size) + ReLU + MaxPool1d(2,2) ---
    scale = scale_ref[...]             # (T*BP, 1) per-time BN scale

    def conv_bn_relu_pool(src_scr, we_ref, wo_ref, be_ref, bo_ref):
        # src_scr is zero padded by BP rows at both ends; aligned row-offset
        # reads give the x[t-1] / x[t] / x[t+1] taps.  One im2col matmul per
        # output-channel half (even / odd); the channel max-pool + ReLU are a
        # plain elementwise max (selection matmuls folded into the weights).
        xc = jnp.concatenate([src_scr[0:TBp, :],
                              src_scr[BP:BP + TBp, :],
                              src_scr[2 * BP:2 * BP + TBp, :]], axis=-1)
        ye = jnp.dot(xc, we_ref[...], preferred_element_type=f32) * scale + be_ref[...]
        yo = jnp.dot(xc, wo_ref[...], preferred_element_type=f32) * scale + bo_ref[...]
        return jnp.maximum(jnp.maximum(ye, yo), 0.0)

    p1 = conv_bn_relu_pool(r2_scr, c1we_ref, c1wo_ref, cb1e_ref, cb1o_ref)   # (T*BP, H/2)
    p1_scr[0:BP, :] = jnp.zeros((BP, H // 2), f32)
    p1_scr[BP:BP + TBp, :] = p1
    p1_scr[TBp + BP:TBp + 2 * BP, :] = jnp.zeros((BP, H // 2), f32)
    p2 = conv_bn_relu_pool(p1_scr, c2we_ref, c2wo_ref, cb2e_ref, cb2o_ref)   # (T*BP, H/4)

    # ---- flatten + Linear(Fin,256), LayerNorm(256), Linear(256,nc) -----------
    # Repack (T*BP, C4) -> (BP, T*C4): one small lane-block store per timestep,
    # then linear1 is a single fully-filled K = T*C4 = 128 matmul.
    C4 = H // 4
    for t in range(T):
        flat_scr[:, t * C4:(t + 1) * C4] = p2[t * BP:(t + 1) * BP, :]

    h = jnp.dot(flat_scr[...], w1_ref[...], preferred_element_type=f32) + lb1_ref[...]
    mu = jnp.mean(h, axis=-1, keepdims=True)
    var = jnp.mean((h - mu) * (h - mu), axis=-1, keepdims=True)
    hn = (h - mu) * lax.rsqrt(var + 1e-5) * g_ref[...] + beta_ref[...]
    res = jnp.dot(hn, w2_ref[...], preferred_element_type=f32) + lb2_ref[...]
    out_ref[...] = res[0:B, :].astype(out_ref.dtype)        # drop padded batch rows


# --------------------------- host-side param folding --------------------------

def prepare_kernel_params(p, win_size):
    """One-time host-side folding/stacking of canonical params into kernel operands."""

    def rep(a):                        # (T, C) -> (T*BP, C), row = t*BP + b
        return jnp.repeat(a, BP, axis=0)

    def conv_halves(taps, cb):         # taps (3, Cin, Cout), cb (1, Cout)
        w = jnp.concatenate([taps[0], taps[1], taps[2]], axis=0)      # (3*Cin, Cout)
        bias = cb * p["bn_scale"] + p["bn_shift"]                     # (T, Cout): conv bias + BN fold
        return w[:, 0::2], w[:, 1::2], rep(bias[:, 0::2]), rep(bias[:, 1::2])

    c1we, c1wo, cb1e, cb1o = conv_halves(p["c1_w"], p["c1_b"])
    c2we, c2wo, cb2e, cb2o = conv_halves(p["c2_w"], p["c2_b"])

    return dict(
        wih1=p["wih1"], whh1=p["whh1"], b1=p["b1"],
        w2s=jnp.concatenate([p["wih2"], p["whh2"]], axis=0), b2=p["b2"],
        c1we=c1we, c1wo=c1wo, cb1e=cb1e, cb1o=cb1o,
        c2we=c2we, c2wo=c2wo, cb2e=cb2e, cb2o=cb2o,
        scale=rep(p["bn_scale"]),
        l1_wT=p["l1_wT"], l1_b=p["l1_b"], ln_g=p["ln_g"], ln_b=p["ln_b"],
        l2_wT=p["l2_wT"], l2_b=p["l2_b"],
    )


# ------------------------------ host wrapper ---------------------------------

def rnncnn1d_forward(x, kp):
    B, T, F = x.shape
    assert B <= BP, "for B > 8, add a leading parallel batch grid axis"
    H = kp["whh1"].shape[0]
    nc = kp["l2_wT"].shape[1]
    TBp = T * BP

    # Time-major slab, batch padded to a full sublane tile: row = t*BP + b.
    x_tm = jnp.transpose(x, (1, 0, 2))
    x_tm = jnp.pad(x_tm, ((0, 0), (0, BP - B), (0, 0))).reshape(TBp, F)

    return pl.pallas_call(
        rnncnn1d_fused_kernel,
        out_shape=jax.ShapeDtypeStruct((B, nc), jnp.float32),
        scratch_shapes=[
            pltpu.VMEM((TBp, H), jnp.float32),               # hoisted x@Wih1 + b1
            pltpu.VMEM((TBp + 2 * BP, H), jnp.float32),      # rnn2 out (time-padded)
            pltpu.VMEM((TBp + 2 * BP, H // 2), jnp.float32), # pool1 out (time-padded)
            pltpu.VMEM((BP, T * (H // 4)), jnp.float32),     # flattened pool2 out
        ],
    )(x_tm,
      kp["wih1"], kp["whh1"], kp["b1"],
      kp["w2s"], kp["b2"],
      kp["c1we"], kp["c1wo"], kp["cb1e"], kp["cb1o"],
      kp["c2we"], kp["c2wo"], kp["cb2e"], kp["cb2o"],
      kp["scale"],
      kp["l1_wT"], kp["l1_b"], kp["ln_g"], kp["ln_b"],
      kp["l2_wT"], kp["l2_b"])


# ------------------------------- parameters ----------------------------------

def init_params(key, feature_num, d_model, win_size, num_classes):
    def u(k, shape, bound):
        return jax.random.uniform(k, shape, jnp.float32, -bound, bound)

    ks = jax.random.split(key, 12)
    kr = 1.0 / math.sqrt(d_model)
    # nn.RNN default init U(-1/sqrt(H), 1/sqrt(H)); PyTorch layouts (H,F)/(H,H).
    wih1 = u(ks[0], (d_model, feature_num), kr)
    whh1 = u(ks[1], (d_model, d_model), kr)
    bih1 = u(ks[2], (d_model,), kr)
    bhh1 = u(ks[3], (d_model,), kr)
    wih2 = u(ks[4], (d_model, d_model), kr)
    whh2 = u(ks[5], (d_model, d_model), kr)
    bih2 = u(ks[6], (d_model,), kr)
    bhh2 = u(ks[7], (d_model,), kr)
    # Conv1d weights: (Cout, Cin, 3).
    kc1 = 1.0 / math.sqrt(d_model * 3)
    c1_w = u(ks[8], (d_model, d_model, 3), kc1)
    c1_b = u(ks[9], (d_model,), kc1)
    half = d_model // 2
    kc2 = 1.0 / math.sqrt(half * 3)
    c2_w = u(ks[10], (half, half, 3), kc2)
    c2_b = u(ks[11], (half,), kc2)
    # BatchNorm1d(win_size), eval mode with fresh running stats.
    eps = 1e-5
    gamma = jnp.ones((win_size,), jnp.float32)
    beta = jnp.zeros((win_size,), jnp.float32)
    rm = jnp.zeros((win_size,), jnp.float32)
    rv = jnp.ones((win_size,), jnp.float32)
    bn_scale = (gamma / jnp.sqrt(rv + eps)).reshape(win_size, 1)
    bn_shift = (beta - rm * gamma / jnp.sqrt(rv + eps)).reshape(win_size, 1)
    # Linear layers: kaiming_uniform (fan_in, leaky_relu), bias = 0.
    fin1 = d_model // 4 * win_size
    gain = math.sqrt(2.0 / (1.0 + 0.01 ** 2))
    l1_w = u(jax.random.fold_in(key, 101), (256, fin1), gain * math.sqrt(3.0 / fin1))
    l2_w = u(jax.random.fold_in(key, 102), (num_classes, 256), gain * math.sqrt(3.0 / 256))

    def taps(w):                                          # (Cout, Cin, 3) -> (3, Cin, Cout)
        return jnp.stack([w[:, :, 0].T, w[:, :, 1].T, w[:, :, 2].T])

    return dict(
        wih1=wih1.T, whh1=whh1.T, b1=(bih1 + bhh1).reshape(1, -1),
        wih2=wih2.T, whh2=whh2.T, b2=(bih2 + bhh2).reshape(1, -1),
        c1_w=taps(c1_w), c1_b=c1_b.reshape(1, -1),
        c2_w=taps(c2_w), c2_b=c2_b.reshape(1, -1),
        bn_scale=bn_scale, bn_shift=bn_shift,
        l1_wT=l1_w.T, l1_b=jnp.zeros((1, 256), jnp.float32),
        ln_g=jnp.ones((1, 256), jnp.float32), ln_b=jnp.zeros((1, 256), jnp.float32),
        l2_wT=l2_w.T, l2_b=jnp.zeros((1, num_classes), jnp.float32),
    )


# ---------------------------- pure-JAX reference ------------------------------

def ref_forward(x, p):
    B, T, _ = x.shape

    def rnn(xs, wT, hT, b):
        H = hT.shape[0]
        h = jnp.zeros((B, H), jnp.float32)
        outs = []
        for t in range(T):
            h = jnp.tanh(xs[:, t, :] @ wT + h @ hT + b)
            outs.append(h)
        return jnp.stack(outs, axis=1)

    def conv_block(xs, w, cb):
        xp = jnp.pad(xs, ((0, 0), (1, 1), (0, 0)))
        y = xp[:, :-2] @ w[0] + xp[:, 1:-1] @ w[1] + xp[:, 2:] @ w[2] + cb
        y = y * p["bn_scale"][None] + p["bn_shift"][None]
        y = jnp.maximum(y, 0.0)
        C = y.shape[-1]
        return jnp.max(y.reshape(B, T, C // 2, 2), axis=-1)

    out = rnn(x, p["wih1"], p["whh1"], p["b1"])
    out = rnn(out, p["wih2"], p["whh2"], p["b2"])
    out = conv_block(out, p["c1_w"], p["c1_b"])
    out = conv_block(out, p["c2_w"], p["c2_b"])
    xf = out.reshape(B, -1)
    h = xf @ p["l1_wT"] + p["l1_b"]
    mu = h.mean(-1, keepdims=True)
    var = ((h - mu) ** 2).mean(-1, keepdims=True)
    hn = (h - mu) / jnp.sqrt(var + 1e-5) * p["ln_g"] + p["ln_b"]
    return hn @ p["l2_wT"] + p["l2_b"]


# ----------------------------------- main -------------------------------------

if __name__ == "__main__":
    feature_num, d_model, win_size, num_classes, batch = 4, 32, 16, 3, 2

    key = jax.random.PRNGKey(0)
    pkey, xkey = jax.random.split(key)
    params = init_params(pkey, feature_num, d_model, win_size, num_classes)
    kparams = prepare_kernel_params(params, win_size)
    # Input: (batch, win_size, feature_num) — batch_first RNN input.
    x = jax.random.normal(xkey, (batch, win_size, feature_num), jnp.float32)

    fwd = jax.jit(rnncnn1d_forward)
    out = jax.block_until_ready(fwd(x, kparams))

    with jax.default_matmul_precision("highest"):
        ref = jax.block_until_ready(ref_forward(x, params))

    assert out.shape == (batch, num_classes)
    assert bool(jnp.all(jnp.isfinite(out)))
    assert bool(jnp.allclose(out, ref, atol=1e-2, rtol=1e-2)), (out, ref)
    print("KERNEL_OK")
</pallas_src>

<mosaic_0001>
module attributes {stable_mosaic.version = 11 : i64} {
  func.func @rnncnn1d_fused_kernel(%arg0: memref<128x4xf32, #tpu.memory_space<vmem>>, %arg1: memref<4x32xf32, #tpu.memory_space<vmem>>, %arg2: memref<32x32xf32, #tpu.memory_space<vmem>>, %arg3: memref<1x32xf32, #tpu.memory_space<vmem>>, %arg4: memref<64x32xf32, #tpu.memory_space<vmem>>, %arg5: memref<1x32xf32, #tpu.memory_space<vmem>>, %arg6: memref<96x16xf32, #tpu.memory_space<vmem>>, %arg7: memref<96x16xf32, #tpu.memory_space<vmem>>, %arg8: memref<128x16xf32, #tpu.memory_space<vmem>>, %arg9: memref<128x16xf32, #tpu.memory_space<vmem>>, %arg10: memref<48x8xf32, #tpu.memory_space<vmem>>, %arg11: memref<48x8xf32, #tpu.memory_space<vmem>>, %arg12: memref<128x8xf32, #tpu.memory_space<vmem>>, %arg13: memref<128x8xf32, #tpu.memory_space<vmem>>, %arg14: memref<128x1xf32, #tpu.memory_space<vmem>>, %arg15: memref<128x256xf32, #tpu.memory_space<vmem>>, %arg16: memref<1x256xf32, #tpu.memory_space<vmem>>, %arg17: memref<1x256xf32, #tpu.memory_space<vmem>>, %arg18: memref<1x256xf32, #tpu.memory_space<vmem>>, %arg19: memref<256x3xf32, #tpu.memory_space<vmem>>, %arg20: memref<1x3xf32, #tpu.memory_space<vmem>>, %arg21: memref<2x3xf32, #tpu.memory_space<vmem>>, %arg22: memref<128x32xf32, #tpu.memory_space<vmem>>, %arg23: memref<144x32xf32, #tpu.memory_space<vmem>>, %arg24: memref<144x16xf32, #tpu.memory_space<vmem>>, %arg25: memref<8x128xf32, #tpu.memory_space<vmem>>) attributes {dimension_semantics = [], scalar_prefetch = 0 : i64, scratch_operands = 4 : i64, tpu.core_type = #tpu.core_type<tc>} {
    %c0 = arith.constant 0 : index
    %c0_0 = arith.constant 0 : index
    %0 = vector.load %arg0[%c0, %c0_0] : memref<128x4xf32, #tpu.memory_space<vmem>>, vector<128x4xf32>
    %c0_1 = arith.constant 0 : index
    %c0_2 = arith.constant 0 : index
    %1 = vector.load %arg1[%c0_1, %c0_2] : memref<4x32xf32, #tpu.memory_space<vmem>>, vector<4x32xf32>
    %cst = arith.constant dense<0.000000e+00> : vector<128x32xf32>
    %2 = tpu.matmul %0, %1, %cst {dimension_numbers = #tpu.dot_dimension_numbers<[1], [0], [0], [1], [0, 0, 1, 1], [], []>} : vector<128x4xf32>, vector<4x32xf32>, vector<128x32xf32> -> vector<128x32xf32>
    %c0_3 = arith.constant 0 : index
    %c0_4 = arith.constant 0 : index
    %3 = vector.load %arg3[%c0_3, %c0_4] : memref<1x32xf32, #tpu.memory_space<vmem>>, vector<1x32xf32>
    %4 = vector.broadcast %3 : vector<1x32xf32> to vector<128x32xf32>
    %5 = arith.addf %2, %4 : vector<128x32xf32>
    %c0_5 = arith.constant 0 : index
    %c0_6 = arith.constant 0 : index
    %6 = vector.load %arg22[%c0_5, %c0_6] : memref<128x32xf32, #tpu.memory_space<vmem>>, vector<128x32xf32>
    tpu.vector_store %arg22[%c0_5, %c0_6], %5 {strides = array<i32>} : memref<128x32xf32, #tpu.memory_space<vmem>>, vector<128x32xf32>,
    %c0_7 = arith.constant 0 : index
    %c0_8 = arith.constant 0 : index
    %7 = vector.load %arg2[%c0_7, %c0_8] : memref<32x32xf32, #tpu.memory_space<vmem>>, vector<32x32xf32>
    %c0_9 = arith.constant 0 : index
    %c0_10 = arith.constant 0 : index
    %8 = vector.load %arg4[%c0_9, %c0_10] : memref<64x32xf32, #tpu.memory_space<vmem>>, vector<64x32xf32>
    %c0_11 = arith.constant 0 : index
    %c0_12 = arith.constant 0 : index
    %9 = vector.load %arg5[%c0_11, %c0_12] : memref<1x32xf32, #tpu.memory_space<vmem>>, vector<1x32xf32>
    %cst_13 = arith.constant 0.000000e+00 : f32
    %10 = vector.broadcast %cst_13 : f32 to vector<8x32xf32>
    %c0_14 = arith.constant 0 : index
    %c0_15 = arith.constant 0 : index
    %11 = vector.load %arg23[%c0_14, %c0_15] : memref<144x32xf32, #tpu.memory_space<vmem>>, vector<8x32xf32>
    tpu.vector_store %arg23[%c0_14, %c0_15], %10 {strides = array<i32>} : memref<144x32xf32, #tpu.memory_space<vmem>>, vector<8x32xf32>,
    %cst_16 = arith.constant 0.000000e+00 : f32
    %12 = vector.broadcast %cst_16 : f32 to vector<8x32xf32>
    %c136 = arith.constant 136 : index
    %c0_17 = arith.constant 0 : index
    %13 = vector.load %arg23[%c136, %c0_17] : memref<144x32xf32, #tpu.memory_space<vmem>>, vector<8x32xf32>
    tpu.vector_store %arg23[%c136, %c0_17], %12 {strides = array<i32>} : memref<144x32xf32, #tpu.memory_space<vmem>>, vector<8x32xf32>,
    %cst_18 = arith.constant 0.000000e+00 : f32
    %14 = vector.broadcast %cst_18 : f32 to vector<8x32xf32>
    %cst_19 = arith.constant 0.000000e+00 : f32
    %15 = vector.broadcast %cst_19 : f32 to vector<8x32xf32>
    %c0_20 = arith.constant 0 : index
    %c0_21 = arith.constant 0 : index
    %16 = vector.load %arg22[%c0_20, %c0_21] : memref<128x32xf32, #tpu.memory_space<vmem>>, vector<8x32xf32>
    %cst_22 = arith.constant dense<0.000000e+00> : vector<8x32xf32>
    %17 = tpu.matmul %14, %7, %cst_22 {dimension_numbers = #tpu.dot_dimension_numbers<[1], [0], [0], [1], [0, 0, 1, 1], [], []>} : vector<8x32xf32>, vector<32x32xf32>, vector<8x32xf32> -> vector<8x32xf32>
    %18 = arith.addf %16, %17 : vector<8x32xf32>
    %19 = math.tanh %18 : vector<8x32xf32>
    %20 = tpu.concatenate %19, %15 in 1 : vector<8x32xf32>, vector<8x32xf32> -> vector<8x64xf32>
    %cst_23 = arith.constant dense<0.000000e+00> : vector<8x32xf32>
    %21 = tpu.matmul %20, %8, %cst_23 {dimension_numbers = #tpu.dot_dimension_numbers<[1], [0], [0], [1], [0, 0, 1, 1], [], []>} : vector<8x64xf32>, vector<64x32xf32>, vector<8x32xf32> -> vector<8x32xf32>
    %22 = vector.broadcast %9 : vector<1x32xf32> to vector<8x32xf32>
    %23 = arith.addf %21, %22 : vector<8x32xf32>
    %24 = math.tanh %23 : vector<8x32xf32>
    %c8 = arith.constant 8 : index
    %c0_24 = arith.constant 0 : index
    %25 = vector.load %arg23[%c8, %c0_24] : memref<144x32xf32, #tpu.memory_space<vmem>>, vector<8x32xf32>
    tpu.vector_store %arg23[%c8, %c0_24], %24 {strides = array<i32>} : memref<144x32xf32, #tpu.memory_space<vmem>>, vector<8x32xf32>,
    %c8_25 = arith.constant 8 : index
    %c0_26 = arith.constant 0 : index
    %26 = vector.load %arg22[%c8_25, %c0_26] : memref<128x32xf32, #tpu.memory_space<vmem>>, vector<8x32xf32>
    %cst_27 = arith.constant dense<0.000000e+00> : vector<8x32xf32>
    %27 = tpu.matmul %19, %7, %cst_27 {dimension_numbers = #tpu.dot_dimension_numbers<[1], [0], [0], [1], [0, 0, 1, 1], [], []>} : vector<8x32xf32>, vector<32x32xf32>, vector<8x32xf32> -> vector<8x32xf32>
    %28 = arith.addf %26, %27 : vector<8x32xf32>
    %29 = math.tanh %28 : vector<8x32xf32>
    %30 = tpu.concatenate %29, %24 in 1 : vector<8x32xf32>, vector<8x32xf32> -> vector<8x64xf32>
    %cst_28 = arith.constant dense<0.000000e+00> : vector<8x32xf32>
    %31 = tpu.matmul %30, %8, %cst_28 {dimension_numbers = #tpu.dot_dimension_numbers<[1], [0], [0], [1], [0, 0, 1, 1], [], []>} : vector<8x64xf32>, vector<64x32xf32>, vector<8x32xf32> -> vector<8x32xf32>
    %32 = vector.broadcast %9 : vector<1x32xf32> to vector<8x32xf32>
    %33 = arith.addf %31, %32 : vector<8x32xf32>
    %34 = math.tanh %33 : vector<8x32xf32>
    %c16 = arith.constant 16 : index
    %c0_29 = arith.constant 0 : index
    %35 = vector.load %arg23[%c16, %c0_29] : memref<144x32xf32, #tpu.memory_space<vmem>>, vector<8x32xf32>
    tpu.vector_store %arg23[%c16, %c0_29], %34 {strides = array<i32>} : memref<144x32xf32, #tpu.memory_space<vmem>>, vector<8x32xf32>,
    %c16_30 = arith.constant 16 : index
    %c0_31 = arith.constant 0 : index
    %36 = vector.load %arg22[%c16_30, %c0_31] : memref<128x32xf32, #tpu.memory_space<vmem>>, vector<8x32xf32>
    %cst_32 = arith.constant dense<0.000000e+00> : vector<8x32xf32>
    %37 = tpu.matmul %29, %7, %cst_32 {dimension_numbers = #tpu.dot_dimension_numbers<[1], [0], [0], [1], [0, 0, 1, 1], [], []>} : vector<8x32xf32>, vector<32x32xf32>, vector<8x32xf32> -> vector<8x32xf32>
    %38 = arith.addf %36, %37 : vector<8x32xf32>
    %39 = math.tanh %38 : vector<8x32xf32>
    %40 = tpu.concatenate %39, %34 in 1 : vector<8x32xf32>, vector<8x32xf32> -> vector<8x64xf32>
    %cst_33 = arith.constant dense<0.000000e+00> : vector<8x32xf32>
    %41 = tpu.matmul %40, %8, %cst_33 {dimension_numbers = #tpu.dot_dimension_numbers<[1], [0], [0], [1], [0, 0, 1, 1], [], []>} : vector<8x64xf32>, vector<64x32xf32>, vector<8x32xf32> -> vector<8x32xf32>
    %42 = vector.broadcast %9 : vector<1x32xf32> to vector<8x32xf32>
    %43 = arith.addf %41, %42 : vector<8x32xf32>
    %44 = math.tanh %43 : vector<8x32xf32>
    %c24 = arith.constant 24 : index
    %c0_34 = arith.constant 0 : index
    %45 = vector.load %arg23[%c24, %c0_34] : memref<144x32xf32, #tpu.memory_space<vmem>>, vector<8x32xf32>
    tpu.vector_store %arg23[%c24, %c0_34], %44 {strides = array<i32>} : memref<144x32xf32, #tpu.memory_space<vmem>>, vector<8x32xf32>,
    %c24_35 = arith.constant 24 : index
    %c0_36 = arith.constant 0 : index
    %46 = vector.load %arg22[%c24_35, %c0_36] : memref<128x32xf32, #tpu.memory_space<vmem>>, vector<8x32xf32>
    %cst_37 = arith.constant dense<0.000000e+00> : vector<8x32xf32>
    %47 = tpu.matmul %39, %7, %cst_37 {dimension_numbers = #tpu.dot_dimension_numbers<[1], [0], [0], [1], [0, 0, 1, 1], [], []>} : vector<8x32xf32>, vector<32x32xf32>, vector<8x32xf32> -> vector<8x32xf32>
    %48 = arith.addf %46, %47 : vector<8x32xf32>
    %49 = math.tanh %48 : vector<8x32xf32>
    %50 = tpu.concatenate %49, %44 in 1 : vector<8x32xf32>, vector<8x32xf32> -> vector<8x64xf32>
    %cst_38 = arith.constant dense<0.000000e+00> : vector<8x32xf32>
    %51 = tpu.matmul %50, %8, %cst_38 {dimension_numbers = #tpu.dot_dimension_numbers<[1], [0], [0], [1], [0, 0, 1, 1], [], []>} : vector<8x64xf32>, vector<64x32xf32>, vector<8x32xf32> -> vector<8x32xf32>
    %52 = vector.broadcast %9 : vector<1x32xf32> to vector<8x32xf32>
    %53 = arith.addf %51, %52 : vector<8x32xf32>
    %54 = math.tanh %53 : vector<8x32xf32>
    %c32 = arith.constant 32 : index
    %c0_39 = arith.constant 0 : index
    %55 = vector.load %arg23[%c32, %c0_39] : memref<144x32xf32, #tpu.memory_space<vmem>>, vector<8x32xf32>
    tpu.vector_store %arg23[%c32, %c0_39], %54 {strides = array<i32>} : memref<144x32xf32, #tpu.memory_space<vmem>>, vector<8x32xf32>,
    %c32_40 = arith.constant 32 : index
    %c0_41 = arith.constant 0 : index
    %56 = vector.load %arg22[%c32_40, %c0_41] : memref<128x32xf32, #tpu.memory_space<vmem>>, vector<8x32xf32>
    %cst_42 = arith.constant dense<0.000000e+00> : vector<8x32xf32>
    %57 = tpu.matmul %49, %7, %cst_42 {dimension_numbers = #tpu.dot_dimension_numbers<[1], [0], [0], [1], [0, 0, 1, 1], [], []>} : vector<8x32xf32>, vector<32x32xf32>, vector<8x32xf32> -> vector<8x32xf32>
    %58 = arith.addf %56, %57 : vector<8x32xf32>
    %59 = math.tanh %58 : vector<8x32xf32>
    %60 = tpu.concatenate %59, %54 in 1 : vector<8x32xf32>, vector<8x32xf32> -> vector<8x64xf32>
    %cst_43 = arith.constant dense<0.000000e+00> : vector<8x32xf32>
    %61 = tpu.matmul %60, %8, %cst_43 {dimension_numbers = #tpu.dot_dimension_numbers<[1], [0], [0], [1], [0, 0, 1, 1], [], []>} : vector<8x64xf32>, vector<64x32xf32>, vector<8x32xf32> -> vector<8x32xf32>
    %62 = vector.broadcast %9 : vector<1x32xf32> to vector<8x32xf32>
    %63 = arith.addf %61, %62 : vector<8x32xf32>
    %64 = math.tanh %63 : vector<8x32xf32>
    %c40 = arith.constant 40 : index
    %c0_44 = arith.constant 0 : index
    %65 = vector.load %arg23[%c40, %c0_44] : memref<144x32xf32, #tpu.memory_space<vmem>>, vector<8x32xf32>
    tpu.vector_store %arg23[%c40, %c0_44], %64 {strides = array<i32>} : memref<144x32xf32, #tpu.memory_space<vmem>>, vector<8x32xf32>,
    %c40_45 = arith.constant 40 : index
    %c0_46 = arith.constant 0 : index
    %66 = vector.load %arg22[%c40_45, %c0_46] : memref<128x32xf32, #tpu.memory_space<vmem>>, vector<8x32xf32>
    %cst_47 = arith.constant dense<0.000000e+00> : vector<8x32xf32>
    %67 = tpu.matmul %59, %7, %cst_47 {dimension_numbers = #tpu.dot_dimension_numbers<[1], [0], [0], [1], [0, 0, 1, 1], [], []>} : vector<8x32xf32>, vector<32x32xf32>, vector<8x32xf32> -> vector<8x32xf32>
    %68 = arith.addf %66, %67 : vector<8x32xf32>
    %69 = math.tanh %68 : vector<8x32xf32>
    %70 = tpu.concatenate %69, %64 in 1 : vector<8x32xf32>, vector<8x32xf32> -> vector<8x64xf32>
    %cst_48 = arith.constant dense<0.000000e+00> : vector<8x32xf32>
    %71 = tpu.matmul %70, %8, %cst_48 {dimension_numbers = #tpu.dot_dimension_numbers<[1], [0], [0], [1], [0, 0, 1, 1], [], []>} : vector<8x64xf32>, vector<64x32xf32>, vector<8x32xf32> -> vector<8x32xf32>
    %72 = vector.broadcast %9 : vector<1x32xf32> to vector<8x32xf32>
    %73 = arith.addf %71, %72 : vector<8x32xf32>
    %74 = math.tanh %73 : vector<8x32xf32>
    %c48 = arith.constant 48 : index
    %c0_49 = arith.constant 0 : index
    %75 = vector.load %arg23[%c48, %c0_49] : memref<144x32xf32, #tpu.memory_space<vmem>>, vector<8x32xf32>
    tpu.vector_store %arg23[%c48, %c0_49], %74 {strides = array<i32>} : memref<144x32xf32, #tpu.memory_space<vmem>>, vector<8x32xf32>,
    %c48_50 = arith.constant 48 : index
    %c0_51 = arith.constant 0 : index
    %76 = vector.load %arg22[%c48_50, %c0_51] : memref<128x32xf32, #tpu.memory_space<vmem>>, vector<8x32xf32>
    %cst_52 = arith.constant dense<0.000000e+00> : vector<8x32xf32>
    %77 = tpu.matmul %69, %7, %cst_52 {dimension_numbers = #tpu.dot_dimension_numbers<[1], [0], [0], [1], [0, 0, 1, 1], [], []>} : vector<8x32xf32>, vector<32x32xf32>, vector<8x32xf32> -> vector<8x32xf32>
    %78 = arith.addf %76, %77 : vector<8x32xf32>
    %79 = math.tanh %78 : vector<8x32xf32>
    %80 = tpu.concatenate %79, %74 in 1 : vector<8x32xf32>, vector<8x32xf32> -> vector<8x64xf32>
    %cst_53 = arith.constant dense<0.000000e+00> : vector<8x32xf32>
    %81 = tpu.matmul %80, %8, %cst_53 {dimension_numbers = #tpu.dot_dimension_numbers<[1], [0], [0], [1], [0, 0, 1, 1], [], []>} : vector<8x64xf32>, vector<64x32xf32>, vector<8x32xf32> -> vector<8x32xf32>
    %82 = vector.broadcast %9 : vector<1x32xf32> to vector<8x32xf32>
    %83 = arith.addf %81, %82 : vector<8x32xf32>
    %84 = math.tanh %83 : vector<8x32xf32>
    %c56 = arith.constant 56 : index
    %c0_54 = arith.constant 0 : index
    %85 = vector.load %arg23[%c56, %c0_54] : memref<144x32xf32, #tpu.memory_space<vmem>>, vector<8x32xf32>
    tpu.vector_store %arg23[%c56, %c0_54], %84 {strides = array<i32>} : memref<144x32xf32, #tpu.memory_space<vmem>>, vector<8x32xf32>,
    %c56_55 = arith.constant 56 : index
    %c0_56 = arith.constant 0 : index
    %86 = vector.load %arg22[%c56_55, %c0_56] : memref<128x32xf32, #tpu.memory_space<vmem>>, vector<8x32xf32>
    %cst_57 = arith.constant dense<0.000000e+00> : vector<8x32xf32>
    %87 = tpu.matmul %79, %7, %cst_57 {dimension_numbers = #tpu.dot_dimension_numbers<[1], [0], [0], [1], [0, 0, 1, 1], [], []>} : vector<8x32xf32>, vector<32x32xf32>, vector<8x32xf32> -> vector<8x32xf32>
    %88 = arith.addf %86, %87 : vector<8x32xf32>
    %89 = math.tanh %88 : vector<8x32xf32>
    %90 = tpu.concatenate %89, %84 in 1 : vector<8x32xf32>, vector<8x32xf32> -> vector<8x64xf32>
    %cst_58 = arith.constant dense<0.000000e+00> : vector<8x32xf32>
    %91 = tpu.matmul %90, %8, %cst_58 {dimension_numbers = #tpu.dot_dimension_numbers<[1], [0], [0], [1], [0, 0, 1, 1], [], []>} : vector<8x64xf32>, vector<64x32xf32>, vector<8x32xf32> -> vector<8x32xf32>
    %92 = vector.broadcast %9 : vector<1x32xf32> to vector<8x32xf32>
    %93 = arith.addf %91, %92 : vector<8x32xf32>
    %94 = math.tanh %93 : vector<8x32xf32>
    %c64 = arith.constant 64 : index
    %c0_59 = arith.constant 0 : index
    %95 = vector.load %arg23[%c64, %c0_59] : memref<144x32xf32, #tpu.memory_space<vmem>>, vector<8x32xf32>
    tpu.vector_store %arg23[%c64, %c0_59], %94 {strides = array<i32>} : memref<144x32xf32, #tpu.memory_space<vmem>>, vector<8x32xf32>,
    %c64_60 = arith.constant 64 : index
    %c0_61 = arith.constant 0 : index
    %96 = vector.load %arg22[%c64_60, %c0_61] : memref<128x32xf32, #tpu.memory_space<vmem>>, vector<8x32xf32>
    %cst_62 = arith.constant dense<0.000000e+00> : vector<8x32xf32>
    %97 = tpu.matmul %89, %7, %cst_62 {dimension_numbers = #tpu.dot_dimension_numbers<[1], [0], [0], [1], [0, 0, 1, 1], [], []>} : vector<8x32xf32>, vector<32x32xf32>, vector<8x32xf32> -> vector<8x32xf32>
    %98 = arith.addf %96, %97 : vector<8x32xf32>
    %99 = math.tanh %98 : vector<8x32xf32>
    %100 = tpu.concatenate %99, %94 in 1 : vector<8x32xf32>, vector<8x32xf32> -> vector<8x64xf32>
    %cst_63 = arith.constant dense<0.000000e+00> : vector<8x32xf32>
    %101 = tpu.matmul %100, %8, %cst_63 {dimension_numbers = #tpu.dot_dimension_numbers<[1], [0], [0], [1], [0, 0, 1, 1], [], []>} : vector<8x64xf32>, vector<64x32xf32>, vector<8x32xf32> -> vector<8x32xf32>
    %102 = vector.broadcast %9 : vector<1x32xf32> to vector<8x32xf32>
    %103 = arith.addf %101, %102 : vector<8x32xf32>
    %104 = math.tanh %103 : vector<8x32xf32>
    %c72 = arith.constant 72 : index
    %c0_64 = arith.constant 0 : index
    %105 = vector.load %arg23[%c72, %c0_64] : memref<144x32xf32, #tpu.memory_space<vmem>>, vector<8x32xf32>
    tpu.vector_store %arg23[%c72, %c0_64], %104 {strides = array<i32>} : memref<144x32xf32, #tpu.memory_space<vmem>>, vector<8x32xf32>,
    %c72_65 = arith.constant 72 : index
    %c0_66 = arith.constant 0 : index
    %106 = vector.load %arg22[%c72_65, %c0_66] : memref<128x32xf32, #tpu.memory_space<vmem>>, vector<8x32xf32>
    %cst_67 = arith.constant dense<0.000000e+00> : vector<8x32xf32>
    %107 = tpu.matmul %99, %7, %cst_67 {dimension_numbers = #tpu.dot_dimension_numbers<[1], [0], [0], [1], [0, 0, 1, 1], [], []>} : vector<8x32xf32>, vector<32x32xf32>, vector<8x32xf32> -> vector<8x32xf32>
    %108 = arith.addf %106, %107 : vector<8x32xf32>
    %109 = math.tanh %108 : vector<8x32xf32>
    %110 = tpu.concatenate %109, %104 in 1 : vector<8x32xf32>, vector<8x32xf32> -> vector<8x64xf32>
    %cst_68 = arith.constant dense<0.000000e+00> : vector<8x32xf32>
    %111 = tpu.matmul %110, %8, %cst_68 {dimension_numbers = #tpu.dot_dimension_numbers<[1], [0], [0], [1], [0, 0, 1, 1], [], []>} : vector<8x64xf32>, vector<64x32xf32>, vector<8x32xf32> -> vector<8x32xf32>
    %112 = vector.broadcast %9 : vector<1x32xf32> to vector<8x32xf32>
    %113 = arith.addf %111, %112 : vector<8x32xf32>
    %114 = math.tanh %113 : vector<8x32xf32>
    %c80 = arith.constant 80 : index
    %c0_69 = arith.constant 0 : index
    %115 = vector.load %arg23[%c80, %c0_69] : memref<144x32xf32, #tpu.memory_space<vmem>>, vector<8x32xf32>
    tpu.vector_store %arg23[%c80, %c0_69], %114 {strides = array<i32>} : memref<144x32xf32, #tpu.memory_space<vmem>>, vector<8x32xf32>,
    %c80_70 = arith.constant 80 : index
    %c0_71 = arith.constant 0 : index
    %116 = vector.load %arg22[%c80_70, %c0_71] : memref<128x32xf32, #tpu.memory_space<vmem>>, vector<8x32xf32>
    %cst_72 = arith.constant dense<0.000000e+00> : vector<8x32xf32>
    %117 = tpu.matmul %109, %7, %cst_72 {dimension_numbers = #tpu.dot_dimension_numbers<[1], [0], [0], [1], [0, 0, 1, 1], [], []>} : vector<8x32xf32>, vector<32x32xf32>, vector<8x32xf32> -> vector<8x32xf32>
    %118 = arith.addf %116, %117 : vector<8x32xf32>
    %119 = math.tanh %118 : vector<8x32xf32>
    %120 = tpu.concatenate %119, %114 in 1 : vector<8x32xf32>, vector<8x32xf32> -> vector<8x64xf32>
    %cst_73 = arith.constant dense<0.000000e+00> : vector<8x32xf32>
    %121 = tpu.matmul %120, %8, %cst_73 {dimension_numbers = #tpu.dot_dimension_numbers<[1], [0], [0], [1], [0, 0, 1, 1], [], []>} : vector<8x64xf32>, vector<64x32xf32>, vector<8x32xf32> -> vector<8x32xf32>
    %122 = vector.broadcast %9 : vector<1x32xf32> to vector<8x32xf32>
    %123 = arith.addf %121, %122 : vector<8x32xf32>
    %124 = math.tanh %123 : vector<8x32xf32>
    %c88 = arith.constant 88 : index
    %c0_74 = arith.constant 0 : index
    %125 = vector.load %arg23[%c88, %c0_74] : memref<144x32xf32, #tpu.memory_space<vmem>>, vector<8x32xf32>
    tpu.vector_store %arg23[%c88, %c0_74], %124 {strides = array<i32>} : memref<144x32xf32, #tpu.memory_space<vmem>>, vector<8x32xf32>,
    %c88_75 = arith.constant 88 : index
    %c0_76 = arith.constant 0 : index
    %126 = vector.load %arg22[%c88_75, %c0_76] : memref<128x32xf32, #tpu.memory_space<vmem>>, vector<8x32xf32>
    %cst_77 = arith.constant dense<0.000000e+00> : vector<8x32xf32>
    %127 = tpu.matmul %119, %7, %cst_77 {dimension_numbers = #tpu.dot_dimension_numbers<[1], [0], [0], [1], [0, 0, 1, 1], [], []>} : vector<8x32xf32>, vector<32x32xf32>, vector<8x32xf32> -> vector<8x32xf32>
    %128 = arith.addf %126, %127 : vector<8x32xf32>
    %129 = math.tanh %128 : vector<8x32xf32>
    %130 = tpu.concatenate %129, %124 in 1 : vector<8x32xf32>, vector<8x32xf32> -> vector<8x64xf32>
    %cst_78 = arith.constant dense<0.000000e+00> : vector<8x32xf32>
    %131 = tpu.matmul %130, %8, %cst_78 {dimension_numbers = #tpu.dot_dimension_numbers<[1], [0], [0], [1], [0, 0, 1, 1], [], []>} : vector<8x64xf32>, vector<64x32xf32>, vector<8x32xf32> -> vector<8x32xf32>
    %132 = vector.broadcast %9 : vector<1x32xf32> to vector<8x32xf32>
    %133 = arith.addf %131, %132 : vector<8x32xf32>
    %134 = math.tanh %133 : vector<8x32xf32>
    %c96 = arith.constant 96 : index
    %c0_79 = arith.constant 0 : index
    %135 = vector.load %arg23[%c96, %c0_79] : memref<144x32xf32, #tpu.memory_space<vmem>>, vector<8x32xf32>
    tpu.vector_store %arg23[%c96, %c0_79], %134 {strides = array<i32>} : memref<144x32xf32, #tpu.memory_space<vmem>>, vector<8x32xf32>,
    %c96_80 = arith.constant 96 : index
    %c0_81 = arith.constant 0 : index
    %136 = vector.load %arg22[%c96_80, %c0_81] : memref<128x32xf32, #tpu.memory_space<vmem>>, vector<8x32xf32>
    %cst_82 = arith.constant dense<0.000000e+00> : vector<8x32xf32>
    %137 = tpu.matmul %129, %7, %cst_82 {dimension_numbers = #tpu.dot_dimension_numbers<[1], [0], [0], [1], [0, 0, 1, 1], [], []>} : vector<8x32xf32>, vector<32x32xf32>, vector<8x32xf32> -> vector<8x32xf32>
    %138 = arith.addf %136, %137 : vector<8x32xf32>
    %139 = math.tanh %138 : vector<8x32xf32>
    %140 = tpu.concatenate %139, %134 in 1 : vector<8x32xf32>, vector<8x32xf32> -> vector<8x64xf32>
    %cst_83 = arith.constant dense<0.000000e+00> : vector<8x32xf32>
    %141 = tpu.matmul %140, %8, %cst_83 {dimension_numbers = #tpu.dot_dimension_numbers<[1], [0], [0], [1], [0, 0, 1, 1], [], []>} : vector<8x64xf32>, vector<64x32xf32>, vector<8x32xf32> -> vector<8x32xf32>
    %142 = vector.broadcast %9 : vector<1x32xf32> to vector<8x32xf32>
    %143 = arith.addf %141, %142 : vector<8x32xf32>
    %144 = math.tanh %143 : vector<8x32xf32>
    %c104 = arith.constant 104 : index
    %c0_84 = arith.constant 0 : index
    %145 = vector.load %arg23[%c104, %c0_84] : memref<144x32xf32, #tpu.memory_space<vmem>>, vector<8x32xf32>
    tpu.vector_store %arg23[%c104, %c0_84], %144 {strides = array<i32>} : memref<144x32xf32, #tpu.memory_space<vmem>>, vector<8x32xf32>,
    %c104_85 = arith.constant 104 : index
    %c0_86 = arith.constant 0 : index
    %146 = vector.load %arg22[%c104_85, %c0_86] : memref<128x32xf32, #tpu.memory_space<vmem>>, vector<8x32xf32>
    %cst_87 = arith.constant dense<0.000000e+00> : vector<8x32xf32>
    %147 = tpu.matmul %139, %7, %cst_87 {dimension_numbers = #tpu.dot_dimension_numbers<[1], [0], [0], [1], [0, 0, 1, 1], [], []>} : vector<8x32xf32>, vector<32x32xf32>, vector<8x32xf32> -> vector<8x32xf32>
    %148 = arith.addf %146, %147 : vector<8x32xf32>
    %149 = math.tanh %148 : vector<8x32xf32>
    %150 = tpu.concatenate %149, %144 in 1 : vector<8x32xf32>, vector<8x32xf32> -> vector<8x64xf32>
    %cst_88 = arith.constant dense<0.000000e+00> : vector<8x32xf32>
    %151 = tpu.matmul %150, %8, %cst_88 {dimension_numbers = #tpu.dot_dimension_numbers<[1], [0], [0], [1], [0, 0, 1, 1], [], []>} : vector<8x64xf32>, vector<64x32xf32>, vector<8x32xf32> -> vector<8x32xf32>
    %152 = vector.broadcast %9 : vector<1x32xf32> to vector<8x32xf32>
    %153 = arith.addf %151, %152 : vector<8x32xf32>
    %154 = math.tanh %153 : vector<8x32xf32>
    %c112 = arith.constant 112 : index
    %c0_89 = arith.constant 0 : index
    %155 = vector.load %arg23[%c112, %c0_89] : memref<144x32xf32, #tpu.memory_space<vmem>>, vector<8x32xf32>
    tpu.vector_store %arg23[%c112, %c0_89], %154 {strides = array<i32>} : memref<144x32xf32, #tpu.memory_space<vmem>>, vector<8x32xf32>,
    %c112_90 = arith.constant 112 : index
    %c0_91 = arith.constant 0 : index
    %156 = vector.load %arg22[%c112_90, %c0_91] : memref<128x32xf32, #tpu.memory_space<vmem>>, vector<8x32xf32>
    %cst_92 = arith.constant dense<0.000000e+00> : vector<8x32xf32>
    %157 = tpu.matmul %149, %7, %cst_92 {dimension_numbers = #tpu.dot_dimension_numbers<[1], [0], [0], [1], [0, 0, 1, 1], [], []>} : vector<8x32xf32>, vector<32x32xf32>, vector<8x32xf32> -> vector<8x32xf32>
    %158 = arith.addf %156, %157 : vector<8x32xf32>
    %159 = math.tanh %158 : vector<8x32xf32>
    %160 = tpu.concatenate %159, %154 in 1 : vector<8x32xf32>, vector<8x32xf32> -> vector<8x64xf32>
    %cst_93 = arith.constant dense<0.000000e+00> : vector<8x32xf32>
    %161 = tpu.matmul %160, %8, %cst_93 {dimension_numbers = #tpu.dot_dimension_numbers<[1], [0], [0], [1], [0, 0, 1, 1], [], []>} : vector<8x64xf32>, vector<64x32xf32>, vector<8x32xf32> -> vector<8x32xf32>
    %162 = vector.broadcast %9 : vector<1x32xf32> to vector<8x32xf32>
    %163 = arith.addf %161, %162 : vector<8x32xf32>
    %164 = math.tanh %163 : vector<8x32xf32>
    %c120 = arith.constant 120 : index
    %c0_94 = arith.constant 0 : index
    %165 = vector.load %arg23[%c120, %c0_94] : memref<144x32xf32, #tpu.memory_space<vmem>>, vector<8x32xf32>
    tpu.vector_store %arg23[%c120, %c0_94], %164 {strides = array<i32>} : memref<144x32xf32, #tpu.memory_space<vmem>>, vector<8x32xf32>,
    %c120_95 = arith.constant 120 : index
    %c0_96 = arith.constant 0 : index
    %166 = vector.load %arg22[%c120_95, %c0_96] : memref<128x32xf32, #tpu.memory_space<vmem>>, vector<8x32xf32>
    %cst_97 = arith.constant dense<0.000000e+00> : vector<8x32xf32>
    %167 = tpu.matmul %159, %7, %cst_97 {dimension_numbers = #tpu.dot_dimension_numbers<[1], [0], [0], [1], [0, 0, 1, 1], [], []>} : vector<8x32xf32>, vector<32x32xf32>, vector<8x32xf32> -> vector<8x32xf32>
    %168 = arith.addf %166, %167 : vector<8x32xf32>
    %169 = math.tanh %168 : vector<8x32xf32>
    %170 = tpu.concatenate %169, %164 in 1 : vector<8x32xf32>, vector<8x32xf32> -> vector<8x64xf32>
    %cst_98 = arith.constant dense<0.000000e+00> : vector<8x32xf32>
    %171 = tpu.matmul %170, %8, %cst_98 {dimension_numbers = #tpu.dot_dimension_numbers<[1], [0], [0], [1], [0, 0, 1, 1], [], []>} : vector<8x64xf32>, vector<64x32xf32>, vector<8x32xf32> -> vector<8x32xf32>
    %172 = vector.broadcast %9 : vector<1x32xf32> to vector<8x32xf32>
    %173 = arith.addf %171, %172 : vector<8x32xf32>
    %174 = math.tanh %173 : vector<8x32xf32>
    %c128 = arith.constant 128 : index
    %c0_99 = arith.constant 0 : index
    %175 = vector.load %arg23[%c128, %c0_99] : memref<144x32xf32, #tpu.memory_space<vmem>>, vector<8x32xf32>
    tpu.vector_store %arg23[%c128, %c0_99], %174 {strides = array<i32>} : memref<144x32xf32, #tpu.memory_space<vmem>>, vector<8x32xf32>,
    %c0_100 = arith.constant 0 : index
    %c0_101 = arith.constant 0 : index
    %176 = vector.load %arg14[%c0_100, %c0_101] : memref<128x1xf32, #tpu.memory_space<vmem>>, vector<128x1xf32>
    %c0_102 = arith.constant 0 : index
    %c0_103 = arith.constant 0 : index
    %177 = vector.load %arg23[%c0_102, %c0_103] : memref<144x32xf32, #tpu.memory_space<vmem>>, vector<128x32xf32>
    %c8_104 = arith.constant 8 : index
    %c0_105 = arith.constant 0 : index
    %178 = vector.load %arg23[%c8_104, %c0_105] : memref<144x32xf32, #tpu.memory_space<vmem>>, vector<128x32xf32>
    %c16_106 = arith.constant 16 : index
    %c0_107 = arith.constant 0 : index
    %179 = vector.load %arg23[%c16_106, %c0_107] : memref<144x32xf32, #tpu.memory_space<vmem>>, vector<128x32xf32>
    %180 = tpu.concatenate %177, %178, %179 in 1 : vector<128x32xf32>, vector<128x32xf32>, vector<128x32xf32> -> vector<128x96xf32>
    %c0_108 = arith.constant 0 : index
    %c0_109 = arith.constant 0 : index
    %181 = vector.load %arg6[%c0_108, %c0_109] : memref<96x16xf32, #tpu.memory_space<vmem>>, vector<96x16xf32>
    %cst_110 = arith.constant dense<0.000000e+00> : vector<128x16xf32>
    %182 = tpu.matmul %180, %181, %cst_110 {dimension_numbers = #tpu.dot_dimension_numbers<[1], [0], [0], [1], [0, 0, 1, 1], [], []>} : vector<128x96xf32>, vector<96x16xf32>, vector<128x16xf32> -> vector<128x16xf32>
    %183 = vector.broadcast %176 : vector<128x1xf32> to vector<128x16xf32>
    %184 = arith.mulf %182, %183 : vector<128x16xf32>
    %c0_111 = arith.constant 0 : index
    %c0_112 = arith.constant 0 : index
    %185 = vector.load %arg8[%c0_111, %c0_112] : memref<128x16xf32, #tpu.memory_space<vmem>>, vector<128x16xf32>
    %186 = arith.addf %184, %185 : vector<128x16xf32>
    %c0_113 = arith.constant 0 : index
    %c0_114 = arith.constant 0 : index
    %187 = vector.load %arg7[%c0_113, %c0_114] : memref<96x16xf32, #tpu.memory_space<vmem>>, vector<96x16xf32>
    %cst_115 = arith.constant dense<0.000000e+00> : vector<128x16xf32>
    %188 = tpu.matmul %180, %187, %cst_115 {dimension_numbers = #tpu.dot_dimension_numbers<[1], [0], [0], [1], [0, 0, 1, 1], [], []>} : vector<128x96xf32>, vector<96x16xf32>, vector<128x16xf32> -> vector<128x16xf32>
    %189 = vector.broadcast %176 : vector<128x1xf32> to vector<128x16xf32>
    %190 = arith.mulf %188, %189 : vector<128x16xf32>
    %c0_116 = arith.constant 0 : index
    %c0_117 = arith.constant 0 : index
    %191 = vector.load %arg9[%c0_116, %c0_117] : memref<128x16xf32, #tpu.memory_space<vmem>>, vector<128x16xf32>
    %192 = arith.addf %190, %191 : vector<128x16xf32>
    %193 = arith.maximumf %186, %192 : vector<128x16xf32>
    %cst_118 = arith.constant 0.000000e+00 : f32
    %194 = vector.broadcast %cst_118 : f32 to vector<128x16xf32>
    %195 = arith.maximumf %193, %194 : vector<128x16xf32>
    %cst_119 = arith.constant 0.000000e+00 : f32
    %196 = vector.broadcast %cst_119 : f32 to vector<8x16xf32>
    %c0_120 = arith.constant 0 : index
    %c0_121 = arith.constant 0 : index
    %197 = vector.load %arg24[%c0_120, %c0_121] : memref<144x16xf32, #tpu.memory_space<vmem>>, vector<8x16xf32>
    tpu.vector_store %arg24[%c0_120, %c0_121], %196 {strides = array<i32>} : memref<144x16xf32, #tpu.memory_space<vmem>>, vector<8x16xf32>,
    %c8_122 = arith.constant 8 : index
    %c0_123 = arith.constant 0 : index
    %198 = vector.load %arg24[%c8_122, %c0_123] : memref<144x16xf32, #tpu.memory_space<vmem>>, vector<128x16xf32>
    tpu.vector_store %arg24[%c8_122, %c0_123], %195 {strides = array<i32>} : memref<144x16xf32, #tpu.memory_space<vmem>>, vector<128x16xf32>,
    %cst_124 = arith.constant 0.000000e+00 : f32
    %199 = vector.broadcast %cst_124 : f32 to vector<8x16xf32>
    %c136_125 = arith.constant 136 : index
    %c0_126 = arith.constant 0 : index
    %200 = vector.load %arg24[%c136_125, %c0_126] : memref<144x16xf32, #tpu.memory_space<vmem>>, vector<8x16xf32>
    tpu.vector_store %arg24[%c136_125, %c0_126], %199 {strides = array<i32>} : memref<144x16xf32, #tpu.memory_space<vmem>>, vector<8x16xf32>,
    %c0_127 = arith.constant 0 : index
    %c0_128 = arith.constant 0 : index
    %201 = vector.load %arg24[%c0_127, %c0_128] : memref<144x16xf32, #tpu.memory_space<vmem>>, vector<128x16xf32>
    %c8_129 = arith.constant 8 : index
    %c0_130 = arith.constant 0 : index
    %202 = vector.load %arg24[%c8_129, %c0_130] : memref<144x16xf32, #tpu.memory_space<vmem>>, vector<128x16xf32>
    %c16_131 = arith.constant 16 : index
    %c0_132 = arith.constant 0 : index
    %203 = vector.load %arg24[%c16_131, %c0_132] : memref<144x16xf32, #tpu.memory_space<vmem>>, vector<128x16xf32>
    %204 = tpu.concatenate %201, %202, %203 in 1 : vector<128x16xf32>, vector<128x16xf32>, vector<128x16xf32> -> vector<128x48xf32>
    %c0_133 = arith.constant 0 : index
    %c0_134 = arith.constant 0 : index
    %205 = vector.load %arg10[%c0_133, %c0_134] : memref<48x8xf32, #tpu.memory_space<vmem>>, vector<48x8xf32>
    %cst_135 = arith.constant dense<0.000000e+00> : vector<128x8xf32>
    %206 = tpu.matmul %204, %205, %cst_135 {dimension_numbers = #tpu.dot_dimension_numbers<[1], [0], [0], [1], [0, 0, 1, 1], [], []>} : vector<128x48xf32>, vector<48x8xf32>, vector<128x8xf32> -> vector<128x8xf32>
    %207 = vector.broadcast %176 : vector<128x1xf32> to vector<128x8xf32>
    %208 = arith.mulf %206, %207 : vector<128x8xf32>
    %c0_136 = arith.constant 0 : index
    %c0_137 = arith.constant 0 : index
    %209 = vector.load %arg12[%c0_136, %c0_137] : memref<128x8xf32, #tpu.memory_space<vmem>>, vector<128x8xf32>
    %210 = arith.addf %208, %209 : vector<128x8xf32>
    %c0_138 = arith.constant 0 : index
    %c0_139 = arith.constant 0 : index
    %211 = vector.load %arg11[%c0_138, %c0_139] : memref<48x8xf32, #tpu.memory_space<vmem>>, vector<48x8xf32>
    %cst_140 = arith.constant dense<0.000000e+00> : vector<128x8xf32>
    %212 = tpu.matmul %204, %211, %cst_140 {dimension_numbers = #tpu.dot_dimension_numbers<[1], [0], [0], [1], [0, 0, 1, 1], [], []>} : vector<128x48xf32>, vector<48x8xf32>, vector<128x8xf32> -> vector<128x8xf32>
    %213 = vector.broadcast %176 : vector<128x1xf32> to vector<128x8xf32>
    %214 = arith.mulf %212, %213 : vector<128x8xf32>
    %c0_141 = arith.constant 0 : index
    %c0_142 = arith.constant 0 : index
    %215 = vector.load %arg13[%c0_141, %c0_142] : memref<128x8xf32, #tpu.memory_space<vmem>>, vector<128x8xf32>
    %216 = arith.addf %214, %215 : vector<128x8xf32>
    %217 = arith.maximumf %210, %216 : vector<128x8xf32>
    %cst_143 = arith.constant 0.000000e+00 : f32
    %218 = vector.broadcast %cst_143 : f32 to vector<128x8xf32>
    %219 = arith.maximumf %217, %218 : vector<128x8xf32>
    %220 = vector.extract_strided_slice %219 {offsets = [0, 0], sizes = [8, 8], strides = [1, 1]} : vector<128x8xf32> to vector<8x8xf32>
    %c0_144 = arith.constant 0 : index
    %c0_145 = arith.constant 0 : index
    %221 = vector.load %arg25[%c0_144, %c0_145] : memref<8x128xf32, #tpu.memory_space<vmem>>, vector<8x8xf32>
    tpu.vector_store %arg25[%c0_144, %c0_145], %220 {strides = array<i32>} : memref<8x128xf32, #tpu.memory_space<vmem>>, vector<8x8xf32>,
    %222 = vector.extract_strided_slice %219 {offsets = [8, 0], sizes = [8, 8], strides = [1, 1]} : vector<128x8xf32> to vector<8x8xf32>
    %c0_146 = arith.constant 0 : index
    %c8_147 = arith.constant 8 : index
    %223 = vector.load %arg25[%c0_146, %c8_147] : memref<8x128xf32, #tpu.memory_space<vmem>>, vector<8x8xf32>
    tpu.vector_store %arg25[%c0_146, %c8_147], %222 {strides = array<i32>} : memref<8x128xf32, #tpu.memory_space<vmem>>, vector<8x8xf32>,
    %224 = vector.extract_strided_slice %219 {offsets = [16, 0], sizes = [8, 8], strides = [1, 1]} : vector<128x8xf32> to vector<8x8xf32>
    %c0_148 = arith.constant 0 : index
    %c16_149 = arith.constant 16 : index
    %225 = vector.load %arg25[%c0_148, %c16_149] : memref<8x128xf32, #tpu.memory_space<vmem>>, vector<8x8xf32>
    tpu.vector_store %arg25[%c0_148, %c16_149], %224 {strides = array<i32>} : memref<8x128xf32, #tpu.memory_space<vmem>>, vector<8x8xf32>,
    %226 = vector.extract_strided_slice %219 {offsets = [24, 0], sizes = [8, 8], strides = [1, 1]} : vector<128x8xf32> to vector<8x8xf32>
    %c0_150 = arith.constant 0 : index
    %c24_151 = arith.constant 24 : index
    %227 = vector.load %arg25[%c0_150, %c24_151] : memref<8x128xf32, #tpu.memory_space<vmem>>, vector<8x8xf32>
    tpu.vector_store %arg25[%c0_150, %c24_151], %226 {strides = array<i32>} : memref<8x128xf32, #tpu.memory_space<vmem>>, vector<8x8xf32>,
    %228 = vector.extract_strided_slice %219 {offsets = [32, 0], sizes = [8, 8], strides = [1, 1]} : vector<128x8xf32> to vector<8x8xf32>
    %c0_152 = arith.constant 0 : index
    %c32_153 = arith.constant 32 : index
    %229 = vector.load %arg25[%c0_152, %c32_153] : memref<8x128xf32, #tpu.memory_space<vmem>>, vector<8x8xf32>
    tpu.vector_store %arg25[%c0_152, %c32_153], %228 {strides = array<i32>} : memref<8x128xf32, #tpu.memory_space<vmem>>, vector<8x8xf32>,
    %230 = vector.extract_strided_slice %219 {offsets = [40, 0], sizes = [8, 8], strides = [1, 1]} : vector<128x8xf32> to vector<8x8xf32>
    %c0_154 = arith.constant 0 : index
    %c40_155 = arith.constant 40 : index
    %231 = vector.load %arg25[%c0_154, %c40_155] : memref<8x128xf32, #tpu.memory_space<vmem>>, vector<8x8xf32>
    tpu.vector_store %arg25[%c0_154, %c40_155], %230 {strides = array<i32>} : memref<8x128xf32, #tpu.memory_space<vmem>>, vector<8x8xf32>,
    %232 = vector.extract_strided_slice %219 {offsets = [48, 0], sizes = [8, 8], strides = [1, 1]} : vector<128x8xf32> to vector<8x8xf32>
    %c0_156 = arith.constant 0 : index
    %c48_157 = arith.constant 48 : index
    %233 = vector.load %arg25[%c0_156, %c48_157] : memref<8x128xf32, #tpu.memory_space<vmem>>, vector<8x8xf32>
    tpu.vector_store %arg25[%c0_156, %c48_157], %232 {strides = array<i32>} : memref<8x128xf32, #tpu.memory_space<vmem>>, vector<8x8xf32>,
    %234 = vector.extract_strided_slice %219 {offsets = [56, 0], sizes = [8, 8], strides = [1, 1]} : vector<128x8xf32> to vector<8x8xf32>
    %c0_158 = arith.constant 0 : index
    %c56_159 = arith.constant 56 : index
    %235 = vector.load %arg25[%c0_158, %c56_159] : memref<8x128xf32, #tpu.memory_space<vmem>>, vector<8x8xf32>
    tpu.vector_store %arg25[%c0_158, %c56_159], %234 {strides = array<i32>} : memref<8x128xf32, #tpu.memory_space<vmem>>, vector<8x8xf32>,
    %236 = vector.extract_strided_slice %219 {offsets = [64, 0], sizes = [8, 8], strides = [1, 1]} : vector<128x8xf32> to vector<8x8xf32>
    %c0_160 = arith.constant 0 : index
    %c64_161 = arith.constant 64 : index
    %237 = vector.load %arg25[%c0_160, %c64_161] : memref<8x128xf32, #tpu.memory_space<vmem>>, vector<8x8xf32>
    tpu.vector_store %arg25[%c0_160, %c64_161], %236 {strides = array<i32>} : memref<8x128xf32, #tpu.memory_space<vmem>>, vector<8x8xf32>,
    %238 = vector.extract_strided_slice %219 {offsets = [72, 0], sizes = [8, 8], strides = [1, 1]} : vector<128x8xf32> to vector<8x8xf32>
    %c0_162 = arith.constant 0 : index
    %c72_163 = arith.constant 72 : index
    %239 = vector.load %arg25[%c0_162, %c72_163] : memref<8x128xf32, #tpu.memory_space<vmem>>, vector<8x8xf32>
    tpu.vector_store %arg25[%c0_162, %c72_163], %238 {strides = array<i32>} : memref<8x128xf32, #tpu.memory_space<vmem>>, vector<8x8xf32>,
    %240 = vector.extract_strided_slice %219 {offsets = [80, 0], sizes = [8, 8], strides = [1, 1]} : vector<128x8xf32> to vector<8x8xf32>
    %c0_164 = arith.constant 0 : index
    %c80_165 = arith.constant 80 : index
    %241 = vector.load %arg25[%c0_164, %c80_165] : memref<8x128xf32, #tpu.memory_space<vmem>>, vector<8x8xf32>
    tpu.vector_store %arg25[%c0_164, %c80_165], %240 {strides = array<i32>} : memref<8x128xf32, #tpu.memory_space<vmem>>, vector<8x8xf32>,
    %242 = vector.extract_strided_slice %219 {offsets = [88, 0], sizes = [8, 8], strides = [1, 1]} : vector<128x8xf32> to vector<8x8xf32>
    %c0_166 = arith.constant 0 : index
    %c88_167 = arith.constant 88 : index
    %243 = vector.load %arg25[%c0_166, %c88_167] : memref<8x128xf32, #tpu.memory_space<vmem>>, vector<8x8xf32>
    tpu.vector_store %arg25[%c0_166, %c88_167], %242 {strides = array<i32>} : memref<8x128xf32, #tpu.memory_space<vmem>>, vector<8x8xf32>,
    %244 = vector.extract_strided_slice %219 {offsets = [96, 0], sizes = [8, 8], strides = [1, 1]} : vector<128x8xf32> to vector<8x8xf32>
    %c0_168 = arith.constant 0 : index
    %c96_169 = arith.constant 96 : index
    %245 = vector.load %arg25[%c0_168, %c96_169] : memref<8x128xf32, #tpu.memory_space<vmem>>, vector<8x8xf32>
    tpu.vector_store %arg25[%c0_168, %c96_169], %244 {strides = array<i32>} : memref<8x128xf32, #tpu.memory_space<vmem>>, vector<8x8xf32>,
    %246 = vector.extract_strided_slice %219 {offsets = [104, 0], sizes = [8, 8], strides = [1, 1]} : vector<128x8xf32> to vector<8x8xf32>
    %c0_170 = arith.constant 0 : index
    %c104_171 = arith.constant 104 : index
    %247 = vector.load %arg25[%c0_170, %c104_171] : memref<8x128xf32, #tpu.memory_space<vmem>>, vector<8x8xf32>
    tpu.vector_store %arg25[%c0_170, %c104_171], %246 {strides = array<i32>} : memref<8x128xf32, #tpu.memory_space<vmem>>, vector<8x8xf32>,
    %248 = vector.extract_strided_slice %219 {offsets = [112, 0], sizes = [8, 8], strides = [1, 1]} : vector<128x8xf32> to vector<8x8xf32>
    %c0_172 = arith.constant 0 : index
    %c112_173 = arith.constant 112 : index
    %249 = vector.load %arg25[%c0_172, %c112_173] : memref<8x128xf32, #tpu.memory_space<vmem>>, vector<8x8xf32>
    tpu.vector_store %arg25[%c0_172, %c112_173], %248 {strides = array<i32>} : memref<8x128xf32, #tpu.memory_space<vmem>>, vector<8x8xf32>,
    %250 = vector.extract_strided_slice %219 {offsets = [120, 0], sizes = [8, 8], strides = [1, 1]} : vector<128x8xf32> to vector<8x8xf32>
    %c0_174 = arith.constant 0 : index
    %c120_175 = arith.constant 120 : index
    %251 = vector.load %arg25[%c0_174, %c120_175] : memref<8x128xf32, #tpu.memory_space<vmem>>, vector<8x8xf32>
    tpu.vector_store %arg25[%c0_174, %c120_175], %250 {strides = array<i32>} : memref<8x128xf32, #tpu.memory_space<vmem>>, vector<8x8xf32>,
    %c0_176 = arith.constant 0 : index
    %c0_177 = arith.constant 0 : index
    %252 = vector.load %arg25[%c0_176, %c0_177] : memref<8x128xf32, #tpu.memory_space<vmem>>, vector<8x128xf32>
    %c0_178 = arith.constant 0 : index
    %c0_179 = arith.constant 0 : index
    %253 = vector.load %arg15[%c0_178, %c0_179] : memref<128x256xf32, #tpu.memory_space<vmem>>, vector<128x256xf32>
    %cst_180 = arith.constant dense<0.000000e+00> : vector<8x256xf32>
    %254 = tpu.matmul %252, %253, %cst_180 {dimension_numbers = #tpu.dot_dimension_numbers<[1], [0], [0], [1], [0, 0, 1, 1], [], []>} : vector<8x128xf32>, vector<128x256xf32>, vector<8x256xf32> -> vector<8x256xf32>
    %c0_181 = arith.constant 0 : index
    %c0_182 = arith.constant 0 : index
    %255 = vector.load %arg16[%c0_181, %c0_182] : memref<1x256xf32, #tpu.memory_space<vmem>>, vector<1x256xf32>
    %256 = vector.broadcast %255 : vector<1x256xf32> to vector<8x256xf32>
    %257 = arith.addf %254, %256 : vector<8x256xf32>
    %cst_183 = arith.constant dense<0.000000e+00> : vector<8xf32>
    %258 = vector.multi_reduction <add>, %257, %cst_183 [1] : vector<8x256xf32> to vector<8xf32>
    %259 = vector.shape_cast %258 : vector<8xf32> to vector<8x1xf32>
    %cst_184 = arith.constant 2.560000e+02 : f32
    %260 = vector.broadcast %cst_184 : f32 to vector<8x1xf32>
    %261 = arith.divf %259, %260 : vector<8x1xf32>
    %262 = vector.broadcast %261 : vector<8x1xf32> to vector<8x256xf32>
    %263 = arith.subf %257, %262 : vector<8x256xf32>
    %264 = vector.broadcast %261 : vector<8x1xf32> to vector<8x256xf32>
    %265 = arith.subf %257, %264 : vector<8x256xf32>
    %266 = arith.mulf %263, %265 : vector<8x256xf32>
    %cst_185 = arith.constant dense<0.000000e+00> : vector<8xf32>
    %267 = vector.multi_reduction <add>, %266, %cst_185 [1] : vector<8x256xf32> to vector<8xf32>
    %268 = vector.shape_cast %267 : vector<8xf32> to vector<8x1xf32>
    %cst_186 = arith.constant 2.560000e+02 : f32
    %269 = vector.broadcast %cst_186 : f32 to vector<8x1xf32>
    %270 = arith.divf %268, %269 : vector<8x1xf32>
    %271 = vector.broadcast %261 : vector<8x1xf32> to vector<8x256xf32>
    %272 = arith.subf %257, %271 : vector<8x256xf32>
    %cst_187 = arith.constant 9.99999974E-6 : f32
    %273 = vector.broadcast %cst_187 : f32 to vector<8x1xf32>
    %274 = arith.addf %270, %273 : vector<8x1xf32>
    %275 = math.rsqrt %274 : vector<8x1xf32>
    %276 = vector.broadcast %275 : vector<8x1xf32> to vector<8x256xf32>
    %277 = arith.mulf %272, %276 : vector<8x256xf32>
    %c0_188 = arith.constant 0 : index
    %c0_189 = arith.constant 0 : index
    %278 = vector.load %arg17[%c0_188, %c0_189] : memref<1x256xf32, #tpu.memory_space<vmem>>, vector<1x256xf32>
    %279 = vector.broadcast %278 : vector<1x256xf32> to vector<8x256xf32>
    %280 = arith.mulf %277, %279 : vector<8x256xf32>
    %c0_190 = arith.constant 0 : index
    %c0_191 = arith.constant 0 : index
    %281 = vector.load %arg18[%c0_190, %c0_191] : memref<1x256xf32, #tpu.memory_space<vmem>>, vector<1x256xf32>
    %282 = vector.broadcast %281 : vector<1x256xf32> to vector<8x256xf32>
    %283 = arith.addf %280, %282 : vector<8x256xf32>
    %c0_192 = arith.constant 0 : index
    %c0_193 = arith.constant 0 : index
    %284 = vector.load %arg19[%c0_192, %c0_193] : memref<256x3xf32, #tpu.memory_space<vmem>>, vector<256x3xf32>
    %cst_194 = arith.constant dense<0.000000e+00> : vector<8x3xf32>
    %285 = tpu.matmul %283, %284, %cst_194 {dimension_numbers = #tpu.dot_dimension_numbers<[1], [0], [0], [1], [0, 0, 1, 1], [], []>} : vector<8x256xf32>, vector<256x3xf32>, vector<8x3xf32> -> vector<8x3xf32>
    %c0_195 = arith.constant 0 : index
    %c0_196 = arith.constant 0 : index
    %286 = vector.load %arg20[%c0_195, %c0_196] : memref<1x3xf32, #tpu.memory_space<vmem>>, vector<1x3xf32>
    %287 = vector.broadcast %286 : vector<1x3xf32> to vector<8x3xf32>
    %288 = arith.addf %285, %287 : vector<8x3xf32>
    %289 = vector.extract_strided_slice %288 {offsets = [0, 0], sizes = [2, 3], strides = [1, 1]} : vector<8x3xf32> to vector<2x3xf32>
    %c0_197 = arith.constant 0 : index
    %c0_198 = arith.constant 0 : index
    %290 = vector.load %arg21[%c0_197, %c0_198] : memref<2x3xf32, #tpu.memory_space<vmem>>, vector<2x3xf32>
    tpu.vector_store %arg21[%c0_197, %c0_198], %289 {strides = array<i32>} : memref<2x3xf32, #tpu.memory_space<vmem>>, vector<2x3xf32>,
    return
  }
}

</mosaic_0001>

<llo_original>
// kernel: rnncnn1d_forward.1
$region0: #{rnncnn1d_forward.1}
  #allocation0 [shape = 'u32[]', space=smem, size = 0x4, offset = 0x4, fixed_abs, tag = 'smem constant byte address 0x4 - core index']
  #allocation1 [shape = 'u32[72,128]{1,0:T(1,128)}', space=vmem, size = 0x9000, scoped, tag = 'internal scratch']
  #allocation2 [shape = 'f32[128,32]{1,0:T(8,128)}', space=vmem, size = 0x10000, scoped, tag = 'scratch operand']
  #allocation3 [shape = 'f32[144,32]{1,0:T(8,128)}', space=vmem, size = 0x12000, scoped, tag = 'scratch operand']
  #allocation4 [shape = 'f32[144,16]{1,0:T(8,128)}', space=vmem, size = 0x12000, scoped, tag = 'scratch operand']
  #allocation5 [shape = 'f32[8,128]{1,0:T(8,128)}', space=vmem, size = 0x1000, scoped, tag = 'scratch operand']
  %s0 = inlined_call_operand.vmem [shape: f32[128,4], index: 0, kind: input, shape index: {}]
  %s1 = inlined_call_operand.vmem [shape: f32[4,32], index: 1, kind: input, shape index: {}]
  %s2 = inlined_call_operand.vmem [shape: f32[32,32], index: 2, kind: input, shape index: {}]
  %s3 = inlined_call_operand.vmem [shape: f32[1,32], index: 3, kind: input, shape index: {}]
  %s4 = inlined_call_operand.vmem [shape: f32[64,32], index: 4, kind: input, shape index: {}]
  %s5 = inlined_call_operand.vmem [shape: f32[1,32], index: 5, kind: input, shape index: {}]
  %s6 = inlined_call_operand.vmem [shape: f32[96,16], index: 6, kind: input, shape index: {}]
  %s7 = inlined_call_operand.vmem [shape: f32[96,16], index: 7, kind: input, shape index: {}]
  %s8 = inlined_call_operand.vmem [shape: f32[128,16], index: 8, kind: input, shape index: {}]
  %s9 = inlined_call_operand.vmem [shape: f32[128,16], index: 9, kind: input, shape index: {}]
  %s10 = inlined_call_operand.vmem [shape: f32[48,8], index: 10, kind: input, shape index: {}]
  %s11 = inlined_call_operand.vmem [shape: f32[48,8], index: 11, kind: input, shape index: {}]
  %s12 = inlined_call_operand.vmem [shape: f32[128,8], index: 12, kind: input, shape index: {}]
  %s13 = inlined_call_operand.vmem [shape: f32[128,8], index: 13, kind: input, shape index: {}]
  %s14 = inlined_call_operand.vmem [shape: f32[128,1], index: 14, kind: input, shape index: {}]
  %s15 = inlined_call_operand.vmem [shape: f32[128,256], index: 15, kind: input, shape index: {}]
  %s16 = inlined_call_operand.vmem [shape: f32[1,256], index: 16, kind: input, shape index: {}]
  %s17 = inlined_call_operand.vmem [shape: f32[1,256], index: 17, kind: input, shape index: {}]
  %s18 = inlined_call_operand.vmem [shape: f32[1,256], index: 18, kind: input, shape index: {}]
  %s19 = inlined_call_operand.vmem [shape: f32[256,3], index: 19, kind: input, shape index: {}]
  %s20 = inlined_call_operand.vmem [shape: f32[1,3], index: 20, kind: input, shape index: {}]
  %s21 = inlined_call_operand.hbm [shape: f32[2,3], index: 21, kind: output, shape index: {}]
  %s22 = sld [smem:[#allocation0]]
  $region94: #{rnncnn1d_forward.1} parent=0
    _
  %s24 = ssub.s32 1, %s22
  %s25 = scalar_select 0, %s24, %s22
  $region1: #{rnncnn1d_forward.1} parent=0
    #allocation6 [shape = 'u8[1024]{0}', space=vmem, size = 0x400, scoped, tag = 'output window, operand 0, single buffered']
    #allocation7 [shape = 's32[1]{0}', space=sflag, size = 0x4, scoped, tag = 'scoped memory for rnncnn1d_forward.1']
    %26 = vsyncpa [#allocation7], 0
    // Predicated region
    $region2: #{rnncnn1d_forward.1} parent=1 // pred_check
      _
    $region3: #{rnncnn1d_forward.1} parent=1 // pred_check_branch
      %28 = sbr.rel (0) target = $region5
    $region4: #{rnncnn1d_forward.1} parent=1 // pred_region
      _
    $region5: #{rnncnn1d_forward.1} parent=1 // pred_fallthru
      _
    // Predicated region
    $region6: #{rnncnn1d_forward.1} parent=1 // pred_check
      _
    $region7: #{rnncnn1d_forward.1} parent=1 // pred_check_branch
      %30 = sbr.rel (0) target = $region9
    $region8: #{rnncnn1d_forward.1} parent=1 // pred_region
      _
    $region9: #{rnncnn1d_forward.1} parent=1 // pred_fallthru
      _
    // Predicated region
    $region10: #{rnncnn1d_forward.1} parent=1 // pred_check
      _
    $region11: #{rnncnn1d_forward.1} parent=1 // pred_check_branch
      %32 = sbr.rel (0) target = $region13
    $region12: #{rnncnn1d_forward.1} parent=1 // pred_region
      _
    $region13: #{rnncnn1d_forward.1} parent=1 // pred_fallthru
      _
    // Predicated region
    $region14: #{rnncnn1d_forward.1} parent=1 // pred_check
      _
    $region15: #{rnncnn1d_forward.1} parent=1 // pred_check_branch
      %34 = sbr.rel (0) target = $region17
    $region16: #{rnncnn1d_forward.1} parent=1 // pred_region
      _
    $region17: #{rnncnn1d_forward.1} parent=1 // pred_fallthru
      _
    // Predicated region
    $region18: #{rnncnn1d_forward.1} parent=1 // pred_check
      _
    $region19: #{rnncnn1d_forward.1} parent=1 // pred_check_branch
      %36 = sbr.rel (0) target = $region21
    $region20: #{rnncnn1d_forward.1} parent=1 // pred_region
      _
    $region21: #{rnncnn1d_forward.1} parent=1 // pred_fallthru
      _
    // Predicated region
    $region22: #{rnncnn1d_forward.1} parent=1 // pred_check
      _
    $region23: #{rnncnn1d_forward.1} parent=1 // pred_check_branch
      %38 = sbr.rel (0) target = $region25
    $region24: #{rnncnn1d_forward.1} parent=1 // pred_region
      _
    $region25: #{rnncnn1d_forward.1} parent=1 // pred_fallthru
      _
    // Predicated region
    $region26: #{rnncnn1d_forward.1} parent=1 // pred_check
      _
    $region27: #{rnncnn1d_forward.1} parent=1 // pred_check_branch
      %40 = sbr.rel (0) target = $region29
    $region28: #{rnncnn1d_forward.1} parent=1 // pred_region
      _
    $region29: #{rnncnn1d_forward.1} parent=1 // pred_fallthru
      _
    // Predicated region
    $region30: #{rnncnn1d_forward.1} parent=1 // pred_check
      _
    $region31: #{rnncnn1d_forward.1} parent=1 // pred_check_branch
      %42 = sbr.rel (0) target = $region33
    $region32: #{rnncnn1d_forward.1} parent=1 // pred_region
      _
    $region33: #{rnncnn1d_forward.1} parent=1 // pred_fallthru
      _
    // Predicated region
    $region34: #{rnncnn1d_forward.1} parent=1 // pred_check
      _
    $region35: #{rnncnn1d_forward.1} parent=1 // pred_check_branch
      %44 = sbr.rel (0) target = $region37
    $region36: #{rnncnn1d_forward.1} parent=1 // pred_region
      _
    $region37: #{rnncnn1d_forward.1} parent=1 // pred_fallthru
      _
    // Predicated region
    $region38: #{rnncnn1d_forward.1} parent=1 // pred_check
      _
    $region39: #{rnncnn1d_forward.1} parent=1 // pred_check_branch
      %46 = sbr.rel (0) target = $region41
    $region40: #{rnncnn1d_forward.1} parent=1 // pred_region
      _
    $region41: #{rnncnn1d_forward.1} parent=1 // pred_fallthru
      _
    // Predicated region
    $region42: #{rnncnn1d_forward.1} parent=1 // pred_check
      _
    $region43: #{rnncnn1d_forward.1} parent=1 // pred_check_branch
      %48 = sbr.rel (0) target = $region45
    $region44: #{rnncnn1d_forward.1} parent=1 // pred_region
      _
    $region45: #{rnncnn1d_forward.1} parent=1 // pred_fallthru
      _
    // Predicated region
    $region46: #{rnncnn1d_forward.1} parent=1 // pred_check
      _
    $region47: #{rnncnn1d_forward.1} parent=1 // pred_check_branch
      %50 = sbr.rel (0) target = $region49
    $region48: #{rnncnn1d_forward.1} parent=1 // pred_region
      _
    $region49: #{rnncnn1d_forward.1} parent=1 // pred_fallthru
      _
    // Predicated region
    $region50: #{rnncnn1d_forward.1} parent=1 // pred_check
      _
    $region51: #{rnncnn1d_forward.1} parent=1 // pred_check_branch
      %52 = sbr.rel (0) target = $region53
    $region52: #{rnncnn1d_forward.1} parent=1 // pred_region
      _
    $region53: #{rnncnn1d_forward.1} parent=1 // pred_fallthru
      _
    // Predicated region
    $region54: #{rnncnn1d_forward.1} parent=1 // pred_check
      _
    $region55: #{rnncnn1d_forward.1} parent=1 // pred_check_branch
      %54 = sbr.rel (0) target = $region57
    $region56: #{rnncnn1d_forward.1} parent=1 // pred_region
      _
    $region57: #{rnncnn1d_forward.1} parent=1 // pred_fallthru
      _
    // Predicated region
    $region58: #{rnncnn1d_forward.1} parent=1 // pred_check
      _
    $region59: #{rnncnn1d_forward.1} parent=1 // pred_check_branch
      %56 = sbr.rel (0) target = $region61
    $region60: #{rnncnn1d_forward.1} parent=1 // pred_region
      _
    $region61: #{rnncnn1d_forward.1} parent=1 // pred_fallthru
      _
    // Predicated region
    $region62: #{rnncnn1d_forward.1} parent=1 // pred_check
      _
    $region63: #{rnncnn1d_forward.1} parent=1 // pred_check_branch
      %58 = sbr.rel (0) target = $region65
    $region64: #{rnncnn1d_forward.1} parent=1 // pred_region
      _
    $region65: #{rnncnn1d_forward.1} parent=1 // pred_fallthru
      _
    // Predicated region
    $region66: #{rnncnn1d_forward.1} parent=1 // pred_check
      _
    $region67: #{rnncnn1d_forward.1} parent=1 // pred_check_branch
      %60 = sbr.rel (0) target = $region69
    $region68: #{rnncnn1d_forward.1} parent=1 // pred_region
      _
    $region69: #{rnncnn1d_forward.1} parent=1 // pred_fallthru
      _
    // Predicated region
    $region70: #{rnncnn1d_forward.1} parent=1 // pred_check
      _
    $region71: #{rnncnn1d_forward.1} parent=1 // pred_check_branch
      %62 = sbr.rel (0) target = $region73
    $region72: #{rnncnn1d_forward.1} parent=1 // pred_region
      _
    $region73: #{rnncnn1d_forward.1} parent=1 // pred_fallthru
      _
    // Predicated region
    $region74: #{rnncnn1d_forward.1} parent=1 // pred_check
      _
    $region75: #{rnncnn1d_forward.1} parent=1 // pred_check_branch
      %64 = sbr.rel (0) target = $region77
    $region76: #{rnncnn1d_forward.1} parent=1 // pred_region
      _
    $region77: #{rnncnn1d_forward.1} parent=1 // pred_fallthru
      _
    // Predicated region
    $region78: #{rnncnn1d_forward.1} parent=1 // pred_check
      _
    $region79: #{rnncnn1d_forward.1} parent=1 // pred_check_branch
      %66 = sbr.rel (0) target = $region81
    $region80: #{rnncnn1d_forward.1} parent=1 // pred_region
      _
    $region81: #{rnncnn1d_forward.1} parent=1 // pred_fallthru
      _
    // Predicated region
    $region82: #{rnncnn1d_forward.1} parent=1 // pred_check
      _
    $region83: #{rnncnn1d_forward.1} parent=1 // pred_check_branch
      %68 = sbr.rel (0) target = $region85
    $region84: #{rnncnn1d_forward.1} parent=1 // pred_region
      _
    $region85: #{rnncnn1d_forward.1} parent=1 // pred_fallthru
      _
    %v69 = vld [vmem:[%s0] sm:$0xff]
    %v70 = vld [vmem:[%s0 + $0x8] sm:$0xff]
    %v71 = vld [vmem:[%s0 + $0x10] sm:$0xff]
    %v72 = vld [vmem:[%s0 + $0x18] sm:$0xff]
    %v73 = vld [vmem:[%s0 + $0x20] sm:$0xff]
    %v74 = vld [vmem:[%s0 + $0x28] sm:$0xff]
    %v75 = vld [vmem:[%s0 + $0x30] sm:$0xff]
    %v76 = vld [vmem:[%s0 + $0x38] sm:$0xff]
    %v77 = vld [vmem:[%s0 + $0x40] sm:$0xff]
    %v78 = vld [vmem:[%s0 + $0x48] sm:$0xff]
    %v79 = vld [vmem:[%s0 + $0x50] sm:$0xff]
    %v80 = vld [vmem:[%s0 + $0x58] sm:$0xff]
    %v81 = vld [vmem:[%s0 + $0x60] sm:$0xff]
    %v82 = vld [vmem:[%s0 + $0x68] sm:$0xff]
    %v83 = vld [vmem:[%s0 + $0x70] sm:$0xff]
    %v84 = vld [vmem:[%s0 + $0x78] sm:$0xff]
    %v85 = vld [vmem:[%s1] sm:$0xf]
    %v86 = vld [vmem:[%s3] sm:$0x1]
    %v88 = vperm.slane %v86, 0
    %vm90 = vcmask 31744
    %v92 = vsel %vm90, %v69, 0
    %v95 = vsel %vm90, %v70, 0
    %v98 = vsel %vm90, %v71, 0
    %v101 = vsel %vm90, %v72, 0
    %v104 = vsel %vm90, %v73, 0
    %v107 = vsel %vm90, %v74, 0
    %v110 = vsel %vm90, %v75, 0
    %v113 = vsel %vm90, %v76, 0
    %v116 = vsel %vm90, %v77, 0
    %v119 = vsel %vm90, %v78, 0
    %v122 = vsel %vm90, %v79, 0
    %v125 = vsel %vm90, %v80, 0
    %v128 = vsel %vm90, %v81, 0
    %v131 = vsel %vm90, %v82, 0
    %v134 = vsel %vm90, %v83, 0
    %v137 = vsel %vm90, %v84, 0
    %vm139 = vcmask 1043456
    %v141 = vsel %vm139, %v85, 0
    %143 = vmatpush.msra.mxu0 0.0
    %144 = vmatpush.msra.mxu0 0.0
    %145 = vmatpush.msra.mxu0 0.0
    %146 = vmatpush.msra.mxu0 0.0
    %147 = vmatpush.msra.mxu0 0.0
    %148 = vmatpush.msra.mxu0 0.0
    %149 = vmatpush.msra.mxu0 0.0
    %150 = vmatpush.msra.mxu0 0.0
    %151 = vmatpush.msra.mxu0 0.0
    %152 = vmatpush.msra.mxu0 0.0
    %153 = vmatpush.msra.mxu0 0.0
    %154 = vmatpush.msra.mxu0 0.0
    %155 = vmatpush.msra.mxu0 0.0
    %156 = vmatpush.msra.mxu0 0.0
    %157 = vmatpush.msra.mxu0 0.0
    %158 = vmatpush.msra.mxu0 %v141
    %159 = vmatmul.f32.gmra.mxu0 %v92
    %v160 = vpop.f32.mrf.mxu0
    %v161 = vadd.f32 %v88, %v160
    %162 = vmatmul.f32.gmra.mxu0 %v95
    %v163 = vpop.f32.mrf.mxu0
    %v164 = vadd.f32 %v88, %v163
    %165 = vmatmul.f32.gmra.mxu0 %v98
    %v166 = vpop.f32.mrf.mxu0
    %v167 = vadd.f32 %v88, %v166
    %168 = vmatmul.f32.gmra.mxu0 %v101
    %v169 = vpop.f32.mrf.mxu0
    %v170 = vadd.f32 %v88, %v169
    %171 = vmatmul.f32.gmra.mxu0 %v104
    %v172 = vpop.f32.mrf.mxu0
    %v173 = vadd.f32 %v88, %v172
    %174 = vmatmul.f32.gmra.mxu0 %v107
    %v175 = vpop.f32.mrf.mxu0
    %v176 = vadd.f32 %v88, %v175
    %177 = vmatmul.f32.gmra.mxu0 %v110
    %v178 = vpop.f32.mrf.mxu0
    %v179 = vadd.f32 %v88, %v178
    %180 = vmatmul.f32.gmra.mxu0 %v113
    %v181 = vpop.f32.mrf.mxu0
    %v182 = vadd.f32 %v88, %v181
    %183 = vmatmul.f32.gmra.mxu0 %v116
    %v184 = vpop.f32.mrf.mxu0
    %v185 = vadd.f32 %v88, %v184
    %186 = vmatmul.f32.gmra.mxu0 %v119
    %v187 = vpop.f32.mrf.mxu0
    %v188 = vadd.f32 %v88, %v187
    %189 = vmatmul.f32.gmra.mxu0 %v122
    %v190 = vpop.f32.mrf.mxu0
    %v191 = vadd.f32 %v88, %v190
    %192 = vmatmul.f32.gmra.mxu0 %v125
    %v193 = vpop.f32.mrf.mxu0
    %v194 = vadd.f32 %v88, %v193
    %195 = vmatmul.f32.gmra.mxu0 %v128
    %v196 = vpop.f32.mrf.mxu0
    %v197 = vadd.f32 %v88, %v196
    %198 = vmatmul.f32.gmra.mxu0 %v131
    %v199 = vpop.f32.mrf.mxu0
    %v200 = vadd.f32 %v88, %v199
    %201 = vmatmul.f32.gmra.mxu0 %v134
    %v202 = vpop.f32.mrf.mxu0
    %v203 = vadd.f32 %v88, %v202
    %204 = vmatmul.f32.gmra.mxu0 %v137
    %v205 = vpop.f32.mrf.mxu0
    %v206 = vadd.f32 %v88, %v205
    %207 = vdwg.mxu0
    %vm208 = vcmask 261120
    %209 = vst.msk [vmem:[#allocation2] sm:$0xff] %vm208, %v161
    %210 = vst.msk [vmem:[#allocation2 + $0x8] sm:$0xff] %vm208, %v164
    %211 = vst.msk [vmem:[#allocation2 + $0x10] sm:$0xff] %vm208, %v167
    %212 = vst.msk [vmem:[#allocation2 + $0x18] sm:$0xff] %vm208, %v170
    %213 = vst.msk [vmem:[#allocation2 + $0x20] sm:$0xff] %vm208, %v173
    %214 = vst.msk [vmem:[#allocation2 + $0x28] sm:$0xff] %vm208, %v176
    %215 = vst.msk [vmem:[#allocation2 + $0x30] sm:$0xff] %vm208, %v179
    %216 = vst.msk [vmem:[#allocation2 + $0x38] sm:$0xff] %vm208, %v182
    %217 = vst.msk [vmem:[#allocation2 + $0x40] sm:$0xff] %vm208, %v185
    %218 = vst.msk [vmem:[#allocation2 + $0x48] sm:$0xff] %vm208, %v188
    %219 = vst.msk [vmem:[#allocation2 + $0x50] sm:$0xff] %vm208, %v191
    %220 = vst.msk [vmem:[#allocation2 + $0x58] sm:$0xff] %vm208, %v194
    %221 = vst.msk [vmem:[#allocation2 + $0x60] sm:$0xff] %vm208, %v197
    %222 = vst.msk [vmem:[#allocation2 + $0x68] sm:$0xff] %vm208, %v200
    %223 = vst.msk [vmem:[#allocation2 + $0x70] sm:$0xff] %vm208, %v203
    %224 = vst.msk [vmem:[#allocation2 + $0x78] sm:$0xff] %vm208, %v206
    %v225 = vld [vmem:[%s2] sm:$0xff]
    %v226 = vld [vmem:[%s2 + $0x8] sm:$0xff]
    %v227 = vld [vmem:[%s2 + $0x10] sm:$0xff]
    %v228 = vld [vmem:[%s2 + $0x18] sm:$0xff]
    %v229 = vld [vmem:[%s4] sm:$0xff]
    %v230 = vld [vmem:[%s4 + $0x8] sm:$0xff]
    %v231 = vld [vmem:[%s4 + $0x10] sm:$0xff]
    %v232 = vld [vmem:[%s4 + $0x18] sm:$0xff]
    %v233 = vld [vmem:[%s4 + $0x20] sm:$0xff]
    %v234 = vld [vmem:[%s4 + $0x28] sm:$0xff]
    %v235 = vld [vmem:[%s4 + $0x30] sm:$0xff]
    %v236 = vld [vmem:[%s4 + $0x38] sm:$0xff]
    %v237 = vld [vmem:[%s5] sm:$0x1]
    %238 = vst.msk [vmem:[#allocation3] sm:$0xff] %vm208, 0.0
    %239 = vst.msk [vmem:[#allocation3 + $0x88] sm:$0xff] %vm208, 0.0
    %v240 = vld [vmem:[#allocation2] sm:$0xff]
    %v242 = vsel %vm208, 0.0, 0
    %244 = vmatpush.msra.mxu0 0.0
    %245 = vmatpush.msra.mxu0 0.0
    %246 = vmatpush.msra.mxu0 0.0
    %247 = vmatpush.msra.mxu0 0.0
    %248 = vmatpush.msra.mxu0 0.0
    %249 = vmatpush.msra.mxu0 0.0
    %250 = vmatpush.msra.mxu0 0.0
    %251 = vmatpush.msra.mxu0 0.0
    %252 = vmatpush.msra.mxu0 0.0
    %253 = vmatpush.msra.mxu0 0.0
    %254 = vmatpush.msra.mxu0 0.0
    %255 = vmatpush.msra.mxu0 0.0
    %256 = vmatpush.msra.mxu0 %v228
    %257 = vmatpush.msra.mxu0 %v227
    %258 = vmatpush.msra.mxu0 %v226
    %259 = vmatpush.msra.mxu0 %v225
    %260 = vmatmul.f32.gmra.mxu0 %v242
    %v261 = vpop.f32.mrf.mxu0
    %v262 = vadd.f32 0.0, %v261
    %263 = vdwg.mxu0
    %v264 = vadd.f32 %v240, %v262
    %v265 = vtanh.pop %v264
    %v266 = vsel %vm208, %v265, 0.0
    %v268 = vperm.slane %v237, 0
    %vm270 = vcmask 523264
    %v272 = vsel %vm270, %v266, 0
    %274 = vmatpush.msra.mxu0 0.0
    %275 = vmatpush.msra.mxu0 0.0
    %276 = vmatpush.msra.mxu0 0.0
    %277 = vmatpush.msra.mxu0 0.0
    %278 = vmatpush.msra.mxu0 0.0
    %279 = vmatpush.msra.mxu0 0.0
    %280 = vmatpush.msra.mxu0 0.0
    %281 = vmatpush.msra.mxu0 0.0
    %282 = vmatpush.msra.mxu0 %v236
    %283 = vmatpush.msra.mxu0 %v235
    %284 = vmatpush.msra.mxu0 %v234
    %285 = vmatpush.msra.mxu0 %v233
    %286 = vmatpush.msra.mxu0 %v232
    %287 = vmatpush.msra.mxu0 %v231
    %288 = vmatpush.msra.mxu0 %v230
    %289 = vmatpush.msra.mxu0 %v229
    %290 = vmatmul.f32.gmra.mxu0 %v272
    %v291 = vpop.f32.mrf.mxu0
    %v292 = vadd.f32 %v268, %v291
    %293 = vdwg.mxu0
    %v294 = vtanh.pop %v292
    %295 = vst.msk [vmem:[#allocation3 + $0x8] sm:$0xff] %vm208, %v294
    %v296 = vld [vmem:[#allocation2 + $0x8] sm:$0xff]
    %v298 = vsel %vm208, %v265, 0
    %300 = vmatpush.msra.mxu0 0.0
    %301 = vmatpush.msra.mxu0 0.0
    %302 = vmatpush.msra.mxu0 0.0
    %303 = vmatpush.msra.mxu0 0.0
    %304 = vmatpush.msra.mxu0 0.0
    %305 = vmatpush.msra.mxu0 0.0
    %306 = vmatpush.msra.mxu0 0.0
    %307 = vmatpush.msra.mxu0 0.0
    %308 = vmatpush.msra.mxu0 0.0
    %309 = vmatpush.msra.mxu0 0.0
    %310 = vmatpush.msra.mxu0 0.0
    %311 = vmatpush.msra.mxu0 0.0
    %312 = vmatpush.msra.mxu0 %v228
    %313 = vmatpush.msra.mxu0 %v227
    %314 = vmatpush.msra.mxu0 %v226
    %315 = vmatpush.msra.mxu0 %v225
    %316 = vmatmul.f32.gmra.mxu0 %v298
    %v317 = vpop.f32.mrf.mxu0
    %v318 = vadd.f32 0.0, %v317
    %319 = vdwg.mxu0
    %v320 = vadd.f32 %v296, %v318
    %v321 = vtanh.pop %v320
    %323 = vrot.lane.b32.xlu0 %v294, 32
    %v324 = vpop.permute.xlu0 %323
    %v326 = vsel %vm208, %v321, %v324
    %v328 = vsel %vm270, %v326, 0
    %330 = vmatpush.msra.mxu0 0.0
    %331 = vmatpush.msra.mxu0 0.0
    %332 = vmatpush.msra.mxu0 0.0
    %333 = vmatpush.msra.mxu0 0.0
    %334 = vmatpush.msra.mxu0 0.0
    %335 = vmatpush.msra.mxu0 0.0
    %336 = vmatpush.msra.mxu0 0.0
    %337 = vmatpush.msra.mxu0 0.0
    %338 = vmatpush.msra.mxu0 %v236
    %339 = vmatpush.msra.mxu0 %v235
    %340 = vmatpush.msra.mxu0 %v234
    %341 = vmatpush.msra.mxu0 %v233
    %342 = vmatpush.msra.mxu0 %v232
    %343 = vmatpush.msra.mxu0 %v231
    %344 = vmatpush.msra.mxu0 %v230
    %345 = vmatpush.msra.mxu0 %v229
    %346 = vmatmul.f32.gmra.mxu0 %v328
    %v347 = vpop.f32.mrf.mxu0
    %v348 = vadd.f32 %v268, %v347
    %349 = vdwg.mxu0
    %v350 = vtanh.pop %v348
    %351 = vst.msk [vmem:[#allocation3 + $0x10] sm:$0xff] %vm208, %v350
    %v352 = vld [vmem:[#allocation2 + $0x10] sm:$0xff]
    %v354 = vsel %vm208, %v321, 0
    %356 = vmatpush.msra.mxu0 0.0
    %357 = vmatpush.msra.mxu0 0.0
    %358 = vmatpush.msra.mxu0 0.0
    %359 = vmatpush.msra.mxu0 0.0
    %360 = vmatpush.msra.mxu0 0.0
    %361 = vmatpush.msra.mxu0 0.0
    %362 = vmatpush.msra.mxu0 0.0
    %363 = vmatpush.msra.mxu0 0.0
    %364 = vmatpush.msra.mxu0 0.0
    %365 = vmatpush.msra.mxu0 0.0
    %366 = vmatpush.msra.mxu0 0.0
    %367 = vmatpush.msra.mxu0 0.0
    %368 = vmatpush.msra.mxu0 %v228
    %369 = vmatpush.msra.mxu0 %v227
    %370 = vmatpush.msra.mxu0 %v226
    %371 = vmatpush.msra.mxu0 %v225
    %372 = vmatmul.f32.gmra.mxu0 %v354
    %v373 = vpop.f32.mrf.mxu0
    %v374 = vadd.f32 0.0, %v373
    %375 = vdwg.mxu0
    %v376 = vadd.f32 %v352, %v374
    %v377 = vtanh.pop %v376
    %379 = vrot.lane.b32.xlu0 %v350, 32
    %v380 = vpop.permute.xlu0 %379
    %v382 = vsel %vm208, %v377, %v380
    %v384 = vsel %vm270, %v382, 0
    %386 = vmatpush.msra.mxu0 0.0
    %387 = vmatpush.msra.mxu0 0.0
    %388 = vmatpush.msra.mxu0 0.0
    %389 = vmatpush.msra.mxu0 0.0
    %390 = vmatpush.msra.mxu0 0.0
    %391 = vmatpush.msra.mxu0 0.0
    %392 = vmatpush.msra.mxu0 0.0
    %393 = vmatpush.msra.mxu0 0.0
    %394 = vmatpush.msra.mxu0 %v236
    %395 = vmatpush.msra.mxu0 %v235
    %396 = vmatpush.msra.mxu0 %v234
    %397 = vmatpush.msra.mxu0 %v233
    %398 = vmatpush.msra.mxu0 %v232
    %399 = vmatpush.msra.mxu0 %v231
    %400 = vmatpush.msra.mxu0 %v230
    %401 = vmatpush.msra.mxu0 %v229
    %402 = vmatmul.f32.gmra.mxu0 %v384
    %v403 = vpop.f32.mrf.mxu0
    %v404 = vadd.f32 %v268, %v403
    %405 = vdwg.mxu0
    %v406 = vtanh.pop %v404
    %407 = vst.msk [vmem:[#allocation3 + $0x18] sm:$0xff] %vm208, %v406
    %v408 = vld [vmem:[#allocation2 + $0x18] sm:$0xff]
    %v410 = vsel %vm208, %v377, 0
    %412 = vmatpush.msra.mxu0 0.0
    %413 = vmatpush.msra.mxu0 0.0
    %414 = vmatpush.msra.mxu0 0.0
    %415 = vmatpush.msra.mxu0 0.0
    %416 = vmatpush.msra.mxu0 0.0
    %417 = vmatpush.msra.mxu0 0.0
    %418 = vmatpush.msra.mxu0 0.0
    %419 = vmatpush.msra.mxu0 0.0
    %420 = vmatpush.msra.mxu0 0.0
    %421 = vmatpush.msra.mxu0 0.0
    %422 = vmatpush.msra.mxu0 0.0
    %423 = vmatpush.msra.mxu0 0.0
    %424 = vmatpush.msra.mxu0 %v228
    %425 = vmatpush.msra.mxu0 %v227
    %426 = vmatpush.msra.mxu0 %v226
    %427 = vmatpush.msra.mxu0 %v225
    %428 = vmatmul.f32.gmra.mxu0 %v410
    %v429 = vpop.f32.mrf.mxu0
    %v430 = vadd.f32 0.0, %v429
    %431 = vdwg.mxu0
    %v432 = vadd.f32 %v408, %v430
    %v433 = vtanh.pop %v432
    %435 = vrot.lane.b32.xlu0 %v406, 32
    %v436 = vpop.permute.xlu0 %435
    %v438 = vsel %vm208, %v433, %v436
    %v440 = vsel %vm270, %v438, 0
    %442 = vmatpush.msra.mxu0 0.0
    %443 = vmatpush.msra.mxu0 0.0
    %444 = vmatpush.msra.mxu0 0.0
    %445 = vmatpush.msra.mxu0 0.0
    %446 = vmatpush.msra.mxu0 0.0
    %447 = vmatpush.msra.mxu0 0.0
    %448 = vmatpush.msra.mxu0 0.0
    %449 = vmatpush.msra.mxu0 0.0
    %450 = vmatpush.msra.mxu0 %v236
    %451 = vmatpush.msra.mxu0 %v235
    %452 = vmatpush.msra.mxu0 %v234
    %453 = vmatpush.msra.mxu0 %v233
    %454 = vmatpush.msra.mxu0 %v232
    %455 = vmatpush.msra.mxu0 %v231
    %456 = vmatpush.msra.mxu0 %v230
    %457 = vmatpush.msra.mxu0 %v229
    %458 = vmatmul.f32.gmra.mxu0 %v440
    %v459 = vpop.f32.mrf.mxu0
    %v460 = vadd.f32 %v268, %v459
    %461 = vdwg.mxu0
    %v462 = vtanh.pop %v460
    %463 = vst.msk [vmem:[#allocation3 + $0x20] sm:$0xff] %vm208, %v462
    %v464 = vld [vmem:[#allocation2 + $0x20] sm:$0xff]
    %v466 = vsel %vm208, %v433, 0
    %468 = vmatpush.msra.mxu0 0.0
    %469 = vmatpush.msra.mxu0 0.0
    %470 = vmatpush.msra.mxu0 0.0
    %471 = vmatpush.msra.mxu0 0.0
    %472 = vmatpush.msra.mxu0 0.0
    %473 = vmatpush.msra.mxu0 0.0
    %474 = vmatpush.msra.mxu0 0.0
    %475 = vmatpush.msra.mxu0 0.0
    %476 = vmatpush.msra.mxu0 0.0
    %477 = vmatpush.msra.mxu0 0.0
    %478 = vmatpush.msra.mxu0 0.0
    %479 = vmatpush.msra.mxu0 0.0
    %480 = vmatpush.msra.mxu0 %v228
    %481 = vmatpush.msra.mxu0 %v227
    %482 = vmatpush.msra.mxu0 %v226
    %483 = vmatpush.msra.mxu0 %v225
    %484 = vmatmul.f32.gmra.mxu0 %v466
    %v485 = vpop.f32.mrf.mxu0
    %v486 = vadd.f32 0.0, %v485
    %487 = vdwg.mxu0
    %v488 = vadd.f32 %v464, %v486
    %v489 = vtanh.pop %v488
    %491 = vrot.lane.b32.xlu0 %v462, 32
    %v492 = vpop.permute.xlu0 %491
    %v494 = vsel %vm208, %v489, %v492
    %v496 = vsel %vm270, %v494, 0
    %498 = vmatpush.msra.mxu0 0.0
    %499 = vmatpush.msra.mxu0 0.0
    %500 = vmatpush.msra.mxu0 0.0
    %501 = vmatpush.msra.mxu0 0.0
    %502 = vmatpush.msra.mxu0 0.0
    %503 = vmatpush.msra.mxu0 0.0
    %504 = vmatpush.msra.mxu0 0.0
    %505 = vmatpush.msra.mxu0 0.0
    %506 = vmatpush.msra.mxu0 %v236
    %507 = vmatpush.msra.mxu0 %v235
    %508 = vmatpush.msra.mxu0 %v234
    %509 = vmatpush.msra.mxu0 %v233
    %510 = vmatpush.msra.mxu0 %v232
    %511 = vmatpush.msra.mxu0 %v231
    %512 = vmatpush.msra.mxu0 %v230
    %513 = vmatpush.msra.mxu0 %v229
    %514 = vmatmul.f32.gmra.mxu0 %v496
    %v515 = vpop.f32.mrf.mxu0
    %v516 = vadd.f32 %v268, %v515
    %517 = vdwg.mxu0
    %v518 = vtanh.pop %v516
    %519 = vst.msk [vmem:[#allocation3 + $0x28] sm:$0xff] %vm208, %v518
    %v520 = vld [vmem:[#allocation2 + $0x28] sm:$0xff]
    %v522 = vsel %vm208, %v489, 0
    %524 = vmatpush.msra.mxu0 0.0
    %525 = vmatpush.msra.mxu0 0.0
    %526 = vmatpush.msra.mxu0 0.0
    %527 = vmatpush.msra.mxu0 0.0
    %528 = vmatpush.msra.mxu0 0.0
    %529 = vmatpush.msra.mxu0 0.0
    %530 = vmatpush.msra.mxu0 0.0
    %531 = vmatpush.msra.mxu0 0.0
    %532 = vmatpush.msra.mxu0 0.0
    %533 = vmatpush.msra.mxu0 0.0
    %534 = vmatpush.msra.mxu0 0.0
    %535 = vmatpush.msra.mxu0 0.0
    %536 = vmatpush.msra.mxu0 %v228
    %537 = vmatpush.msra.mxu0 %v227
    %538 = vmatpush.msra.mxu0 %v226
    %539 = vmatpush.msra.mxu0 %v225
    %540 = vmatmul.f32.gmra.mxu0 %v522
    %v541 = vpop.f32.mrf.mxu0
    %v542 = vadd.f32 0.0, %v541
    %543 = vdwg.mxu0
    %v544 = vadd.f32 %v520, %v542
    %v545 = vtanh.pop %v544
    %547 = vrot.lane.b32.xlu0 %v518, 32
    %v548 = vpop.permute.xlu0 %547
    %v550 = vsel %vm208, %v545, %v548
    %v552 = vsel %vm270, %v550, 0
    %554 = vmatpush.msra.mxu0 0.0
    %555 = vmatpush.msra.mxu0 0.0
    %556 = vmatpush.msra.mxu0 0.0
    %557 = vmatpush.msra.mxu0 0.0
    %558 = vmatpush.msra.mxu0 0.0
    %559 = vmatpush.msra.mxu0 0.0
    %560 = vmatpush.msra.mxu0 0.0
    %561 = vmatpush.msra.mxu0 0.0
    %562 = vmatpush.msra.mxu0 %v236
    %563 = vmatpush.msra.mxu0 %v235
    %564 = vmatpush.msra.mxu0 %v234
    %565 = vmatpush.msra.mxu0 %v233
    %566 = vmatpush.msra.mxu0 %v232
    %567 = vmatpush.msra.mxu0 %v231
    %568 = vmatpush.msra.mxu0 %v230
    %569 = vmatpush.msra.mxu0 %v229
    %570 = vmatmul.f32.gmra.mxu0 %v552
    %v571 = vpop.f32.mrf.mxu0
    %v572 = vadd.f32 %v268, %v571
    %573 = vdwg.mxu0
    %v574 = vtanh.pop %v572
    %575 = vst.msk [vmem:[#allocation3 + $0x30] sm:$0xff] %vm208, %v574
    %v576 = vld [vmem:[#allocation2 + $0x30] sm:$0xff]
    %v578 = vsel %vm208, %v545, 0
    %580 = vmatpush.msra.mxu0 0.0
    %581 = vmatpush.msra.mxu0 0.0
    %582 = vmatpush.msra.mxu0 0.0
    %583 = vmatpush.msra.mxu0 0.0
    %584 = vmatpush.msra.mxu0 0.0
    %585 = vmatpush.msra.mxu0 0.0
    %586 = vmatpush.msra.mxu0 0.0
    %587 = vmatpush.msra.mxu0 0.0
    %588 = vmatpush.msra.mxu0 0.0
    %589 = vmatpush.msra.mxu0 0.0
    %590 = vmatpush.msra.mxu0 0.0
    %591 = vmatpush.msra.mxu0 0.0
    %592 = vmatpush.msra.mxu0 %v228
    %593 = vmatpush.msra.mxu0 %v227
    %594 = vmatpush.msra.mxu0 %v226
    %595 = vmatpush.msra.mxu0 %v225
    %596 = vmatmul.f32.gmra.mxu0 %v578
    %v597 = vpop.f32.mrf.mxu0
    %v598 = vadd.f32 0.0, %v597
    %599 = vdwg.mxu0
    %v600 = vadd.f32 %v576, %v598
    %v601 = vtanh.pop %v600
    %603 = vrot.lane.b32.xlu0 %v574, 32
    %v604 = vpop.permute.xlu0 %603
    %v606 = vsel %vm208, %v601, %v604
    %v608 = vsel %vm270, %v606, 0
    %610 = vmatpush.msra.mxu0 0.0
    %611 = vmatpush.msra.mxu0 0.0
    %612 = vmatpush.msra.mxu0 0.0
    %613 = vmatpush.msra.mxu0 0.0
    %614 = vmatpush.msra.mxu0 0.0
    %615 = vmatpush.msra.mxu0 0.0
    %616 = vmatpush.msra.mxu0 0.0
    %617 = vmatpush.msra.mxu0 0.0
    %618 = vmatpush.msra.mxu0 %v236
    %619 = vmatpush.msra.mxu0 %v235
    %620 = vmatpush.msra.mxu0 %v234
    %621 = vmatpush.msra.mxu0 %v233
    %622 = vmatpush.msra.mxu0 %v232
    %623 = vmatpush.msra.mxu0 %v231
    %624 = vmatpush.msra.mxu0 %v230
    %625 = vmatpush.msra.mxu0 %v229
    %626 = vmatmul.f32.gmra.mxu0 %v608
    %v627 = vpop.f32.mrf.mxu0
    %v628 = vadd.f32 %v268, %v627
    %629 = vdwg.mxu0
    %v630 = vtanh.pop %v628
    %631 = vst.msk [vmem:[#allocation3 + $0x38] sm:$0xff] %vm208, %v630
    %v632 = vld [vmem:[#allocation2 + $0x38] sm:$0xff]
    %v634 = vsel %vm208, %v601, 0
    %636 = vmatpush.msra.mxu0 0.0
    %637 = vmatpush.msra.mxu0 0.0
    %638 = vmatpush.msra.mxu0 0.0
    %639 = vmatpush.msra.mxu0 0.0
    %640 = vmatpush.msra.mxu0 0.0
    %641 = vmatpush.msra.mxu0 0.0
    %642 = vmatpush.msra.mxu0 0.0
    %643 = vmatpush.msra.mxu0 0.0
    %644 = vmatpush.msra.mxu0 0.0
    %645 = vmatpush.msra.mxu0 0.0
    %646 = vmatpush.msra.mxu0 0.0
    %647 = vmatpush.msra.mxu0 0.0
    %648 = vmatpush.msra.mxu0 %v228
    %649 = vmatpush.msra.mxu0 %v227
    %650 = vmatpush.msra.mxu0 %v226
    %651 = vmatpush.msra.mxu0 %v225
    %652 = vmatmul.f32.gmra.mxu0 %v634
    %v653 = vpop.f32.mrf.mxu0
    %v654 = vadd.f32 0.0, %v653
    %655 = vdwg.mxu0
    %v656 = vadd.f32 %v632, %v654
    %v657 = vtanh.pop %v656
    %659 = vrot.lane.b32.xlu0 %v630, 32
    %v660 = vpop.permute.xlu0 %659
    %v662 = vsel %vm208, %v657, %v660
    %v664 = vsel %vm270, %v662, 0
    %666 = vmatpush.msra.mxu0 0.0
    %667 = vmatpush.msra.mxu0 0.0
    %668 = vmatpush.msra.mxu0 0.0
    %669 = vmatpush.msra.mxu0 0.0
    %670 = vmatpush.msra.mxu0 0.0
    %671 = vmatpush.msra.mxu0 0.0
    %672 = vmatpush.msra.mxu0 0.0
    %673 = vmatpush.msra.mxu0 0.0
    %674 = vmatpush.msra.mxu0 %v236
    %675 = vmatpush.msra.mxu0 %v235
    %676 = vmatpush.msra.mxu0 %v234
    %677 = vmatpush.msra.mxu0 %v233
    %678 = vmatpush.msra.mxu0 %v232
    %679 = vmatpush.msra.mxu0 %v231
    %680 = vmatpush.msra.mxu0 %v230
    %681 = vmatpush.msra.mxu0 %v229
    %682 = vmatmul.f32.gmra.mxu0 %v664
    %v683 = vpop.f32.mrf.mxu0
    %v684 = vadd.f32 %v268, %v683
    %685 = vdwg.mxu0
    %v686 = vtanh.pop %v684
    %687 = vst.msk [vmem:[#allocation3 + $0x40] sm:$0xff] %vm208, %v686
    %v688 = vld [vmem:[#allocation2 + $0x40] sm:$0xff]
    %v690 = vsel %vm208, %v657, 0
    %692 = vmatpush.msra.mxu0 0.0
    %693 = vmatpush.msra.mxu0 0.0
    %694 = vmatpush.msra.mxu0 0.0
    %695 = vmatpush.msra.mxu0 0.0
    %696 = vmatpush.msra.mxu0 0.0
    %697 = vmatpush.msra.mxu0 0.0
    %698 = vmatpush.msra.mxu0 0.0
    %699 = vmatpush.msra.mxu0 0.0
    %700 = vmatpush.msra.mxu0 0.0
    %701 = vmatpush.msra.mxu0 0.0
    %702 = vmatpush.msra.mxu0 0.0
    %703 = vmatpush.msra.mxu0 0.0
    %704 = vmatpush.msra.mxu0 %v228
    %705 = vmatpush.msra.mxu0 %v227
    %706 = vmatpush.msra.mxu0 %v226
    %707 = vmatpush.msra.mxu0 %v225
    %708 = vmatmul.f32.gmra.mxu0 %v690
    %v709 = vpop.f32.mrf.mxu0
    %v710 = vadd.f32 0.0, %v709
    %711 = vdwg.mxu0
    %v712 = vadd.f32 %v688, %v710
    %v713 = vtanh.pop %v712
    %715 = vrot.lane.b32.xlu0 %v686, 32
    %v716 = vpop.permute.xlu0 %715
    %v718 = vsel %vm208, %v713, %v716
    %v720 = vsel %vm270, %v718, 0
    %722 = vmatpush.msra.mxu0 0.0
    %723 = vmatpush.msra.mxu0 0.0
    %724 = vmatpush.msra.mxu0 0.0
    %725 = vmatpush.msra.mxu0 0.0
    %726 = vmatpush.msra.mxu0 0.0
    %727 = vmatpush.msra.mxu0 0.0
    %728 = vmatpush.msra.mxu0 0.0
    %729 = vmatpush.msra.mxu0 0.0
    %730 = vmatpush.msra.mxu0 %v236
    %731 = vmatpush.msra.mxu0 %v235
    %732 = vmatpush.msra.mxu0 %v234
    %733 = vmatpush.msra.mxu0 %v233
    %734 = vmatpush.msra.mxu0 %v232
    %735 = vmatpush.msra.mxu0 %v231
    %736 = vmatpush.msra.mxu0 %v230
    %737 = vmatpush.msra.mxu0 %v229
    %738 = vmatmul.f32.gmra.mxu0 %v720
    %v739 = vpop.f32.mrf.mxu0
    %v740 = vadd.f32 %v268, %v739
    %741 = vdwg.mxu0
    %v742 = vtanh.pop %v740
    %743 = vst.msk [vmem:[#allocation3 + $0x48] sm:$0xff] %vm208, %v742
    %v744 = vld [vmem:[#allocation2 + $0x48] sm:$0xff]
    %v746 = vsel %vm208, %v713, 0
    %748 = vmatpush.msra.mxu0 0.0
    %749 = vmatpush.msra.mxu0 0.0
    %750 = vmatpush.msra.mxu0 0.0
    %751 = vmatpush.msra.mxu0 0.0
    %752 = vmatpush.msra.mxu0 0.0
    %753 = vmatpush.msra.mxu0 0.0
    %754 = vmatpush.msra.mxu0 0.0
    %755 = vmatpush.msra.mxu0 0.0
    %756 = vmatpush.msra.mxu0 0.0
    %757 = vmatpush.msra.mxu0 0.0
    %758 = vmatpush.msra.mxu0 0.0
    %759 = vmatpush.msra.mxu0 0.0
    %760 = vmatpush.msra.mxu0 %v228
    %761 = vmatpush.msra.mxu0 %v227
    %762 = vmatpush.msra.mxu0 %v226
    %763 = vmatpush.msra.mxu0 %v225
    %764 = vmatmul.f32.gmra.mxu0 %v746
    %v765 = vpop.f32.mrf.mxu0
    %v766 = vadd.f32 0.0, %v765
    %767 = vdwg.mxu0
    %v768 = vadd.f32 %v744, %v766
    %v769 = vtanh.pop %v768
    %771 = vrot.lane.b32.xlu0 %v742, 32
    %v772 = vpop.permute.xlu0 %771
    %v774 = vsel %vm208, %v769, %v772
    %v776 = vsel %vm270, %v774, 0
    %778 = vmatpush.msra.mxu0 0.0
    %779 = vmatpush.msra.mxu0 0.0
    %780 = vmatpush.msra.mxu0 0.0
    %781 = vmatpush.msra.mxu0 0.0
    %782 = vmatpush.msra.mxu0 0.0
    %783 = vmatpush.msra.mxu0 0.0
    %784 = vmatpush.msra.mxu0 0.0
    %785 = vmatpush.msra.mxu0 0.0
    %786 = vmatpush.msra.mxu0 %v236
    %787 = vmatpush.msra.mxu0 %v235
    %788 = vmatpush.msra.mxu0 %v234
    %789 = vmatpush.msra.mxu0 %v233
    %790 = vmatpush.msra.mxu0 %v232
    %791 = vmatpush.msra.mxu0 %v231
    %792 = vmatpush.msra.mxu0 %v230
    %793 = vmatpush.msra.mxu0 %v229
    %794 = vmatmul.f32.gmra.mxu0 %v776
    %v795 = vpop.f32.mrf.mxu0
    %v796 = vadd.f32 %v268, %v795
    %797 = vdwg.mxu0
    %v798 = vtanh.pop %v796
    %799 = vst.msk [vmem:[#allocation3 + $0x50] sm:$0xff] %vm208, %v798
    %v800 = vld [vmem:[#allocation2 + $0x50] sm:$0xff]
    %v802 = vsel %vm208, %v769, 0
    %804 = vmatpush.msra.mxu0 0.0
    %805 = vmatpush.msra.mxu0 0.0
    %806 = vmatpush.msra.mxu0 0.0
    %807 = vmatpush.msra.mxu0 0.0
    %808 = vmatpush.msra.mxu0 0.0
    %809 = vmatpush.msra.mxu0 0.0
    %810 = vmatpush.msra.mxu0 0.0
    %811 = vmatpush.msra.mxu0 0.0
    %812 = vmatpush.msra.mxu0 0.0
    %813 = vmatpush.msra.mxu0 0.0
    %814 = vmatpush.msra.mxu0 0.0
    %815 = vmatpush.msra.mxu0 0.0
    %816 = vmatpush.msra.mxu0 %v228
    %817 = vmatpush.msra.mxu0 %v227
    %818 = vmatpush.msra.mxu0 %v226
    %819 = vmatpush.msra.mxu0 %v225
    %820 = vmatmul.f32.gmra.mxu0 %v802
    %v821 = vpop.f32.mrf.mxu0
    %v822 = vadd.f32 0.0, %v821
    %823 = vdwg.mxu0
    %v824 = vadd.f32 %v800, %v822
    %v825 = vtanh.pop %v824
    %827 = vrot.lane.b32.xlu0 %v798, 32
    %v828 = vpop.permute.xlu0 %827
    %v830 = vsel %vm208, %v825, %v828
    %v832 = vsel %vm270, %v830, 0
    %834 = vmatpush.msra.mxu0 0.0
    %835 = vmatpush.msra.mxu0 0.0
    %836 = vmatpush.msra.mxu0 0.0
    %837 = vmatpush.msra.mxu0 0.0
    %838 = vmatpush.msra.mxu0 0.0
    %839 = vmatpush.msra.mxu0 0.0
    %840 = vmatpush.msra.mxu0 0.0
    %841 = vmatpush.msra.mxu0 0.0
    %842 = vmatpush.msra.mxu0 %v236
    %843 = vmatpush.msra.mxu0 %v235
    %844 = vmatpush.msra.mxu0 %v234
    %845 = vmatpush.msra.mxu0 %v233
    %846 = vmatpush.msra.mxu0 %v232
    %847 = vmatpush.msra.mxu0 %v231
    %848 = vmatpush.msra.mxu0 %v230
    %849 = vmatpush.msra.mxu0 %v229
    %850 = vmatmul.f32.gmra.mxu0 %v832
    %v851 = vpop.f32.mrf.mxu0
    %v852 = vadd.f32 %v268, %v851
    %853 = vdwg.mxu0
    %v854 = vtanh.pop %v852
    %855 = vst.msk [vmem:[#allocation3 + $0x58] sm:$0xff] %vm208, %v854
    %v856 = vld [vmem:[#allocation2 + $0x58] sm:$0xff]
    %v858 = vsel %vm208, %v825, 0
    %860 = vmatpush.msra.mxu0 0.0
    %861 = vmatpush.msra.mxu0 0.0
    %862 = vmatpush.msra.mxu0 0.0
    %863 = vmatpush.msra.mxu0 0.0
    %864 = vmatpush.msra.mxu0 0.0
    %865 = vmatpush.msra.mxu0 0.0
    %866 = vmatpush.msra.mxu0 0.0
    %867 = vmatpush.msra.mxu0 0.0
    %868 = vmatpush.msra.mxu0 0.0
    %869 = vmatpush.msra.mxu0 0.0
    %870 = vmatpush.msra.mxu0 0.0
    %871 = vmatpush.msra.mxu0 0.0
    %872 = vmatpush.msra.mxu0 %v228
    %873 = vmatpush.msra.mxu0 %v227
    %874 = vmatpush.msra.mxu0 %v226
    %875 = vmatpush.msra.mxu0 %v225
    %876 = vmatmul.f32.gmra.mxu0 %v858
    %v877 = vpop.f32.mrf.mxu0
    %v878 = vadd.f32 0.0, %v877
    %879 = vdwg.mxu0
    %v880 = vadd.f32 %v856, %v878
    %v881 = vtanh.pop %v880
    %883 = vrot.lane.b32.xlu0 %v854, 32
    %v884 = vpop.permute.xlu0 %883
    %v886 = vsel %vm208, %v881, %v884
    %v888 = vsel %vm270, %v886, 0
    %890 = vmatpush.msra.mxu0 0.0
    %891 = vmatpush.msra.mxu0 0.0
    %892 = vmatpush.msra.mxu0 0.0
    %893 = vmatpush.msra.mxu0 0.0
    %894 = vmatpush.msra.mxu0 0.0
    %895 = vmatpush.msra.mxu0 0.0
    %896 = vmatpush.msra.mxu0 0.0
    %897 = vmatpush.msra.mxu0 0.0
    %898 = vmatpush.msra.mxu0 %v236
    %899 = vmatpush.msra.mxu0 %v235
    %900 = vmatpush.msra.mxu0 %v234
    %901 = vmatpush.msra.mxu0 %v233
    %902 = vmatpush.msra.mxu0 %v232
    %903 = vmatpush.msra.mxu0 %v231
    %904 = vmatpush.msra.mxu0 %v230
    %905 = vmatpush.msra.mxu0 %v229
    %906 = vmatmul.f32.gmra.mxu0 %v888
    %v907 = vpop.f32.mrf.mxu0
    %v908 = vadd.f32 %v268, %v907
    %909 = vdwg.mxu0
    %v910 = vtanh.pop %v908
    %911 = vst.msk [vmem:[#allocation3 + $0x60] sm:$0xff] %vm208, %v910
    %v912 = vld [vmem:[#allocation2 + $0x60] sm:$0xff]
    %v914 = vsel %vm208, %v881, 0
    %916 = vmatpush.msra.mxu0 0.0
    %917 = vmatpush.msra.mxu0 0.0
    %918 = vmatpush.msra.mxu0 0.0
    %919 = vmatpush.msra.mxu0 0.0
    %920 = vmatpush.msra.mxu0 0.0
    %921 = vmatpush.msra.mxu0 0.0
    %922 = vmatpush.msra.mxu0 0.0
    %923 = vmatpush.msra.mxu0 0.0
    %924 = vmatpush.msra.mxu0 0.0
    %925 = vmatpush.msra.mxu0 0.0
    %926 = vmatpush.msra.mxu0 0.0
    %927 = vmatpush.msra.mxu0 0.0
    %928 = vmatpush.msra.mxu0 %v228
    %929 = vmatpush.msra.mxu0 %v227
    %930 = vmatpush.msra.mxu0 %v226
    %931 = vmatpush.msra.mxu0 %v225
    %932 = vmatmul.f32.gmra.mxu0 %v914
    %v933 = vpop.f32.mrf.mxu0
    %v934 = vadd.f32 0.0, %v933
    %935 = vdwg.mxu0
    %v936 = vadd.f32 %v912, %v934
    %v937 = vtanh.pop %v936
    %939 = vrot.lane.b32.xlu0 %v910, 32
    %v940 = vpop.permute.xlu0 %939
    %v942 = vsel %vm208, %v937, %v940
    %v944 = vsel %vm270, %v942, 0
    %946 = vmatpush.msra.mxu0 0.0
    %947 = vmatpush.msra.mxu0 0.0
    %948 = vmatpush.msra.mxu0 0.0
    %949 = vmatpush.msra.mxu0 0.0
    %950 = vmatpush.msra.mxu0 0.0
    %951 = vmatpush.msra.mxu0 0.0
    %952 = vmatpush.msra.mxu0 0.0
    %953 = vmatpush.msra.mxu0 0.0
    %954 = vmatpush.msra.mxu0 %v236
    %955 = vmatpush.msra.mxu0 %v235
    %956 = vmatpush.msra.mxu0 %v234
    %957 = vmatpush.msra.mxu0 %v233
    %958 = vmatpush.msra.mxu0 %v232
    %959 = vmatpush.msra.mxu0 %v231
    %960 = vmatpush.msra.mxu0 %v230
    %961 = vmatpush.msra.mxu0 %v229
    %962 = vmatmul.f32.gmra.mxu0 %v944
    %v963 = vpop.f32.mrf.mxu0
    %v964 = vadd.f32 %v268, %v963
    %965 = vdwg.mxu0
    %v966 = vtanh.pop %v964
    %967 = vst.msk [vmem:[#allocation3 + $0x68] sm:$0xff] %vm208, %v966
    %v968 = vld [vmem:[#allocation2 + $0x68] sm:$0xff]
    %v970 = vsel %vm208, %v937, 0
    %972 = vmatpush.msra.mxu0 0.0
    %973 = vmatpush.msra.mxu0 0.0
    %974 = vmatpush.msra.mxu0 0.0
    %975 = vmatpush.msra.mxu0 0.0
    %976 = vmatpush.msra.mxu0 0.0
    %977 = vmatpush.msra.mxu0 0.0
    %978 = vmatpush.msra.mxu0 0.0
    %979 = vmatpush.msra.mxu0 0.0
    %980 = vmatpush.msra.mxu0 0.0
    %981 = vmatpush.msra.mxu0 0.0
    %982 = vmatpush.msra.mxu0 0.0
    %983 = vmatpush.msra.mxu0 0.0
    %984 = vmatpush.msra.mxu0 %v228
    %985 = vmatpush.msra.mxu0 %v227
    %986 = vmatpush.msra.mxu0 %v226
    %987 = vmatpush.msra.mxu0 %v225
    %988 = vmatmul.f32.gmra.mxu0 %v970
    %v989 = vpop.f32.mrf.mxu0
    %v990 = vadd.f32 0.0, %v989
    %991 = vdwg.mxu0
    %v992 = vadd.f32 %v968, %v990
    %v993 = vtanh.pop %v992
    %995 = vrot.lane.b32.xlu0 %v966, 32
    %v996 = vpop.permute.xlu0 %995
    %v998 = vsel %vm208, %v993, %v996
    %v1000 = vsel %vm270, %v998, 0
    %1002 = vmatpush.msra.mxu0 0.0
    %1003 = vmatpush.msra.mxu0 0.0
    %1004 = vmatpush.msra.mxu0 0.0
    %1005 = vmatpush.msra.mxu0 0.0
    %1006 = vmatpush.msra.mxu0 0.0
    %1007 = vmatpush.msra.mxu0 0.0
    %1008 = vmatpush.msra.mxu0 0.0
    %1009 = vmatpush.msra.mxu0 0.0
    %1010 = vmatpush.msra.mxu0 %v236
    %1011 = vmatpush.msra.mxu0 %v235
    %1012 = vmatpush.msra.mxu0 %v234
    %1013 = vmatpush.msra.mxu0 %v233
    %1014 = vmatpush.msra.mxu0 %v232
    %1015 = vmatpush.msra.mxu0 %v231
    %1016 = vmatpush.msra.mxu0 %v230
    %1017 = vmatpush.msra.mxu0 %v229
    %1018 = vmatmul.f32.gmra.mxu0 %v1000
    %v1019 = vpop.f32.mrf.mxu0
    %v1020 = vadd.f32 %v268, %v1019
    %1021 = vdwg.mxu0
    %v1022 = vtanh.pop %v1020
    %1023 = vst.msk [vmem:[#allocation3 + $0x70] sm:$0xff] %vm208, %v1022
    %v1024 = vld [vmem:[#allocation2 + $0x70] sm:$0xff]
    %v1026 = vsel %vm208, %v993, 0
    %1028 = vmatpush.msra.mxu0 0.0
    %1029 = vmatpush.msra.mxu0 0.0
    %1030 = vmatpush.msra.mxu0 0.0
    %1031 = vmatpush.msra.mxu0 0.0
    %1032 = vmatpush.msra.mxu0 0.0
    %1033 = vmatpush.msra.mxu0 0.0
    %1034 = vmatpush.msra.mxu0 0.0
    %1035 = vmatpush.msra.mxu0 0.0
    %1036 = vmatpush.msra.mxu0 0.0
    %1037 = vmatpush.msra.mxu0 0.0
    %1038 = vmatpush.msra.mxu0 0.0
    %1039 = vmatpush.msra.mxu0 0.0
    %1040 = vmatpush.msra.mxu0 %v228
    %1041 = vmatpush.msra.mxu0 %v227
    %1042 = vmatpush.msra.mxu0 %v226
    %1043 = vmatpush.msra.mxu0 %v225
    %1044 = vmatmul.f32.gmra.mxu0 %v1026
    %v1045 = vpop.f32.mrf.mxu0
    %v1046 = vadd.f32 0.0, %v1045
    %1047 = vdwg.mxu0
    %v1048 = vadd.f32 %v1024, %v1046
    %v1049 = vtanh.pop %v1048
    %1051 = vrot.lane.b32.xlu0 %v1022, 32
    %v1052 = vpop.permute.xlu0 %1051
    %v1054 = vsel %vm208, %v1049, %v1052
    %v1056 = vsel %vm270, %v1054, 0
    %1058 = vmatpush.msra.mxu0 0.0
    %1059 = vmatpush.msra.mxu0 0.0
    %1060 = vmatpush.msra.mxu0 0.0
    %1061 = vmatpush.msra.mxu0 0.0
    %1062 = vmatpush.msra.mxu0 0.0
    %1063 = vmatpush.msra.mxu0 0.0
    %1064 = vmatpush.msra.mxu0 0.0
    %1065 = vmatpush.msra.mxu0 0.0
    %1066 = vmatpush.msra.mxu0 %v236
    %1067 = vmatpush.msra.mxu0 %v235
    %1068 = vmatpush.msra.mxu0 %v234
    %1069 = vmatpush.msra.mxu0 %v233
    %1070 = vmatpush.msra.mxu0 %v232
    %1071 = vmatpush.msra.mxu0 %v231
    %1072 = vmatpush.msra.mxu0 %v230
    %1073 = vmatpush.msra.mxu0 %v229
    %1074 = vmatmul.f32.gmra.mxu0 %v1056
    %v1075 = vpop.f32.mrf.mxu0
    %v1076 = vadd.f32 %v268, %v1075
    %1077 = vdwg.mxu0
    %v1078 = vtanh.pop %v1076
    %1079 = vst.msk [vmem:[#allocation3 + $0x78] sm:$0xff] %vm208, %v1078
    %v1080 = vld [vmem:[#allocation2 + $0x78] sm:$0xff]
    %v1082 = vsel %vm208, %v1049, 0
    %1084 = vmatpush.msra.mxu0 0.0
    %1085 = vmatpush.msra.mxu0 0.0
    %1086 = vmatpush.msra.mxu0 0.0
    %1087 = vmatpush.msra.mxu0 0.0
    %1088 = vmatpush.msra.mxu0 0.0
    %1089 = vmatpush.msra.mxu0 0.0
    %1090 = vmatpush.msra.mxu0 0.0
    %1091 = vmatpush.msra.mxu0 0.0
    %1092 = vmatpush.msra.mxu0 0.0
    %1093 = vmatpush.msra.mxu0 0.0
    %1094 = vmatpush.msra.mxu0 0.0
    %1095 = vmatpush.msra.mxu0 0.0
    %1096 = vmatpush.msra.mxu0 %v228
    %1097 = vmatpush.msra.mxu0 %v227
    %1098 = vmatpush.msra.mxu0 %v226
    %1099 = vmatpush.msra.mxu0 %v225
    %1100 = vmatmul.f32.gmra.mxu0 %v1082
    %v1101 = vpop.f32.mrf.mxu0
    %v1102 = vadd.f32 0.0, %v1101
    %1103 = vdwg.mxu0
    %v1104 = vadd.f32 %v1080, %v1102
    %v1105 = vtanh.pop %v1104
    %1107 = vrot.lane.b32.xlu0 %v1078, 32
    %v1108 = vpop.permute.xlu0 %1107
    %v1110 = vsel %vm208, %v1105, %v1108
    %v1112 = vsel %vm270, %v1110, 0
    %1114 = vmatpush.msra.mxu0 0.0
    %1115 = vmatpush.msra.mxu0 0.0
    %1116 = vmatpush.msra.mxu0 0.0
    %1117 = vmatpush.msra.mxu0 0.0
    %1118 = vmatpush.msra.mxu0 0.0
    %1119 = vmatpush.msra.mxu0 0.0
    %1120 = vmatpush.msra.mxu0 0.0
    %1121 = vmatpush.msra.mxu0 0.0
    %1122 = vmatpush.msra.mxu0 %v236
    %1123 = vmatpush.msra.mxu0 %v235
    %1124 = vmatpush.msra.mxu0 %v234
    %1125 = vmatpush.msra.mxu0 %v233
    %1126 = vmatpush.msra.mxu0 %v232
    %1127 = vmatpush.msra.mxu0 %v231
    %1128 = vmatpush.msra.mxu0 %v230
    %1129 = vmatpush.msra.mxu0 %v229
    %1130 = vmatmul.f32.gmra.mxu0 %v1112
    %v1131 = vpop.f32.mrf.mxu0
    %v1132 = vadd.f32 %v268, %v1131
    %1133 = vdwg.mxu0
    %v1134 = vtanh.pop %v1132
    %1135 = vst.msk [vmem:[#allocation3 + $0x80] sm:$0xff] %vm208, %v1134
    %v1136 = vld [vmem:[%s14] sm:$0xff]
    %v1137 = vld [vmem:[%s14 + $0x8] sm:$0xff]
    %v1138 = vld [vmem:[%s14 + $0x10] sm:$0xff]
    %v1139 = vld [vmem:[%s14 + $0x18] sm:$0xff]
    %v1140 = vld [vmem:[%s14 + $0x20] sm:$0xff]
    %v1141 = vld [vmem:[%s14 + $0x28] sm:$0xff]
    %v1142 = vld [vmem:[%s14 + $0x30] sm:$0xff]
    %v1143 = vld [vmem:[%s14 + $0x38] sm:$0xff]
    %v1144 = vld [vmem:[%s14 + $0x40] sm:$0xff]
    %v1145 = vld [vmem:[%s14 + $0x48] sm:$0xff]
    %v1146 = vld [vmem:[%s14 + $0x50] sm:$0xff]
    %v1147 = vld [vmem:[%s14 + $0x58] sm:$0xff]
    %v1148 = vld [vmem:[%s14 + $0x60] sm:$0xff]
    %v1149 = vld [vmem:[%s14 + $0x68] sm:$0xff]
    %v1150 = vld [vmem:[%s14 + $0x70] sm:$0xff]
    %v1151 = vld [vmem:[%s14 + $0x78] sm:$0xff]
    %v1152 = vld [vmem:[#allocation3] sm:$0xff]
    %v1153 = vld [vmem:[#allocation3 + $0x8] sm:$0xff]
    %v1154 = vld [vmem:[#allocation3 + $0x10] sm:$0xff]
    %v1155 = vld [vmem:[#allocation3 + $0x18] sm:$0xff]
    %v1156 = vld [vmem:[#allocation3 + $0x20] sm:$0xff]
    %v1157 = vld [vmem:[#allocation3 + $0x28] sm:$0xff]
    %v1158 = vld [vmem:[#allocation3 + $0x30] sm:$0xff]
    %v1159 = vld [vmem:[#allocation3 + $0x38] sm:$0xff]
    %v1160 = vld [vmem:[#allocation3 + $0x40] sm:$0xff]
    %v1161 = vld [vmem:[#allocation3 + $0x48] sm:$0xff]
    %v1162 = vld [vmem:[#allocation3 + $0x50] sm:$0xff]
    %v1163 = vld [vmem:[#allocation3 + $0x58] sm:$0xff]
    %v1164 = vld [vmem:[#allocation3 + $0x60] sm:$0xff]
    %v1165 = vld [vmem:[#allocation3 + $0x68] sm:$0xff]
    %v1166 = vld [vmem:[#allocation3 + $0x70] sm:$0xff]
    %v1167 = vld [vmem:[#allocation3 + $0x78] sm:$0xff]
    %v1168 = vld [vmem:[#allocation3 + $0x80] sm:$0xff]
    %v1169 = vld [vmem:[#allocation3 + $0x88] sm:$0xff]
    %1186 = vrot.lane.b32.xlu0 %v1153, 32
    %v1187 = vpop.permute.xlu0 %1186
    %1188 = vrot.lane.b32.xlu0 %v1154, 32
    %v1189 = vpop.permute.xlu0 %1188
    %1190 = vrot.lane.b32.xlu0 %v1155, 32
    %v1191 = vpop.permute.xlu0 %1190
    %1192 = vrot.lane.b32.xlu0 %v1156, 32
    %v1193 = vpop.permute.xlu0 %1192
    %1194 = vrot.lane.b32.xlu0 %v1157, 32
    %v1195 = vpop.permute.xlu0 %1194
    %1196 = vrot.lane.b32.xlu0 %v1158, 32
    %v1197 = vpop.permute.xlu0 %1196
    %1198 = vrot.lane.b32.xlu0 %v1159, 32
    %v1199 = vpop.permute.xlu0 %1198
    %1200 = vrot.lane.b32.xlu0 %v1160, 32
    %v1201 = vpop.permute.xlu0 %1200
    %1202 = vrot.lane.b32.xlu0 %v1161, 32
    %v1203 = vpop.permute.xlu0 %1202
    %1204 = vrot.lane.b32.xlu0 %v1162, 32
    %v1205 = vpop.permute.xlu0 %1204
    %1206 = vrot.lane.b32.xlu0 %v1163, 32
    %v1207 = vpop.permute.xlu0 %1206
    %1208 = vrot.lane.b32.xlu0 %v1164, 32
    %v1209 = vpop.permute.xlu0 %1208
    %1210 = vrot.lane.b32.xlu0 %v1165, 32
    %v1211 = vpop.permute.xlu0 %1210
    %1212 = vrot.lane.b32.xlu0 %v1166, 32
    %v1213 = vpop.permute.xlu0 %1212
    %1214 = vrot.lane.b32.xlu0 %v1167, 32
    %v1215 = vpop.permute.xlu0 %1214
    %1216 = vrot.lane.b32.xlu0 %v1168, 32
    %v1217 = vpop.permute.xlu0 %1216
    %1235 = vrot.lane.b32.xlu0 %v1154, 64
    %v1236 = vpop.permute.xlu0 %1235
    %1237 = vrot.lane.b32.xlu0 %v1155, 64
    %v1238 = vpop.permute.xlu0 %1237
    %1239 = vrot.lane.b32.xlu0 %v1156, 64
    %v1240 = vpop.permute.xlu0 %1239
    %1241 = vrot.lane.b32.xlu0 %v1157, 64
    %v1242 = vpop.permute.xlu0 %1241
    %1243 = vrot.lane.b32.xlu0 %v1158, 64
    %v1244 = vpop.permute.xlu0 %1243
    %1245 = vrot.lane.b32.xlu0 %v1159, 64
    %v1246 = vpop.permute.xlu0 %1245
    %1247 = vrot.lane.b32.xlu0 %v1160, 64
    %v1248 = vpop.permute.xlu0 %1247
    %1249 = vrot.lane.b32.xlu0 %v1161, 64
    %v1250 = vpop.permute.xlu0 %1249
    %1251 = vrot.lane.b32.xlu0 %v1162, 64
    %v1252 = vpop.permute.xlu0 %1251
    %1253 = vrot.lane.b32.xlu0 %v1163, 64
    %v1254 = vpop.permute.xlu0 %1253
    %1255 = vrot.lane.b32.xlu0 %v1164, 64
    %v1256 = vpop.permute.xlu0 %1255
    %1257 = vrot.lane.b32.xlu0 %v1165, 64
    %v1258 = vpop.permute.xlu0 %1257
    %1259 = vrot.lane.b32.xlu0 %v1166, 64
    %v1260 = vpop.permute.xlu0 %1259
    %1261 = vrot.lane.b32.xlu0 %v1167, 64
    %v1262 = vpop.permute.xlu0 %1261
    %1263 = vrot.lane.b32.xlu0 %v1168, 64
    %v1264 = vpop.permute.xlu0 %1263
    %1265 = vrot.lane.b32.xlu0 %v1169, 64
    %v1266 = vpop.permute.xlu0 %1265
    %v1283 = vsel %vm208, %v1152, %v1187
    %v1284 = vsel %vm208, %v1153, %v1189
    %v1285 = vsel %vm208, %v1154, %v1191
    %v1286 = vsel %vm208, %v1155, %v1193
    %v1287 = vsel %vm208, %v1156, %v1195
    %v1288 = vsel %vm208, %v1157, %v1197
    %v1289 = vsel %vm208, %v1158, %v1199
    %v1290 = vsel %vm208, %v1159, %v1201
    %v1291 = vsel %vm208, %v1160, %v1203
    %v1292 = vsel %vm208, %v1161, %v1205
    %v1293 = vsel %vm208, %v1162, %v1207
    %v1294 = vsel %vm208, %v1163, %v1209
    %v1295 = vsel %vm208, %v1164, %v1211
    %v1296 = vsel %vm208, %v1165, %v1213
    %v1297 = vsel %vm208, %v1166, %v1215
    %v1298 = vsel %vm208, %v1167, %v1217
    %v1299 = vsel %vm270, %v1283, %v1236
    %v1300 = vsel %vm270, %v1284, %v1238
    %v1301 = vsel %vm270, %v1285, %v1240
    %v1302 = vsel %vm270, %v1286, %v1242
    %v1303 = vsel %vm270, %v1287, %v1244
    %v1304 = vsel %vm270, %v1288, %v1246
    %v1305 = vsel %vm270, %v1289, %v1248
    %v1306 = vsel %vm270, %v1290, %v1250
    %v1307 = vsel %vm270, %v1291, %v1252
    %v1308 = vsel %vm270, %v1292, %v1254
    %v1309 = vsel %vm270, %v1293, %v1256
    %v1310 = vsel %vm270, %v1294, %v1258
    %v1311 = vsel %vm270, %v1295, %v1260
    %v1312 = vsel %vm270, %v1296, %v1262
    %v1313 = vsel %vm270, %v1297, %v1264
    %v1314 = vsel %vm270, %v1298, %v1266
    %v1315 = vld [vmem:[%s6] sm:$0xff]
    %v1316 = vld [vmem:[%s6 + $0x8] sm:$0xff]
    %v1317 = vld [vmem:[%s6 + $0x10] sm:$0xff]
    %v1318 = vld [vmem:[%s6 + $0x18] sm:$0xff]
    %v1319 = vld [vmem:[%s6 + $0x20] sm:$0xff]
    %v1320 = vld [vmem:[%s6 + $0x28] sm:$0xff]
    %v1321 = vld [vmem:[%s6 + $0x30] sm:$0xff]
    %v1322 = vld [vmem:[%s6 + $0x38] sm:$0xff]
    %v1323 = vld [vmem:[%s6 + $0x40] sm:$0xff]
    %v1324 = vld [vmem:[%s6 + $0x48] sm:$0xff]
    %v1325 = vld [vmem:[%s6 + $0x50] sm:$0xff]
    %v1326 = vld [vmem:[%s6 + $0x58] sm:$0xff]
    %vm1327 = vcmask 785408
    %v1329 = vsel %vm1327, %v1299, 0
    %v1332 = vsel %vm1327, %v1300, 0
    %v1335 = vsel %vm1327, %v1301, 0
    %v1338 = vsel %vm1327, %v1302, 0
    %v1341 = vsel %vm1327, %v1303, 0
    %v1344 = vsel %vm1327, %v1304, 0
    %v1347 = vsel %vm1327, %v1305, 0
    %v1350 = vsel %vm1327, %v1306, 0
    %v1353 = vsel %vm1327, %v1307, 0
    %v1356 = vsel %vm1327, %v1308, 0
    %v1359 = vsel %vm1327, %v1309, 0
    %v1362 = vsel %vm1327, %v1310, 0
    %v1365 = vsel %vm1327, %v1311, 0
    %v1368 = vsel %vm1327, %v1312, 0
    %v1371 = vsel %vm1327, %v1313, 0
    %v1374 = vsel %vm1327, %v1314, 0
    %1376 = vmatpush.msra.mxu0 0.0
    %1377 = vmatpush.msra.mxu0 0.0
    %1378 = vmatpush.msra.mxu0 0.0
    %1379 = vmatpush.msra.mxu0 0.0
    %1380 = vmatpush.msra.mxu0 %v1326
    %1381 = vmatpush.msra.mxu0 %v1325
    %1382 = vmatpush.msra.mxu0 %v1324
    %1383 = vmatpush.msra.mxu0 %v1323
    %1384 = vmatpush.msra.mxu0 %v1322
    %1385 = vmatpush.msra.mxu0 %v1321
    %1386 = vmatpush.msra.mxu0 %v1320
    %1387 = vmatpush.msra.mxu0 %v1319
    %1388 = vmatpush.msra.mxu0 %v1318
    %1389 = vmatpush.msra.mxu0 %v1317
    %1390 = vmatpush.msra.mxu0 %v1316
    %1391 = vmatpush.msra.mxu0 %v1315
    %1392 = vmatmul.f32.gmra.mxu0 %v1329
    %v1393 = vpop.f32.mrf.mxu0
    %v1394 = vadd.f32 0.0, %v1393
    %1395 = vmatmul.f32.gmra.mxu0 %v1332
    %v1396 = vpop.f32.mrf.mxu0
    %v1397 = vadd.f32 0.0, %v1396
    %1398 = vmatmul.f32.gmra.mxu0 %v1335
    %v1399 = vpop.f32.mrf.mxu0
    %v1400 = vadd.f32 0.0, %v1399
    %1401 = vmatmul.f32.gmra.mxu0 %v1338
    %v1402 = vpop.f32.mrf.mxu0
    %v1403 = vadd.f32 0.0, %v1402
    %1404 = vmatmul.f32.gmra.mxu0 %v1341
    %v1405 = vpop.f32.mrf.mxu0
    %v1406 = vadd.f32 0.0, %v1405
    %1407 = vmatmul.f32.gmra.mxu0 %v1344
    %v1408 = vpop.f32.mrf.mxu0
    %v1409 = vadd.f32 0.0, %v1408
    %1410 = vmatmul.f32.gmra.mxu0 %v1347
    %v1411 = vpop.f32.mrf.mxu0
    %v1412 = vadd.f32 0.0, %v1411
    %1413 = vmatmul.f32.gmra.mxu0 %v1350
    %v1414 = vpop.f32.mrf.mxu0
    %v1415 = vadd.f32 0.0, %v1414
    %1416 = vmatmul.f32.gmra.mxu0 %v1353
    %v1417 = vpop.f32.mrf.mxu0
    %v1418 = vadd.f32 0.0, %v1417
    %1419 = vmatmul.f32.gmra.mxu0 %v1356
    %v1420 = vpop.f32.mrf.mxu0
    %v1421 = vadd.f32 0.0, %v1420
    %1422 = vmatmul.f32.gmra.mxu0 %v1359
    %v1423 = vpop.f32.mrf.mxu0
    %v1424 = vadd.f32 0.0, %v1423
    %1425 = vmatmul.f32.gmra.mxu0 %v1362
    %v1426 = vpop.f32.mrf.mxu0
    %v1427 = vadd.f32 0.0, %v1426
    %1428 = vmatmul.f32.gmra.mxu0 %v1365
    %v1429 = vpop.f32.mrf.mxu0
    %v1430 = vadd.f32 0.0, %v1429
    %1431 = vmatmul.f32.gmra.mxu0 %v1368
    %v1432 = vpop.f32.mrf.mxu0
    %v1433 = vadd.f32 0.0, %v1432
    %1434 = vmatmul.f32.gmra.mxu0 %v1371
    %v1435 = vpop.f32.mrf.mxu0
    %v1436 = vadd.f32 0.0, %v1435
    %1437 = vmatmul.f32.gmra.mxu0 %v1374
    %v1438 = vpop.f32.mrf.mxu0
    %v1439 = vadd.f32 0.0, %v1438
    %1440 = vdwg.mxu0
    %1442 = vset.pattern.permute.xlu0 0
    %1443 = vperm.xlu0 %1442, %v1136
    %v1444 = vpop.permute.xlu0 %1443
    %1447 = vset.pattern.permute.xlu0 0
    %1448 = vperm.xlu0 %1447, %v1137
    %v1449 = vpop.permute.xlu0 %1448
    %1452 = vset.pattern.permute.xlu0 0
    %1453 = vperm.xlu0 %1452, %v1138
    %v1454 = vpop.permute.xlu0 %1453
    %1457 = vset.pattern.permute.xlu0 0
    %1458 = vperm.xlu0 %1457, %v1139
    %v1459 = vpop.permute.xlu0 %1458
    %1462 = vset.pattern.permute.xlu0 0
    %1463 = vperm.xlu0 %1462, %v1140
    %v1464 = vpop.permute.xlu0 %1463
    %1467 = vset.pattern.permute.xlu0 0
    %1468 = vperm.xlu0 %1467, %v1141
    %v1469 = vpop.permute.xlu0 %1468
    %1472 = vset.pattern.permute.xlu0 0
    %1473 = vperm.xlu0 %1472, %v1142
    %v1474 = vpop.permute.xlu0 %1473
    %1477 = vset.pattern.permute.xlu0 0
    %1478 = vperm.xlu0 %1477, %v1143
    %v1479 = vpop.permute.xlu0 %1478
    %1482 = vset.pattern.permute.xlu0 0
    %1483 = vperm.xlu0 %1482, %v1144
    %v1484 = vpop.permute.xlu0 %1483
    %1487 = vset.pattern.permute.xlu0 0
    %1488 = vperm.xlu0 %1487, %v1145
    %v1489 = vpop.permute.xlu0 %1488
    %1492 = vset.pattern.permute.xlu0 0
    %1493 = vperm.xlu0 %1492, %v1146
    %v1494 = vpop.permute.xlu0 %1493
    %1497 = vset.pattern.permute.xlu0 0
    %1498 = vperm.xlu0 %1497, %v1147
    %v1499 = vpop.permute.xlu0 %1498
    %1502 = vset.pattern.permute.xlu0 0
    %1503 = vperm.xlu0 %1502, %v1148
    %v1504 = vpop.permute.xlu0 %1503
    %1507 = vset.pattern.permute.xlu0 0
    %1508 = vperm.xlu0 %1507, %v1149
    %v1509 = vpop.permute.xlu0 %1508
    %1512 = vset.pattern.permute.xlu0 0
    %1513 = vperm.xlu0 %1512, %v1150
    %v1514 = vpop.permute.xlu0 %1513
    %1517 = vset.pattern.permute.xlu0 0
    %1518 = vperm.xlu0 %1517, %v1151
    %v1519 = vpop.permute.xlu0 %1518
    %v1521 = vmul.f32 %v1394, %v1444
    %v1522 = vmul.f32 %v1397, %v1449
    %v1523 = vmul.f32 %v1400, %v1454
    %v1524 = vmul.f32 %v1403, %v1459
    %v1525 = vmul.f32 %v1406, %v1464
    %v1526 = vmul.f32 %v1409, %v1469
    %v1527 = vmul.f32 %v1412, %v1474
    %v1528 = vmul.f32 %v1415, %v1479
    %v1529 = vmul.f32 %v1418, %v1484
    %v1530 = vmul.f32 %v1421, %v1489
    %v1531 = vmul.f32 %v1424, %v1494
    %v1532 = vmul.f32 %v1427, %v1499
    %v1533 = vmul.f32 %v1430, %v1504
    %v1534 = vmul.f32 %v1433, %v1509
    %v1535 = vmul.f32 %v1436, %v1514
    %v1536 = vmul.f32 %v1439, %v1519
    %v1537 = vld [vmem:[%s8] sm:$0xff]
    %v1538 = vld [vmem:[%s8 + $0x8] sm:$0xff]
    %v1539 = vld [vmem:[%s8 + $0x10] sm:$0xff]
    %v1540 = vld [vmem:[%s8 + $0x18] sm:$0xff]
    %v1541 = vld [vmem:[%s8 + $0x20] sm:$0xff]
    %v1542 = vld [vmem:[%s8 + $0x28] sm:$0xff]
    %v1543 = vld [vmem:[%s8 + $0x30] sm:$0xff]
    %v1544 = vld [vmem:[%s8 + $0x38] sm:$0xff]
    %v1545 = vld [vmem:[%s8 + $0x40] sm:$0xff]
    %v1546 = vld [vmem:[%s8 + $0x48] sm:$0xff]
    %v1547 = vld [vmem:[%s8 + $0x50] sm:$0xff]
    %v1548 = vld [vmem:[%s8 + $0x58] sm:$0xff]
    %v1549 = vld [vmem:[%s8 + $0x60] sm:$0xff]
    %v1550 = vld [vmem:[%s8 + $0x68] sm:$0xff]
    %v1551 = vld [vmem:[%s8 + $0x70] sm:$0xff]
    %v1552 = vld [vmem:[%s8 + $0x78] sm:$0xff]
    %v1553 = vadd.f32 %v1521, %v1537
    %v1554 = vadd.f32 %v1522, %v1538
    %v1555 = vadd.f32 %v1523, %v1539
    %v1556 = vadd.f32 %v1524, %v1540
    %v1557 = vadd.f32 %v1525, %v1541
    %v1558 = vadd.f32 %v1526, %v1542
    %v1559 = vadd.f32 %v1527, %v1543
    %v1560 = vadd.f32 %v1528, %v1544
    %v1561 = vadd.f32 %v1529, %v1545
    %v1562 = vadd.f32 %v1530, %v1546
    %v1563 = vadd.f32 %v1531, %v1547
    %v1564 = vadd.f32 %v1532, %v1548
    %v1565 = vadd.f32 %v1533, %v1549
    %v1566 = vadd.f32 %v1534, %v1550
    %v1567 = vadd.f32 %v1535, %v1551
    %v1568 = vadd.f32 %v1536, %v1552
    %v1569 = vld [vmem:[%s7] sm:$0xff]
    %v1570 = vld [vmem:[%s7 + $0x8] sm:$0xff]
    %v1571 = vld [vmem:[%s7 + $0x10] sm:$0xff]
    %v1572 = vld [vmem:[%s7 + $0x18] sm:$0xff]
    %v1573 = vld [vmem:[%s7 + $0x20] sm:$0xff]
    %v1574 = vld [vmem:[%s7 + $0x28] sm:$0xff]
    %v1575 = vld [vmem:[%s7 + $0x30] sm:$0xff]
    %v1576 = vld [vmem:[%s7 + $0x38] sm:$0xff]
    %v1577 = vld [vmem:[%s7 + $0x40] sm:$0xff]
    %v1578 = vld [vmem:[%s7 + $0x48] sm:$0xff]
    %v1579 = vld [vmem:[%s7 + $0x50] sm:$0xff]
    %v1580 = vld [vmem:[%s7 + $0x58] sm:$0xff]
    %1581 = vmatpush.msra.mxu0 0.0
    %1582 = vmatpush.msra.mxu0 0.0
    %1583 = vmatpush.msra.mxu0 0.0
    %1584 = vmatpush.msra.mxu0 0.0
    %1585 = vmatpush.msra.mxu0 %v1580
    %1586 = vmatpush.msra.mxu0 %v1579
    %1587 = vmatpush.msra.mxu0 %v1578
    %1588 = vmatpush.msra.mxu0 %v1577
    %1589 = vmatpush.msra.mxu0 %v1576
    %1590 = vmatpush.msra.mxu0 %v1575
    %1591 = vmatpush.msra.mxu0 %v1574
    %1592 = vmatpush.msra.mxu0 %v1573
    %1593 = vmatpush.msra.mxu0 %v1572
    %1594 = vmatpush.msra.mxu0 %v1571
    %1595 = vmatpush.msra.mxu0 %v1570
    %1596 = vmatpush.msra.mxu0 %v1569
    %1597 = vmatmul.f32.gmra.mxu0 %v1329
    %v1598 = vpop.f32.mrf.mxu0
    %v1599 = vadd.f32 0.0, %v1598
    %1600 = vmatmul.f32.gmra.mxu0 %v1332
    %v1601 = vpop.f32.mrf.mxu0
    %v1602 = vadd.f32 0.0, %v1601
    %1603 = vmatmul.f32.gmra.mxu0 %v1335
    %v1604 = vpop.f32.mrf.mxu0
    %v1605 = vadd.f32 0.0, %v1604
    %1606 = vmatmul.f32.gmra.mxu0 %v1338
    %v1607 = vpop.f32.mrf.mxu0
    %v1608 = vadd.f32 0.0, %v1607
    %1609 = vmatmul.f32.gmra.mxu0 %v1341
    %v1610 = vpop.f32.mrf.mxu0
    %v1611 = vadd.f32 0.0, %v1610
    %1612 = vmatmul.f32.gmra.mxu0 %v1344
    %v1613 = vpop.f32.mrf.mxu0
    %v1614 = vadd.f32 0.0, %v1613
    %1615 = vmatmul.f32.gmra.mxu0 %v1347
    %v1616 = vpop.f32.mrf.mxu0
    %v1617 = vadd.f32 0.0, %v1616
    %1618 = vmatmul.f32.gmra.mxu0 %v1350
    %v1619 = vpop.f32.mrf.mxu0
    %v1620 = vadd.f32 0.0, %v1619
    %1621 = vmatmul.f32.gmra.mxu0 %v1353
    %v1622 = vpop.f32.mrf.mxu0
    %v1623 = vadd.f32 0.0, %v1622
    %1624 = vmatmul.f32.gmra.mxu0 %v1356
    %v1625 = vpop.f32.mrf.mxu0
    %v1626 = vadd.f32 0.0, %v1625
    %1627 = vmatmul.f32.gmra.mxu0 %v1359
    %v1628 = vpop.f32.mrf.mxu0
    %v1629 = vadd.f32 0.0, %v1628
    %1630 = vmatmul.f32.gmra.mxu0 %v1362
    %v1631 = vpop.f32.mrf.mxu0
    %v1632 = vadd.f32 0.0, %v1631
    %1633 = vmatmul.f32.gmra.mxu0 %v1365
    %v1634 = vpop.f32.mrf.mxu0
    %v1635 = vadd.f32 0.0, %v1634
    %1636 = vmatmul.f32.gmra.mxu0 %v1368
    %v1637 = vpop.f32.mrf.mxu0
    %v1638 = vadd.f32 0.0, %v1637
    %1639 = vmatmul.f32.gmra.mxu0 %v1371
    %v1640 = vpop.f32.mrf.mxu0
    %v1641 = vadd.f32 0.0, %v1640
    %1642 = vmatmul.f32.gmra.mxu0 %v1374
    %v1643 = vpop.f32.mrf.mxu0
    %v1644 = vadd.f32 0.0, %v1643
    %1645 = vdwg.mxu0
    %v1646 = vmul.f32 %v1599, %v1444
    %v1647 = vmul.f32 %v1602, %v1449
    %v1648 = vmul.f32 %v1605, %v1454
    %v1649 = vmul.f32 %v1608, %v1459
    %v1650 = vmul.f32 %v1611, %v1464
    %v1651 = vmul.f32 %v1614, %v1469
    %v1652 = vmul.f32 %v1617, %v1474
    %v1653 = vmul.f32 %v1620, %v1479
    %v1654 = vmul.f32 %v1623, %v1484
    %v1655 = vmul.f32 %v1626, %v1489
    %v1656 = vmul.f32 %v1629, %v1494
    %v1657 = vmul.f32 %v1632, %v1499
    %v1658 = vmul.f32 %v1635, %v1504
    %v1659 = vmul.f32 %v1638, %v1509
    %v1660 = vmul.f32 %v1641, %v1514
    %v1661 = vmul.f32 %v1644, %v1519
    %v1662 = vld [vmem:[%s9] sm:$0xff]
    %v1663 = vld [vmem:[%s9 + $0x8] sm:$0xff]
    %v1664 = vld [vmem:[%s9 + $0x10] sm:$0xff]
    %v1665 = vld [vmem:[%s9 + $0x18] sm:$0xff]
    %v1666 = vld [vmem:[%s9 + $0x20] sm:$0xff]
    %v1667 = vld [vmem:[%s9 + $0x28] sm:$0xff]
    %v1668 = vld [vmem:[%s9 + $0x30] sm:$0xff]
    %v1669 = vld [vmem:[%s9 + $0x38] sm:$0xff]
    %v1670 = vld [vmem:[%s9 + $0x40] sm:$0xff]
    %v1671 = vld [vmem:[%s9 + $0x48] sm:$0xff]
    %v1672 = vld [vmem:[%s9 + $0x50] sm:$0xff]
    %v1673 = vld [vmem:[%s9 + $0x58] sm:$0xff]
    %v1674 = vld [vmem:[%s9 + $0x60] sm:$0xff]
    %v1675 = vld [vmem:[%s9 + $0x68] sm:$0xff]
    %v1676 = vld [vmem:[%s9 + $0x70] sm:$0xff]
    %v1677 = vld [vmem:[%s9 + $0x78] sm:$0xff]
    %v1678 = vadd.f32 %v1646, %v1662
    %v1679 = vadd.f32 %v1647, %v1663
    %v1680 = vadd.f32 %v1648, %v1664
    %v1681 = vadd.f32 %v1649, %v1665
    %v1682 = vadd.f32 %v1650, %v1666
    %v1683 = vadd.f32 %v1651, %v1667
    %v1684 = vadd.f32 %v1652, %v1668
    %v1685 = vadd.f32 %v1653, %v1669
    %v1686 = vadd.f32 %v1654, %v1670
    %v1687 = vadd.f32 %v1655, %v1671
    %v1688 = vadd.f32 %v1656, %v1672
    %v1689 = vadd.f32 %v1657, %v1673
    %v1690 = vadd.f32 %v1658, %v1674
    %v1691 = vadd.f32 %v1659, %v1675
    %v1692 = vadd.f32 %v1660, %v1676
    %v1693 = vadd.f32 %v1661, %v1677
    %v1694 = vmax.f32 %v1553, %v1678
    %v1695 = vmax.f32 %v1554, %v1679
    %v1696 = vmax.f32 %v1555, %v1680
    %v1697 = vmax.f32 %v1556, %v1681
    %v1698 = vmax.f32 %v1557, %v1682
    %v1699 = vmax.f32 %v1558, %v1683
    %v1700 = vmax.f32 %v1559, %v1684
    %v1701 = vmax.f32 %v1560, %v1685
    %v1702 = vmax.f32 %v1561, %v1686
    %v1703 = vmax.f32 %v1562, %v1687
    %v1704 = vmax.f32 %v1563, %v1688
    %v1705 = vmax.f32 %v1564, %v1689
    %v1706 = vmax.f32 %v1565, %v1690
    %v1707 = vmax.f32 %v1566, %v1691
    %v1708 = vmax.f32 %v1567, %v1692
    %v1709 = vmax.f32 %v1568, %v1693
    %v1710 = vmax.f32 %v1694, 0.0
    %v1711 = vmax.f32 %v1695, 0.0
    %v1712 = vmax.f32 %v1696, 0.0
    %v1713 = vmax.f32 %v1697, 0.0
    %v1714 = vmax.f32 %v1698, 0.0
    %v1715 = vmax.f32 %v1699, 0.0
    %v1716 = vmax.f32 %v1700, 0.0
    %v1717 = vmax.f32 %v1701, 0.0
    %v1718 = vmax.f32 %v1702, 0.0
    %v1719 = vmax.f32 %v1703, 0.0
    %v1720 = vmax.f32 %v1704, 0.0
    %v1721 = vmax.f32 %v1705, 0.0
    %v1722 = vmax.f32 %v1706, 0.0
    %v1723 = vmax.f32 %v1707, 0.0
    %v1724 = vmax.f32 %v1708, 0.0
    %v1725 = vmax.f32 %v1709, 0.0
    %vm1726 = vcmask 130048
    %1727 = vst.msk [vmem:[#allocation4] sm:$0xff] %vm1726, 0.0
    %1728 = vst.msk [vmem:[#allocation4 + $0x8] sm:$0xff] %vm1726, %v1710
    %1729 = vst.msk [vmem:[#allocation4 + $0x10] sm:$0xff] %vm1726, %v1711
    %1730 = vst.msk [vmem:[#allocation4 + $0x18] sm:$0xff] %vm1726, %v1712
    %1731 = vst.msk [vmem:[#allocation4 + $0x20] sm:$0xff] %vm1726, %v1713
    %1732 = vst.msk [vmem:[#allocation4 + $0x28] sm:$0xff] %vm1726, %v1714
    %1733 = vst.msk [vmem:[#allocation4 + $0x30] sm:$0xff] %vm1726, %v1715
    %1734 = vst.msk [vmem:[#allocation4 + $0x38] sm:$0xff] %vm1726, %v1716
    %1735 = vst.msk [vmem:[#allocation4 + $0x40] sm:$0xff] %vm1726, %v1717
    %1736 = vst.msk [vmem:[#allocation4 + $0x48] sm:$0xff] %vm1726, %v1718
    %1737 = vst.msk [vmem:[#allocation4 + $0x50] sm:$0xff] %vm1726, %v1719
    %1738 = vst.msk [vmem:[#allocation4 + $0x58] sm:$0xff] %vm1726, %v1720
    %1739 = vst.msk [vmem:[#allocation4 + $0x60] sm:$0xff] %vm1726, %v1721
    %1740 = vst.msk [vmem:[#allocation4 + $0x68] sm:$0xff] %vm1726, %v1722
    %1741 = vst.msk [vmem:[#allocation4 + $0x70] sm:$0xff] %vm1726, %v1723
    %1742 = vst.msk [vmem:[#allocation4 + $0x78] sm:$0xff] %vm1726, %v1724
    %1743 = vst.msk [vmem:[#allocation4 + $0x80] sm:$0xff] %vm1726, %v1725
    %1744 = vst.msk [vmem:[#allocation4 + $0x88] sm:$0xff] %vm1726, 0.0
    %v1745 = vld [vmem:[#allocation4] sm:$0xff]
    %v1746 = vld [vmem:[#allocation4 + $0x8] sm:$0xff]
    %v1747 = vld [vmem:[#allocation4 + $0x10] sm:$0xff]
    %v1748 = vld [vmem:[#allocation4 + $0x18] sm:$0xff]
    %v1749 = vld [vmem:[#allocation4 + $0x20] sm:$0xff]
    %v1750 = vld [vmem:[#allocation4 + $0x28] sm:$0xff]
    %v1751 = vld [vmem:[#allocation4 + $0x30] sm:$0xff]
    %v1752 = vld [vmem:[#allocation4 + $0x38] sm:$0xff]
    %v1753 = vld [vmem:[#allocation4 + $0x40] sm:$0xff]
    %v1754 = vld [vmem:[#allocation4 + $0x48] sm:$0xff]
    %v1755 = vld [vmem:[#allocation4 + $0x50] sm:$0xff]
    %v1756 = vld [vmem:[#allocation4 + $0x58] sm:$0xff]
    %v1757 = vld [vmem:[#allocation4 + $0x60] sm:$0xff]
    %v1758 = vld [vmem:[#allocation4 + $0x68] sm:$0xff]
    %v1759 = vld [vmem:[#allocation4 + $0x70] sm:$0xff]
    %v1760 = vld [vmem:[#allocation4 + $0x78] sm:$0xff]
    %v1761 = vld [vmem:[#allocation4 + $0x80] sm:$0xff]
    %v1762 = vld [vmem:[#allocation4 + $0x88] sm:$0xff]
    %1779 = vrot.lane.b32.xlu0 %v1746, 16
    %v1780 = vpop.permute.xlu0 %1779
    %1781 = vrot.lane.b32.xlu0 %v1747, 16
    %v1782 = vpop.permute.xlu0 %1781
    %1783 = vrot.lane.b32.xlu0 %v1748, 16
    %v1784 = vpop.permute.xlu0 %1783
    %1785 = vrot.lane.b32.xlu0 %v1749, 16
    %v1786 = vpop.permute.xlu0 %1785
    %1787 = vrot.lane.b32.xlu0 %v1750, 16
    %v1788 = vpop.permute.xlu0 %1787
    %1789 = vrot.lane.b32.xlu0 %v1751, 16
    %v1790 = vpop.permute.xlu0 %1789
    %1791 = vrot.lane.b32.xlu0 %v1752, 16
    %v1792 = vpop.permute.xlu0 %1791
    %1793 = vrot.lane.b32.xlu0 %v1753, 16
    %v1794 = vpop.permute.xlu0 %1793
    %1795 = vrot.lane.b32.xlu0 %v1754, 16
    %v1796 = vpop.permute.xlu0 %1795
    %1797 = vrot.lane.b32.xlu0 %v1755, 16
    %v1798 = vpop.permute.xlu0 %1797
    %1799 = vrot.lane.b32.xlu0 %v1756, 16
    %v1800 = vpop.permute.xlu0 %1799
    %1801 = vrot.lane.b32.xlu0 %v1757, 16
    %v1802 = vpop.permute.xlu0 %1801
    %1803 = vrot.lane.b32.xlu0 %v1758, 16
    %v1804 = vpop.permute.xlu0 %1803
    %1805 = vrot.lane.b32.xlu0 %v1759, 16
    %v1806 = vpop.permute.xlu0 %1805
    %1807 = vrot.lane.b32.xlu0 %v1760, 16
    %v1808 = vpop.permute.xlu0 %1807
    %1809 = vrot.lane.b32.xlu0 %v1761, 16
    %v1810 = vpop.permute.xlu0 %1809
    %1828 = vrot.lane.b32.xlu0 %v1747, 32
    %v1829 = vpop.permute.xlu0 %1828
    %1830 = vrot.lane.b32.xlu0 %v1748, 32
    %v1831 = vpop.permute.xlu0 %1830
    %1832 = vrot.lane.b32.xlu0 %v1749, 32
    %v1833 = vpop.permute.xlu0 %1832
    %1834 = vrot.lane.b32.xlu0 %v1750, 32
    %v1835 = vpop.permute.xlu0 %1834
    %1836 = vrot.lane.b32.xlu0 %v1751, 32
    %v1837 = vpop.permute.xlu0 %1836
    %1838 = vrot.lane.b32.xlu0 %v1752, 32
    %v1839 = vpop.permute.xlu0 %1838
    %1840 = vrot.lane.b32.xlu0 %v1753, 32
    %v1841 = vpop.permute.xlu0 %1840
    %1842 = vrot.lane.b32.xlu0 %v1754, 32
    %v1843 = vpop.permute.xlu0 %1842
    %1844 = vrot.lane.b32.xlu0 %v1755, 32
    %v1845 = vpop.permute.xlu0 %1844
    %1846 = vrot.lane.b32.xlu0 %v1756, 32
    %v1847 = vpop.permute.xlu0 %1846
    %1848 = vrot.lane.b32.xlu0 %v1757, 32
    %v1849 = vpop.permute.xlu0 %1848
    %1850 = vrot.lane.b32.xlu0 %v1758, 32
    %v1851 = vpop.permute.xlu0 %1850
    %1852 = vrot.lane.b32.xlu0 %v1759, 32
    %v1853 = vpop.permute.xlu0 %1852
    %1854 = vrot.lane.b32.xlu0 %v1760, 32
    %v1855 = vpop.permute.xlu0 %1854
    %1856 = vrot.lane.b32.xlu0 %v1761, 32
    %v1857 = vpop.permute.xlu0 %1856
    %1858 = vrot.lane.b32.xlu0 %v1762, 32
    %v1859 = vpop.permute.xlu0 %1858
    %v1876 = vsel %vm1726, %v1745, %v1780
    %v1877 = vsel %vm1726, %v1746, %v1782
    %v1878 = vsel %vm1726, %v1747, %v1784
    %v1879 = vsel %vm1726, %v1748, %v1786
    %v1880 = vsel %vm1726, %v1749, %v1788
    %v1881 = vsel %vm1726, %v1750, %v1790
    %v1882 = vsel %vm1726, %v1751, %v1792
    %v1883 = vsel %vm1726, %v1752, %v1794
    %v1884 = vsel %vm1726, %v1753, %v1796
    %v1885 = vsel %vm1726, %v1754, %v1798
    %v1886 = vsel %vm1726, %v1755, %v1800
    %v1887 = vsel %vm1726, %v1756, %v1802
    %v1888 = vsel %vm1726, %v1757, %v1804
    %v1889 = vsel %vm1726, %v1758, %v1806
    %v1890 = vsel %vm1726, %v1759, %v1808
    %v1891 = vsel %vm1726, %v1760, %v1810
    %v1892 = vsel %vm208, %v1876, %v1829
    %v1893 = vsel %vm208, %v1877, %v1831
    %v1894 = vsel %vm208, %v1878, %v1833
    %v1895 = vsel %vm208, %v1879, %v1835
    %v1896 = vsel %vm208, %v1880, %v1837
    %v1897 = vsel %vm208, %v1881, %v1839
    %v1898 = vsel %vm208, %v1882, %v1841
    %v1899 = vsel %vm208, %v1883, %v1843
    %v1900 = vsel %vm208, %v1884, %v1845
    %v1901 = vsel %vm208, %v1885, %v1847
    %v1902 = vsel %vm208, %v1886, %v1849
    %v1903 = vsel %vm208, %v1887, %v1851
    %v1904 = vsel %vm208, %v1888, %v1853
    %v1905 = vsel %vm208, %v1889, %v1855
    %v1906 = vsel %vm208, %v1890, %v1857
    %v1907 = vsel %vm208, %v1891, %v1859
    %v1908 = vld [vmem:[%s10] sm:$0xff]
    %v1909 = vld [vmem:[%s10 + $0x8] sm:$0xff]
    %v1910 = vld [vmem:[%s10 + $0x10] sm:$0xff]
    %v1911 = vld [vmem:[%s10 + $0x18] sm:$0xff]
    %v1912 = vld [vmem:[%s10 + $0x20] sm:$0xff]
    %v1913 = vld [vmem:[%s10 + $0x28] sm:$0xff]
    %vm1914 = vcmask 392192
    %v1916 = vsel %vm1914, %v1892, 0
    %v1919 = vsel %vm1914, %v1893, 0
    %v1922 = vsel %vm1914, %v1894, 0
    %v1925 = vsel %vm1914, %v1895, 0
    %v1928 = vsel %vm1914, %v1896, 0
    %v1931 = vsel %vm1914, %v1897, 0
    %v1934 = vsel %vm1914, %v1898, 0
    %v1937 = vsel %vm1914, %v1899, 0
    %v1940 = vsel %vm1914, %v1900, 0
    %v1943 = vsel %vm1914, %v1901, 0
    %v1946 = vsel %vm1914, %v1902, 0
    %v1949 = vsel %vm1914, %v1903, 0
    %v1952 = vsel %vm1914, %v1904, 0
    %v1955 = vsel %vm1914, %v1905, 0
    %v1958 = vsel %vm1914, %v1906, 0
    %v1961 = vsel %vm1914, %v1907, 0
    %1963 = vmatpush.msra.mxu0 0.0
    %1964 = vmatpush.msra.mxu0 0.0
    %1965 = vmatpush.msra.mxu0 0.0
    %1966 = vmatpush.msra.mxu0 0.0
    %1967 = vmatpush.msra.mxu0 0.0
    %1968 = vmatpush.msra.mxu0 0.0
    %1969 = vmatpush.msra.mxu0 0.0
    %1970 = vmatpush.msra.mxu0 0.0
    %1971 = vmatpush.msra.mxu0 0.0
    %1972 = vmatpush.msra.mxu0 0.0
    %1973 = vmatpush.msra.mxu0 %v1913
    %1974 = vmatpush.msra.mxu0 %v1912
    %1975 = vmatpush.msra.mxu0 %v1911
    %1976 = vmatpush.msra.mxu0 %v1910
    %1977 = vmatpush.msra.mxu0 %v1909
    %1978 = vmatpush.msra.mxu0 %v1908
    %1979 = vmatmul.f32.gmra.mxu0 %v1916
    %v1980 = vpop.f32.mrf.mxu0
    %v1981 = vadd.f32 0.0, %v1980
    %1982 = vmatmul.f32.gmra.mxu0 %v1919
    %v1983 = vpop.f32.mrf.mxu0
    %v1984 = vadd.f32 0.0, %v1983
    %1985 = vmatmul.f32.gmra.mxu0 %v1922
    %v1986 = vpop.f32.mrf.mxu0
    %v1987 = vadd.f32 0.0, %v1986
    %1988 = vmatmul.f32.gmra.mxu0 %v1925
    %v1989 = vpop.f32.mrf.mxu0
    %v1990 = vadd.f32 0.0, %v1989
    %1991 = vmatmul.f32.gmra.mxu0 %v1928
    %v1992 = vpop.f32.mrf.mxu0
    %v1993 = vadd.f32 0.0, %v1992
    %1994 = vmatmul.f32.gmra.mxu0 %v1931
    %v1995 = vpop.f32.mrf.mxu0
    %v1996 = vadd.f32 0.0, %v1995
    %1997 = vmatmul.f32.gmra.mxu0 %v1934
    %v1998 = vpop.f32.mrf.mxu0
    %v1999 = vadd.f32 0.0, %v1998
    %2000 = vmatmul.f32.gmra.mxu0 %v1937
    %v2001 = vpop.f32.mrf.mxu0
    %v2002 = vadd.f32 0.0, %v2001
    %2003 = vmatmul.f32.gmra.mxu0 %v1940
    %v2004 = vpop.f32.mrf.mxu0
    %v2005 = vadd.f32 0.0, %v2004
    %2006 = vmatmul.f32.gmra.mxu0 %v1943
    %v2007 = vpop.f32.mrf.mxu0
    %v2008 = vadd.f32 0.0, %v2007
    %2009 = vmatmul.f32.gmra.mxu0 %v1946
    %v2010 = vpop.f32.mrf.mxu0
    %v2011 = vadd.f32 0.0, %v2010
    %2012 = vmatmul.f32.gmra.mxu0 %v1949
    %v2013 = vpop.f32.mrf.mxu0
    %v2014 = vadd.f32 0.0, %v2013
    %2015 = vmatmul.f32.gmra.mxu0 %v1952
    %v2016 = vpop.f32.mrf.mxu0
    %v2017 = vadd.f32 0.0, %v2016
    %2018 = vmatmul.f32.gmra.mxu0 %v1955
    %v2019 = vpop.f32.mrf.mxu0
    %v2020 = vadd.f32 0.0, %v2019
    %2021 = vmatmul.f32.gmra.mxu0 %v1958
    %v2022 = vpop.f32.mrf.mxu0
    %v2023 = vadd.f32 0.0, %v2022
    %2024 = vmatmul.f32.gmra.mxu0 %v1961
    %v2025 = vpop.f32.mrf.mxu0
    %v2026 = vadd.f32 0.0, %v2025
    %2027 = vdwg.mxu0
    %v2028 = vmul.f32 %v1981, %v1444
    %v2029 = vmul.f32 %v1984, %v1449
    %v2030 = vmul.f32 %v1987, %v1454
    %v2031 = vmul.f32 %v1990, %v1459
    %v2032 = vmul.f32 %v1993, %v1464
    %v2033 = vmul.f32 %v1996, %v1469
    %v2034 = vmul.f32 %v1999, %v1474
    %v2035 = vmul.f32 %v2002, %v1479
    %v2036 = vmul.f32 %v2005, %v1484
    %v2037 = vmul.f32 %v2008, %v1489
    %v2038 = vmul.f32 %v2011, %v1494
    %v2039 = vmul.f32 %v2014, %v1499
    %v2040 = vmul.f32 %v2017, %v1504
    %v2041 = vmul.f32 %v2020, %v1509
    %v2042 = vmul.f32 %v2023, %v1514
    %v2043 = vmul.f32 %v2026, %v1519
    %v2044 = vld [vmem:[%s12] sm:$0xff]
    %v2045 = vld [vmem:[%s12 + $0x8] sm:$0xff]
    %v2046 = vld [vmem:[%s12 + $0x10] sm:$0xff]
    %v2047 = vld [vmem:[%s12 + $0x18] sm:$0xff]
    %v2048 = vld [vmem:[%s12 + $0x20] sm:$0xff]
    %v2049 = vld [vmem:[%s12 + $0x28] sm:$0xff]
    %v2050 = vld [vmem:[%s12 + $0x30] sm:$0xff]
    %v2051 = vld [vmem:[%s12 + $0x38] sm:$0xff]
    %v2052 = vld [vmem:[%s12 + $0x40] sm:$0xff]
    %v2053 = vld [vmem:[%s12 + $0x48] sm:$0xff]
    %v2054 = vld [vmem:[%s12 + $0x50] sm:$0xff]
    %v2055 = vld [vmem:[%s12 + $0x58] sm:$0xff]
    %v2056 = vld [vmem:[%s12 + $0x60] sm:$0xff]
    %v2057 = vld [vmem:[%s12 + $0x68] sm:$0xff]
    %v2058 = vld [vmem:[%s12 + $0x70] sm:$0xff]
    %v2059 = vld [vmem:[%s12 + $0x78] sm:$0xff]
    %v2060 = vadd.f32 %v2028, %v2044
    %v2061 = vadd.f32 %v2029, %v2045
    %v2062 = vadd.f32 %v2030, %v2046
    %v2063 = vadd.f32 %v2031, %v2047
    %v2064 = vadd.f32 %v2032, %v2048
    %v2065 = vadd.f32 %v2033, %v2049
    %v2066 = vadd.f32 %v2034, %v2050
    %v2067 = vadd.f32 %v2035, %v2051
    %v2068 = vadd.f32 %v2036, %v2052
    %v2069 = vadd.f32 %v2037, %v2053
    %v2070 = vadd.f32 %v2038, %v2054
    %v2071 = vadd.f32 %v2039, %v2055
    %v2072 = vadd.f32 %v2040, %v2056
    %v2073 = vadd.f32 %v2041, %v2057
    %v2074 = vadd.f32 %v2042, %v2058
    %v2075 = vadd.f32 %v2043, %v2059
    %v2076 = vld [vmem:[%s11] sm:$0xff]
    %v2077 = vld [vmem:[%s11 + $0x8] sm:$0xff]
    %v2078 = vld [vmem:[%s11 + $0x10] sm:$0xff]
    %v2079 = vld [vmem:[%s11 + $0x18] sm:$0xff]
    %v2080 = vld [vmem:[%s11 + $0x20] sm:$0xff]
    %v2081 = vld [vmem:[%s11 + $0x28] sm:$0xff]
    %2082 = vmatpush.msra.mxu0 0.0
    %2083 = vmatpush.msra.mxu0 0.0
    %2084 = vmatpush.msra.mxu0 0.0
    %2085 = vmatpush.msra.mxu0 0.0
    %2086 = vmatpush.msra.mxu0 0.0
    %2087 = vmatpush.msra.mxu0 0.0
    %2088 = vmatpush.msra.mxu0 0.0
    %2089 = vmatpush.msra.mxu0 0.0
    %2090 = vmatpush.msra.mxu0 0.0
    %2091 = vmatpush.msra.mxu0 0.0
    %2092 = vmatpush.msra.mxu0 %v2081
    %2093 = vmatpush.msra.mxu0 %v2080
    %2094 = vmatpush.msra.mxu0 %v2079
    %2095 = vmatpush.msra.mxu0 %v2078
    %2096 = vmatpush.msra.mxu0 %v2077
    %2097 = vmatpush.msra.mxu0 %v2076
    %2098 = vmatmul.f32.gmra.mxu0 %v1916
    %v2099 = vpop.f32.mrf.mxu0
    %v2100 = vadd.f32 0.0, %v2099
    %2101 = vmatmul.f32.gmra.mxu0 %v1919
    %v2102 = vpop.f32.mrf.mxu0
    %v2103 = vadd.f32 0.0, %v2102
    %2104 = vmatmul.f32.gmra.mxu0 %v1922
    %v2105 = vpop.f32.mrf.mxu0
    %v2106 = vadd.f32 0.0, %v2105
    %2107 = vmatmul.f32.gmra.mxu0 %v1925
    %v2108 = vpop.f32.mrf.mxu0
    %v2109 = vadd.f32 0.0, %v2108
    %2110 = vmatmul.f32.gmra.mxu0 %v1928
    %v2111 = vpop.f32.mrf.mxu0
    %v2112 = vadd.f32 0.0, %v2111
    %2113 = vmatmul.f32.gmra.mxu0 %v1931
    %v2114 = vpop.f32.mrf.mxu0
    %v2115 = vadd.f32 0.0, %v2114
    %2116 = vmatmul.f32.gmra.mxu0 %v1934
    %v2117 = vpop.f32.mrf.mxu0
    %v2118 = vadd.f32 0.0, %v2117
    %2119 = vmatmul.f32.gmra.mxu0 %v1937
    %v2120 = vpop.f32.mrf.mxu0
    %v2121 = vadd.f32 0.0, %v2120
    %2122 = vmatmul.f32.gmra.mxu0 %v1940
    %v2123 = vpop.f32.mrf.mxu0
    %v2124 = vadd.f32 0.0, %v2123
    %2125 = vmatmul.f32.gmra.mxu0 %v1943
    %v2126 = vpop.f32.mrf.mxu0
    %v2127 = vadd.f32 0.0, %v2126
    %2128 = vmatmul.f32.gmra.mxu0 %v1946
    %v2129 = vpop.f32.mrf.mxu0
    %v2130 = vadd.f32 0.0, %v2129
    %2131 = vmatmul.f32.gmra.mxu0 %v1949
    %v2132 = vpop.f32.mrf.mxu0
    %v2133 = vadd.f32 0.0, %v2132
    %2134 = vmatmul.f32.gmra.mxu0 %v1952
    %v2135 = vpop.f32.mrf.mxu0
    %v2136 = vadd.f32 0.0, %v2135
    %2137 = vmatmul.f32.gmra.mxu0 %v1955
    %v2138 = vpop.f32.mrf.mxu0
    %v2139 = vadd.f32 0.0, %v2138
    %2140 = vmatmul.f32.gmra.mxu0 %v1958
    %v2141 = vpop.f32.mrf.mxu0
    %v2142 = vadd.f32 0.0, %v2141
    %2143 = vmatmul.f32.gmra.mxu0 %v1961
    %v2144 = vpop.f32.mrf.mxu0
    %v2145 = vadd.f32 0.0, %v2144
    %2146 = vdwg.mxu0
    %v2147 = vmul.f32 %v2100, %v1444
    %v2148 = vmul.f32 %v2103, %v1449
    %v2149 = vmul.f32 %v2106, %v1454
    %v2150 = vmul.f32 %v2109, %v1459
    %v2151 = vmul.f32 %v2112, %v1464
    %v2152 = vmul.f32 %v2115, %v1469
    %v2153 = vmul.f32 %v2118, %v1474
    %v2154 = vmul.f32 %v2121, %v1479
    %v2155 = vmul.f32 %v2124, %v1484
    %v2156 = vmul.f32 %v2127, %v1489
    %v2157 = vmul.f32 %v2130, %v1494
    %v2158 = vmul.f32 %v2133, %v1499
    %v2159 = vmul.f32 %v2136, %v1504
    %v2160 = vmul.f32 %v2139, %v1509
    %v2161 = vmul.f32 %v2142, %v1514
    %v2162 = vmul.f32 %v2145, %v1519
    %v2163 = vld [vmem:[%s13] sm:$0xff]
    %v2164 = vld [vmem:[%s13 + $0x8] sm:$0xff]
    %v2165 = vld [vmem:[%s13 + $0x10] sm:$0xff]
    %v2166 = vld [vmem:[%s13 + $0x18] sm:$0xff]
    %v2167 = vld [vmem:[%s13 + $0x20] sm:$0xff]
    %v2168 = vld [vmem:[%s13 + $0x28] sm:$0xff]
    %v2169 = vld [vmem:[%s13 + $0x30] sm:$0xff]
    %v2170 = vld [vmem:[%s13 + $0x38] sm:$0xff]
    %v2171 = vld [vmem:[%s13 + $0x40] sm:$0xff]
    %v2172 = vld [vmem:[%s13 + $0x48] sm:$0xff]
    %v2173 = vld [vmem:[%s13 + $0x50] sm:$0xff]
    %v2174 = vld [vmem:[%s13 + $0x58] sm:$0xff]
    %v2175 = vld [vmem:[%s13 + $0x60] sm:$0xff]
    %v2176 = vld [vmem:[%s13 + $0x68] sm:$0xff]
    %v2177 = vld [vmem:[%s13 + $0x70] sm:$0xff]
    %v2178 = vld [vmem:[%s13 + $0x78] sm:$0xff]
    %v2179 = vadd.f32 %v2147, %v2163
    %v2180 = vadd.f32 %v2148, %v2164
    %v2181 = vadd.f32 %v2149, %v2165
    %v2182 = vadd.f32 %v2150, %v2166
    %v2183 = vadd.f32 %v2151, %v2167
    %v2184 = vadd.f32 %v2152, %v2168
    %v2185 = vadd.f32 %v2153, %v2169
    %v2186 = vadd.f32 %v2154, %v2170
    %v2187 = vadd.f32 %v2155, %v2171
    %v2188 = vadd.f32 %v2156, %v2172
    %v2189 = vadd.f32 %v2157, %v2173
    %v2190 = vadd.f32 %v2158, %v2174
    %v2191 = vadd.f32 %v2159, %v2175
    %v2192 = vadd.f32 %v2160, %v2176
    %v2193 = vadd.f32 %v2161, %v2177
    %v2194 = vadd.f32 %v2162, %v2178
    %v2195 = vmax.f32 %v2060, %v2179
    %v2196 = vmax.f32 %v2061, %v2180
    %v2197 = vmax.f32 %v2062, %v2181
    %v2198 = vmax.f32 %v2063, %v2182
    %v2199 = vmax.f32 %v2064, %v2183
    %v2200 = vmax.f32 %v2065, %v2184
    %v2201 = vmax.f32 %v2066, %v2185
    %v2202 = vmax.f32 %v2067, %v2186
    %v2203 = vmax.f32 %v2068, %v2187
    %v2204 = vmax.f32 %v2069, %v2188
    %v2205 = vmax.f32 %v2070, %v2189
    %v2206 = vmax.f32 %v2071, %v2190
    %v2207 = vmax.f32 %v2072, %v2191
    %v2208 = vmax.f32 %v2073, %v2192
    %v2209 = vmax.f32 %v2074, %v2193
    %v2210 = vmax.f32 %v2075, %v2194
    %v2211 = vmax.f32 %v2195, 0.0
    %v2212 = vmax.f32 %v2196, 0.0
    %v2213 = vmax.f32 %v2197, 0.0
    %v2214 = vmax.f32 %v2198, 0.0
    %v2215 = vmax.f32 %v2199, 0.0
    %v2216 = vmax.f32 %v2200, 0.0
    %v2217 = vmax.f32 %v2201, 0.0
    %v2218 = vmax.f32 %v2202, 0.0
    %v2219 = vmax.f32 %v2203, 0.0
    %v2220 = vmax.f32 %v2204, 0.0
    %v2221 = vmax.f32 %v2205, 0.0
    %v2222 = vmax.f32 %v2206, 0.0
    %v2223 = vmax.f32 %v2207, 0.0
    %v2224 = vmax.f32 %v2208, 0.0
    %v2225 = vmax.f32 %v2209, 0.0
    %v2226 = vmax.f32 %v2210, 0.0
    %vm2227 = vcmask 64512
    %2228 = vst.msk [vmem:[#allocation5] sm:$0xff] %vm2227, %v2211
    %2230 = vrot.lane.b32.xlu0 %v2212, 8
    %v2231 = vpop.permute.xlu0 %2230
    %vm2233 = vcmask 130112
    %2234 = vst.msk [vmem:[#allocation5] sm:$0xff] %vm2233, %v2231
    %2236 = vrot.lane.b32.xlu0 %v2213, 16
    %v2237 = vpop.permute.xlu0 %2236
    %vm2239 = vcmask 195712
    %2240 = vst.msk [vmem:[#allocation5] sm:$0xff] %vm2239, %v2237
    %2242 = vrot.lane.b32.xlu0 %v2214, 24
    %v2243 = vpop.permute.xlu0 %2242
    %vm2245 = vcmask 261312
    %2246 = vst.msk [vmem:[#allocation5] sm:$0xff] %vm2245, %v2243
    %2248 = vrot.lane.b32.xlu0 %v2215, 32
    %v2249 = vpop.permute.xlu0 %2248
    %vm2251 = vcmask 326912
    %2252 = vst.msk [vmem:[#allocation5] sm:$0xff] %vm2251, %v2249
    %2254 = vrot.lane.b32.xlu0 %v2216, 40
    %v2255 = vpop.permute.xlu0 %2254
    %vm2257 = vcmask 392512
    %2258 = vst.msk [vmem:[#allocation5] sm:$0xff] %vm2257, %v2255
    %2260 = vrot.lane.b32.xlu0 %v2217, 48
    %v2261 = vpop.permute.xlu0 %2260
    %vm2263 = vcmask 458112
    %2264 = vst.msk [vmem:[#allocation5] sm:$0xff] %vm2263, %v2261
    %2266 = vrot.lane.b32.xlu0 %v2218, 56
    %v2267 = vpop.permute.xlu0 %2266
    %vm2269 = vcmask 523712
    %2270 = vst.msk [vmem:[#allocation5] sm:$0xff] %vm2269, %v2267
    %2272 = vrot.lane.b32.xlu0 %v2219, 64
    %v2273 = vpop.permute.xlu0 %2272
    %vm2275 = vcmask 589312
    %2276 = vst.msk [vmem:[#allocation5] sm:$0xff] %vm2275, %v2273
    %2278 = vrot.lane.b32.xlu0 %v2220, 72
    %v2279 = vpop.permute.xlu0 %2278
    %vm2281 = vcmask 654912
    %2282 = vst.msk [vmem:[#allocation5] sm:$0xff] %vm2281, %v2279
    %2284 = vrot.lane.b32.xlu0 %v2221, 80
    %v2285 = vpop.permute.xlu0 %2284
    %vm2287 = vcmask 720512
    %2288 = vst.msk [vmem:[#allocation5] sm:$0xff] %vm2287, %v2285
    %2290 = vrot.lane.b32.xlu0 %v2222, 88
    %v2291 = vpop.permute.xlu0 %2290
    %vm2293 = vcmask 786112
    %2294 = vst.msk [vmem:[#allocation5] sm:$0xff] %vm2293, %v2291
    %2296 = vrot.lane.b32.xlu0 %v2223, 96
    %v2297 = vpop.permute.xlu0 %2296
    %vm2299 = vcmask 851712
    %2300 = vst.msk [vmem:[#allocation5] sm:$0xff] %vm2299, %v2297
    %2302 = vrot.lane.b32.xlu0 %v2224, 104
    %v2303 = vpop.permute.xlu0 %2302
    %vm2305 = vcmask 917312
    %2306 = vst.msk [vmem:[#allocation5] sm:$0xff] %vm2305, %v2303
    %2308 = vrot.lane.b32.xlu0 %v2225, 112
    %v2309 = vpop.permute.xlu0 %2308
    %vm2311 = vcmask 982912
    %2312 = vst.msk [vmem:[#allocation5] sm:$0xff] %vm2311, %v2309
    %2314 = vrot.lane.b32.xlu0 %v2226, 120
    %v2315 = vpop.permute.xlu0 %2314
    %vm2317 = vcmask 1048512
    %2318 = vst.msk [vmem:[#allocation5] sm:$0xff] %vm2317, %v2315
    %v2319 = vld [vmem:[#allocation5] sm:$0xff]
    %v2320 = vld [vmem:[%s15] sm:$0xff]
    %v2321 = vld [vmem:[%s15 + $0x8] sm:$0xff]
    %v2322 = vld [vmem:[%s15 + $0x10] sm:$0xff]
    %v2323 = vld [vmem:[%s15 + $0x18] sm:$0xff]
    %v2324 = vld [vmem:[%s15 + $0x20] sm:$0xff]
    %v2325 = vld [vmem:[%s15 + $0x28] sm:$0xff]
    %v2326 = vld [vmem:[%s15 + $0x30] sm:$0xff]
    %v2327 = vld [vmem:[%s15 + $0x38] sm:$0xff]
    %v2328 = vld [vmem:[%s15 + $0x40] sm:$0xff]
    %v2329 = vld [vmem:[%s15 + $0x48] sm:$0xff]
    %v2330 = vld [vmem:[%s15 + $0x50] sm:$0xff]
    %v2331 = vld [vmem:[%s15 + $0x58] sm:$0xff]
    %v2332 = vld [vmem:[%s15 + $0x60] sm:$0xff]
    %v2333 = vld [vmem:[%s15 + $0x68] sm:$0xff]
    %v2334 = vld [vmem:[%s15 + $0x70] sm:$0xff]
    %v2335 = vld [vmem:[%s15 + $0x78] sm:$0xff]
    %v2336 = vld [vmem:[%s15 + $0x80] sm:$0xff]
    %v2337 = vld [vmem:[%s15 + $0x88] sm:$0xff]
    %v2338 = vld [vmem:[%s15 + $0x90] sm:$0xff]
    %v2339 = vld [vmem:[%s15 + $0x98] sm:$0xff]
    %v2340 = vld [vmem:[%s15 + $0xa0] sm:$0xff]
    %v2341 = vld [vmem:[%s15 + $0xa8] sm:$0xff]
    %v2342 = vld [vmem:[%s15 + $0xb0] sm:$0xff]
    %v2343 = vld [vmem:[%s15 + $0xb8] sm:$0xff]
    %v2344 = vld [vmem:[%s15 + $0xc0] sm:$0xff]
    %v2345 = vld [vmem:[%s15 + $0xc8] sm:$0xff]
    %v2346 = vld [vmem:[%s15 + $0xd0] sm:$0xff]
    %v2347 = vld [vmem:[%s15 + $0xd8] sm:$0xff]
    %v2348 = vld [vmem:[%s15 + $0xe0] sm:$0xff]
    %v2349 = vld [vmem:[%s15 + $0xe8] sm:$0xff]
    %v2350 = vld [vmem:[%s15 + $0xf0] sm:$0xff]
    %v2351 = vld [vmem:[%s15 + $0xf8] sm:$0xff]
    %v2352 = vld [vmem:[%s16] sm:$0x3]
    %v2354 = vperm.slane %v2352, 0
    %v2355 = vperm.slane %v2352, 1
    %2358 = vmatpush.msra.mxu0 %v2350
    %2359 = vmatpush.msra.mxu0 %v2348
    %2360 = vmatpush.msra.mxu0 %v2346
    %2361 = vmatpush.msra.mxu0 %v2344
    %2362 = vmatpush.msra.mxu0 %v2342
    %2363 = vmatpush.msra.mxu0 %v2340
    %2364 = vmatpush.msra.mxu0 %v2338
    %2365 = vmatpush.msra.mxu0 %v2336
    %2366 = vmatpush.msra.mxu0 %v2334
    %2367 = vmatpush.msra.mxu0 %v2332
    %2368 = vmatpush.msra.mxu0 %v2330
    %2369 = vmatpush.msra.mxu0 %v2328
    %2370 = vmatpush.msra.mxu0 %v2326
    %2371 = vmatpush.msra.mxu0 %v2324
    %2372 = vmatpush.msra.mxu0 %v2322
    %2373 = vmatpush.msra.mxu0 %v2320
    %2374 = vmatmul.f32.gmra.mxu0 %v2319
    %v2375 = vpop.f32.mrf.mxu0
    %v2376 = vadd.f32 %v2354, %v2375
    %2377 = vdwg.mxu0
    %2378 = vmatpush.msra.mxu0 %v2351
    %2379 = vmatpush.msra.mxu0 %v2349
    %2380 = vmatpush.msra.mxu0 %v2347
    %2381 = vmatpush.msra.mxu0 %v2345
    %2382 = vmatpush.msra.mxu0 %v2343
    %2383 = vmatpush.msra.mxu0 %v2341
    %2384 = vmatpush.msra.mxu0 %v2339
    %2385 = vmatpush.msra.mxu0 %v2337
    %2386 = vmatpush.msra.mxu0 %v2335
    %2387 = vmatpush.msra.mxu0 %v2333
    %2388 = vmatpush.msra.mxu0 %v2331
    %2389 = vmatpush.msra.mxu0 %v2329
    %2390 = vmatpush.msra.mxu0 %v2327
    %2391 = vmatpush.msra.mxu0 %v2325
    %2392 = vmatpush.msra.mxu0 %v2323
    %2393 = vmatpush.msra.mxu0 %v2321
    %2394 = vmatmul.f32.gmra.mxu0 %v2319
    %v2395 = vpop.f32.mrf.mxu0
    %v2396 = vadd.f32 %v2355, %v2395
    %2397 = vdwg.mxu0
    %v2398 = vadd.f32 %v2376, %v2396
    %2399 = vadd.xlane.f32.xlu0 %v2398
    %v2400 = vpop.xlane.xlu0 %2399
    %v2401 = vrcp.pop 256.0
    %v2402 = vmul.f32 256.0, %v2401
    %v2403 = vsub.f32 1.0, %v2402
    %v2404 = vmul.f32 %v2401, %v2403
    %v2405 = vadd.f32 %v2401, %v2404
    %vm2406 = vweird.f32 %v2401
    %v2407 = vsel %vm2406, %v2401, %v2405
    %v2408 = vmul.f32 %v2400, %v2407
    %v2409 = vsub.f32 %v2376, %v2408
    %v2410 = vsub.f32 %v2396, %v2408
    %v2411 = vmul.f32 %v2409, %v2409
    %v2412 = vmul.f32 %v2410, %v2410
    %v2413 = vadd.f32 %v2411, %v2412
    %2414 = vadd.xlane.f32.xlu0 %v2413
    %v2415 = vpop.xlane.xlu0 %2414
    %v2416 = vmul.f32 %v2415, %v2407
    %v2417 = vadd.f32 %v2416, 1e-05
    %v2418 = vrsqrt.pop %v2417
    %v2419 = vmul.f32 %v2418, %v2417
    %v2420 = vmul.f32 %v2419, %v2418
    %v2421 = vmul.f32 0.5, %v2420
    %v2422 = vsub.f32 1.5, %v2421
    %v2423 = vmul.f32 %v2418, %v2422
    %vm2424 = vweird.f32 %v2417
    %vm2425 = vweird.f32 %v2418
    %vm2426 = vmor %vm2424, %vm2425
    %v2427 = vsel %vm2426, %v2418, %v2423
    %v2428 = vmul.f32 %v2409, %v2427
    %v2429 = vmul.f32 %v2410, %v2427
    %v2430 = vld [vmem:[%s17] sm:$0x3]
    %v2432 = vperm.slane %v2430, 0
    %v2433 = vperm.slane %v2430, 1
    %v2436 = vmul.f32 %v2428, %v2432
    %v2437 = vmul.f32 %v2429, %v2433
    %v2438 = vld [vmem:[%s18] sm:$0x3]
    %v2440 = vperm.slane %v2438, 0
    %v2441 = vperm.slane %v2438, 1
    %v2444 = vadd.f32 %v2436, %v2440
    %v2445 = vadd.f32 %v2437, %v2441
    %v2446 = vld [vmem:[%s19] sm:$0xff]
    %v2447 = vld [vmem:[%s19 + $0x8] sm:$0xff]
    %v2448 = vld [vmem:[%s19 + $0x10] sm:$0xff]
    %v2449 = vld [vmem:[%s19 + $0x18] sm:$0xff]
    %v2450 = vld [vmem:[%s19 + $0x20] sm:$0xff]
    %v2451 = vld [vmem:[%s19 + $0x28] sm:$0xff]
    %v2452 = vld [vmem:[%s19 + $0x30] sm:$0xff]
    %v2453 = vld [vmem:[%s19 + $0x38] sm:$0xff]
    %v2454 = vld [vmem:[%s19 + $0x40] sm:$0xff]
    %v2455 = vld [vmem:[%s19 + $0x48] sm:$0xff]
    %v2456 = vld [vmem:[%s19 + $0x50] sm:$0xff]
    %v2457 = vld [vmem:[%s19 + $0x58] sm:$0xff]
    %v2458 = vld [vmem:[%s19 + $0x60] sm:$0xff]
    %v2459 = vld [vmem:[%s19 + $0x68] sm:$0xff]
    %v2460 = vld [vmem:[%s19 + $0x70] sm:$0xff]
    %v2461 = vld [vmem:[%s19 + $0x78] sm:$0xff]
    %v2462 = vld [vmem:[%s19 + $0x80] sm:$0xff]
    %v2463 = vld [vmem:[%s19 + $0x88] sm:$0xff]
    %v2464 = vld [vmem:[%s19 + $0x90] sm:$0xff]
    %v2465 = vld [vmem:[%s19 + $0x98] sm:$0xff]
    %v2466 = vld [vmem:[%s19 + $0xa0] sm:$0xff]
    %v2467 = vld [vmem:[%s19 + $0xa8] sm:$0xff]
    %v2468 = vld [vmem:[%s19 + $0xb0] sm:$0xff]
    %v2469 = vld [vmem:[%s19 + $0xb8] sm:$0xff]
    %v2470 = vld [vmem:[%s19 + $0xc0] sm:$0xff]
    %v2471 = vld [vmem:[%s19 + $0xc8] sm:$0xff]
    %v2472 = vld [vmem:[%s19 + $0xd0] sm:$0xff]
    %v2473 = vld [vmem:[%s19 + $0xd8] sm:$0xff]
    %v2474 = vld [vmem:[%s19 + $0xe0] sm:$0xff]
    %v2475 = vld [vmem:[%s19 + $0xe8] sm:$0xff]
    %v2476 = vld [vmem:[%s19 + $0xf0] sm:$0xff]
    %v2477 = vld [vmem:[%s19 + $0xf8] sm:$0xff]
    %v2478 = vld [vmem:[%s20] sm:$0x1]
    %v2480 = vperm.slane %v2478, 0
    %2482 = vmatpush.msra.mxu0 %v2461
    %2483 = vmatpush.msra.mxu0 %v2460
    %2484 = vmatpush.msra.mxu0 %v2459
    %2485 = vmatpush.msra.mxu0 %v2458
    %2486 = vmatpush.msra.mxu0 %v2457
    %2487 = vmatpush.msra.mxu0 %v2456
    %2488 = vmatpush.msra.mxu0 %v2455
    %2489 = vmatpush.msra.mxu0 %v2454
    %2490 = vmatpush.msra.mxu0 %v2453
    %2491 = vmatpush.msra.mxu0 %v2452
    %2492 = vmatpush.msra.mxu0 %v2451
    %2493 = vmatpush.msra.mxu0 %v2450
    %2494 = vmatpush.msra.mxu0 %v2449
    %2495 = vmatpush.msra.mxu0 %v2448
    %2496 = vmatpush.msra.mxu0 %v2447
    %2497 = vmatpush.msra.mxu0 %v2446
    %2498 = vmatmul.f32.gmra.mxu0 %v2444
    %v2499 = vpop.f32.mrf.mxu0
    %v2500 = vadd.f32 %v2480, %v2499
    %2501 = vdwg.mxu0
    %2502 = vmatpush.msra.mxu0 %v2477
    %2503 = vmatpush.msra.mxu0 %v2476
    %2504 = vmatpush.msra.mxu0 %v2475
    %2505 = vmatpush.msra.mxu0 %v2474
    %2506 = vmatpush.msra.mxu0 %v2473
    %2507 = vmatpush.msra.mxu0 %v2472
    %2508 = vmatpush.msra.mxu0 %v2471
    %2509 = vmatpush.msra.mxu0 %v2470
    %2510 = vmatpush.msra.mxu0 %v2469
    %2511 = vmatpush.msra.mxu0 %v2468
    %2512 = vmatpush.msra.mxu0 %v2467
    %2513 = vmatpush.msra.mxu0 %v2466
    %2514 = vmatpush.msra.mxu0 %v2465
    %2515 = vmatpush.msra.mxu0 %v2464
    %2516 = vmatpush.msra.mxu0 %v2463
    %2517 = vmatpush.msra.mxu0 %v2462
    %2518 = vmatmul.f32.gmra.mxu0 %v2445
    %v2519 = vpop.f32.mrf.mxu0
    %v2520 = vadd.f32 %v2500, %v2519
    %2521 = vdwg.mxu0
    %vm2522 = vcmask 17408
    %2523 = vst.msk [vmem:[#allocation6] sm:$0x3] %vm2522, %v2520
    // Predicated region
    $region86: #{rnncnn1d_forward.1} parent=1 // pred_check
      _
    $region87: #{rnncnn1d_forward.1} parent=1 // pred_check_branch
      %2525 = sbr.rel (0) target = $region89
    $region88: #{rnncnn1d_forward.1} parent=1 // pred_region
      %2527 = vsyncadd [#allocation7], 0
      %s2529 = sshll.u32 [#allocation6], 4
      %s2530 = int_to_ptr.vmem [resolvable:$true] %s2529
      %s2531 = sshll.u32 %s21, 4
      %s2532 = int_to_ptr.hbm [resolvable:$true] %s2531
      %2534 = dma.vmem_to_hbm [thread:$0]  %s2530, 32, %s2532, [#allocation7]
    $region89: #{rnncnn1d_forward.1} parent=1 // pred_fallthru
      _
    // Predicated region
    $region90: #{rnncnn1d_forward.1} parent=1 // pred_check
      _
    $region91: #{rnncnn1d_forward.1} parent=1 // pred_check_branch
      %2536 = sbr.rel (0) target = $region93
    $region92: #{rnncnn1d_forward.1} parent=1 // pred_region
      %2538 = dma.done [#allocation7], 32
    $region93: #{rnncnn1d_forward.1} parent=1 // pred_fallthru
      _
    %2539 = vsyncpa [#allocation7], 1

</llo_original>
